<compile_context>
chip_gen: v6e
topology: v6e:2x2x1
jax: 0.10.0
libtpu: 0.0.40
codegen_flags: <defaults>
</compile_context>

<pallas_src>
import math
from functools import partial

import jax
import jax.numpy as jnp
from jax.experimental import pallas as pl
from jax.experimental.pallas import tpu as pltpu

EPS = 1e-6  # matches reference Norm eps


def _layer_norm(x, alpha, bias, d_model):
    # Reference Norm: alpha * (x - mean) / (std + eps) + bias,
    # torch's std() is unbiased (ddof=1).  Divide -> EUP reciprocal.
    mean = jnp.mean(x, axis=-1, keepdims=True)
    diff = x - mean
    var = jnp.sum(diff * diff, axis=-1, keepdims=True) * (1.0 / (d_model - 1))
    inv = pl.reciprocal(jnp.sqrt(var) + EPS, approx=True)
    return alpha * diff * inv + bias


# ---------------------------------------------------------------------------
# Fused encoder-layer kernel (one grid step == one batch element, full seq)
# ---------------------------------------------------------------------------
def encoder_layer_kernel(x_ref, mb_ref, pe_ref,
                         wq_ref, bq_ref, wk_ref, bk_ref, wv_ref, bv_ref,
                         wo_ref, bo_ref,
                         a1_ref, c1_ref, a2_ref, c2_ref,
                         w1_ref, d1_ref, w2_ref, d2_ref,
                         fa_ref, fb_ref,
                         out_ref, *, heads, d_model, is_first, is_last):
    S = x_ref.shape[0]
    dk = d_model // heads
    inv_sqrt_dk = 1.0 / math.sqrt(dk)

    x = x_ref[...]                                    # (S, D) f32
    if is_first:
        # fused Embedder scale + PositionalEncoder add (first-layer prologue)
        x = x * math.sqrt(d_model) + pe_ref[...]

    # ------------- self-attention sublayer: x = x + attn(norm1(x)) ----------
    x2 = _layer_norm(x, a1_ref[...], c1_ref[...], d_model)
    x2b = x2.astype(jnp.bfloat16)                     # bf16 MXU inputs, f32 acc
    q = jnp.dot(x2b, wq_ref[...], preferred_element_type=jnp.float32) + bq_ref[...]
    k = jnp.dot(x2b, wk_ref[...], preferred_element_type=jnp.float32) + bk_ref[...]
    v = jnp.dot(x2b, wv_ref[...], preferred_element_type=jnp.float32) + bv_ref[...]

    def split_heads(t):                               # (S, D) -> (H, S, dk)
        return jnp.transpose(t.reshape(S, heads, dk), (1, 0, 2))

    qh = split_heads(q)
    kh = split_heads(k)
    vh = split_heads(v)

    # one batched einsum over all heads (no per-head slicing / concat)
    s = jnp.einsum('hqd,hkd->hqk', qh.astype(jnp.bfloat16), kh.astype(jnp.bfloat16),
                   preferred_element_type=jnp.float32) * inv_sqrt_dk
    s = s + mb_ref[...][None, :, :]                   # additive mask bias (1,1,S)
    s = s - jnp.max(s, axis=-1, keepdims=True)        # stable softmax over keys
    p = jnp.exp(s)
    p = p * pl.reciprocal(jnp.sum(p, axis=-1, keepdims=True), approx=True)
    o = jnp.einsum('hqk,hkd->hqd', p.astype(jnp.bfloat16), vh.astype(jnp.bfloat16),
                   preferred_element_type=jnp.float32)            # (H, S, dk)
    # output projection folded per-head: sum_h o[h] @ Wo[h]  (== concat @ Wo)
    attn = jnp.einsum('hqd,hde->hqe', o.astype(jnp.bfloat16), wo_ref[...],
                      preferred_element_type=jnp.float32)         # (H, S, D)
    attn = jnp.sum(attn, axis=0) + bo_ref[...]
    x = x + attn                                      # dropout == identity

    # ------------- feed-forward sublayer: x = x + ff(norm2(x)) --------------
    x2 = _layer_norm(x, a2_ref[...], c2_ref[...], d_model)
    h = jnp.dot(x2.astype(jnp.bfloat16), w1_ref[...],
                preferred_element_type=jnp.float32) + d1_ref[...]
    h = jnp.maximum(h, 0.0)                           # ReLU on f32 accumulator
    ff = jnp.dot(h.astype(jnp.bfloat16), w2_ref[...],
                 preferred_element_type=jnp.float32) + d2_ref[...]
    x = x + ff

    if is_last:
        # final Encoder Norm fused into the last-layer epilogue
        x = _layer_norm(x, fa_ref[...], fb_ref[...], d_model)

    out_ref[...] = x.astype(out_ref.dtype)


# ---------------------------------------------------------------------------
# Wrapper: grid over batch, weights pinned via constant index_maps
# ---------------------------------------------------------------------------
def run_encoder_layer(x, mbias, pe, lp, fa, fb, *, heads, is_first, is_last,
                      vmem_limit_bytes=48 * 1024 * 1024):
    B, S, D = x.shape
    dk = D // heads
    d_ff = lp['w1'].shape[1]

    c2 = lambda b: (0, 0)          # constant block -> stays VMEM-resident
    c3 = lambda b: (0, 0, 0)
    act = pl.BlockSpec((None, S, D), lambda b: (b, 0, 0))   # per-batch tile

    in_specs = [
        act,                                                   # x
        pl.BlockSpec((None, 1, S), lambda b: (b, 0, 0)),       # mask bias
        pl.BlockSpec((S, D), c2),                              # pe
        pl.BlockSpec((D, D), c2), pl.BlockSpec((1, D), c2),    # wq, bq
        pl.BlockSpec((D, D), c2), pl.BlockSpec((1, D), c2),    # wk, bk
        pl.BlockSpec((D, D), c2), pl.BlockSpec((1, D), c2),    # wv, bv
        pl.BlockSpec((heads, dk, D), c3), pl.BlockSpec((1, D), c2),   # wo3, bo
        pl.BlockSpec((1, D), c2), pl.BlockSpec((1, D), c2),    # a1, c1
        pl.BlockSpec((1, D), c2), pl.BlockSpec((1, D), c2),    # a2, c2
        pl.BlockSpec((D, d_ff), c2), pl.BlockSpec((1, d_ff), c2),     # w1, d1
        pl.BlockSpec((d_ff, D), c2), pl.BlockSpec((1, D), c2),        # w2, d2
        pl.BlockSpec((1, D), c2), pl.BlockSpec((1, D), c2),    # final norm a,b
    ]

    return pl.pallas_call(
        partial(encoder_layer_kernel, heads=heads, d_model=D,
                is_first=is_first, is_last=is_last),
        out_shape=jax.ShapeDtypeStruct((B, S, D), jnp.float32),
        grid=(B,),
        in_specs=in_specs,
        out_specs=pl.BlockSpec((None, S, D), lambda b: (b, 0, 0)),
        compiler_params=pltpu.CompilerParams(
            dimension_semantics=("parallel",),       # shard batch across cores
            vmem_limit_bytes=vmem_limit_bytes),      # sized for v7x 64 MiB VMEM
    )(x, mbias, pe, lp['wq'], lp['bq'], lp['wk'], lp['bk'], lp['wv'], lp['bv'],
      lp['wo3'], lp['bo'], lp['a1'], lp['c1'], lp['a2'], lp['c2'],
      lp['w1'], lp['d1'], lp['w2'], lp['d2'], fa, fb)


def encoder_forward(src, mask, params, *, d_model, N, heads):
    # Embedder: data-dependent gather stays in plain JAX glue.
    x = jnp.take(params['embed'], src, axis=0).astype(jnp.float32)   # (B, S, D)
    S = src.shape[1]
    pe = params['pe'][:S]
    # additive attention-mask bias, computed ONCE and shared by all N layers
    mbias = jnp.where(mask == 0.0, jnp.float32(-1e9), jnp.float32(0.0))[:, None, :]
    for i in range(N):
        x = run_encoder_layer(x, mbias, pe, params['layers'][i],
                              params['norm_alpha'], params['norm_bias'],
                              heads=heads, is_first=(i == 0), is_last=(i == N - 1))
    return x


# ---------------------------------------------------------------------------
# Deterministic parameter / PE construction + kernel-ready prep (bf16 weights)
# ---------------------------------------------------------------------------
def make_pe_table(max_len, d_model):
    # pe[pos, i]   = sin(pos / 10000**(2*i/d_model))       (i even)
    # pe[pos, i+1] = cos(pos / 10000**(2*(i+1)/d_model))
    pos = jnp.arange(max_len, dtype=jnp.float32)[:, None]
    i = jnp.arange(0, d_model, 2, dtype=jnp.float32)
    pe_sin = jnp.sin(pos / jnp.power(10000.0, (2.0 * i) / d_model))
    pe_cos = jnp.cos(pos / jnp.power(10000.0, (2.0 * (i + 1.0)) / d_model))
    return jnp.stack([pe_sin, pe_cos], axis=-1).reshape(max_len, d_model)


def init_params(key, vocab, d_model, N, heads, d_ff, max_len):
    def lin(k, fi, fo):
        bound = 1.0 / math.sqrt(fi)
        kw, kb = jax.random.split(k)
        w = jax.random.uniform(kw, (fi, fo), jnp.float32, -bound, bound)
        b = jax.random.uniform(kb, (1, fo), jnp.float32, -bound, bound)
        return w, b

    ks = jax.random.split(key, N + 1)
    params = {
        'embed': jax.random.normal(ks[0], (vocab, d_model), jnp.float32),
        'pe': make_pe_table(max_len, d_model),
        'norm_alpha': jnp.ones((1, d_model), jnp.float32),
        'norm_bias': jnp.zeros((1, d_model), jnp.float32),
        'layers': [],
    }
    for l in range(N):
        lk = jax.random.split(ks[1 + l], 6)
        wq, bq = lin(lk[0], d_model, d_model)
        wk, bk = lin(lk[1], d_model, d_model)
        wv, bv = lin(lk[2], d_model, d_model)
        wo, bo = lin(lk[3], d_model, d_model)
        w1, d1 = lin(lk[4], d_model, d_ff)
        w2, d2 = lin(lk[5], d_ff, d_model)
        params['layers'].append(dict(
            wq=wq, bq=bq, wk=wk, bk=bk, wv=wv, bv=bv, wo=wo, bo=bo,
            a1=jnp.ones((1, d_model), jnp.float32),
            c1=jnp.zeros((1, d_model), jnp.float32),
            a2=jnp.ones((1, d_model), jnp.float32),
            c2=jnp.zeros((1, d_model), jnp.float32),
            w1=w1, d1=d1, w2=w2, d2=d2))
    return params


def prepare_encoder_params(params, heads):
    # One-time prep: cast matmul weights to bf16 (halves weight DMA bytes,
    # native MXU input) and pre-split Wo per head: (D, D) -> (H, dk, D).
    D = params['layers'][0]['wq'].shape[0]
    dk = D // heads
    layers = []
    for p in params['layers']:
        layers.append(dict(
            wq=p['wq'].astype(jnp.bfloat16), bq=p['bq'],
            wk=p['wk'].astype(jnp.bfloat16), bk=p['bk'],
            wv=p['wv'].astype(jnp.bfloat16), bv=p['bv'],
            wo3=p['wo'].reshape(heads, dk, D).astype(jnp.bfloat16), bo=p['bo'],
            a1=p['a1'], c1=p['c1'], a2=p['a2'], c2=p['c2'],
            w1=p['w1'].astype(jnp.bfloat16), d1=p['d1'],
            w2=p['w2'].astype(jnp.bfloat16), d2=p['d2']))
    return dict(embed=params['embed'], pe=params['pe'],
                norm_alpha=params['norm_alpha'], norm_bias=params['norm_bias'],
                layers=layers)


if __name__ == "__main__":
    B, S = 2, 8
    vocab, d_model, N, heads = 50, 128, 2, 4   # lane-dense D (multiple of 128)
    d_ff = 256  # reference FeedForward default is 2048; scaled down for the small test

    key = jax.random.PRNGKey(0)
    kp, ksrc = jax.random.split(key)
    params = init_params(kp, vocab, d_model, N, heads, d_ff, max_len=80)
    kparams = prepare_encoder_params(params, heads)

    src = jax.random.randint(ksrc, (B, S), 0, vocab, dtype=jnp.int32)
    # src mask over keys: 1 = attend, 0 = masked (pad); mask out the last two
    # key positions of batch element 1 to exercise the masking path.
    mask = jnp.ones((B, S), jnp.float32).at[1, 6:].set(0.0)

    fwd = jax.jit(partial(encoder_forward, d_model=d_model, N=N, heads=heads))
    out = fwd(src, mask, kparams)
    out = jax.block_until_ready(out)
    assert out.shape == (B, S, d_model) and out.dtype == jnp.float32
    print("KERNEL_OK")
</pallas_src>

<mosaic_0001>
module attributes {stable_mosaic.version = 11 : i64} {
  func.func @encoder_layer_kernel(%arg0: i32, %arg1: memref<1x8x128xf32, #tpu.memory_space<vmem>>, %arg2: memref<1x1x8xf32, #tpu.memory_space<vmem>>, %arg3: memref<8x128xf32, #tpu.memory_space<vmem>>, %arg4: memref<128x128xbf16, #tpu.memory_space<vmem>>, %arg5: memref<1x128xf32, #tpu.memory_space<vmem>>, %arg6: memref<128x128xbf16, #tpu.memory_space<vmem>>, %arg7: memref<1x128xf32, #tpu.memory_space<vmem>>, %arg8: memref<128x128xbf16, #tpu.memory_space<vmem>>, %arg9: memref<1x128xf32, #tpu.memory_space<vmem>>, %arg10: memref<4x32x128xbf16, #tpu.memory_space<vmem>>, %arg11: memref<1x128xf32, #tpu.memory_space<vmem>>, %arg12: memref<1x128xf32, #tpu.memory_space<vmem>>, %arg13: memref<1x128xf32, #tpu.memory_space<vmem>>, %arg14: memref<1x128xf32, #tpu.memory_space<vmem>>, %arg15: memref<1x128xf32, #tpu.memory_space<vmem>>, %arg16: memref<128x256xbf16, #tpu.memory_space<vmem>>, %arg17: memref<1x256xf32, #tpu.memory_space<vmem>>, %arg18: memref<256x128xbf16, #tpu.memory_space<vmem>>, %arg19: memref<1x128xf32, #tpu.memory_space<vmem>>, %arg20: memref<1x128xf32, #tpu.memory_space<vmem>>, %arg21: memref<1x128xf32, #tpu.memory_space<vmem>>, %arg22: memref<1x8x128xf32, #tpu.memory_space<vmem>>) attributes {dimension_semantics = [#tpu.dimension_semantics<parallel>], iteration_bounds = array<i64: 2>, scalar_prefetch = 0 : i64, scratch_operands = 0 : i64, tpu.core_type = #tpu.core_type<tc>, window_params = [{transform_indices = @transform_0, window_bounds = array<i64: 1, 8, 128>}, {transform_indices = @transform_1, window_bounds = array<i64: 1, 1, 8>}, {pipeline_mode = #tpu.pipeline_mode<synchronous>, transform_indices = @transform_2, window_bounds = array<i64: 8, 128>}, {pipeline_mode = #tpu.pipeline_mode<synchronous>, transform_indices = @transform_3, window_bounds = array<i64: 128, 128>}, {pipeline_mode = #tpu.pipeline_mode<synchronous>, transform_indices = @transform_4, window_bounds = array<i64: 1, 128>}, {pipeline_mode = #tpu.pipeline_mode<synchronous>, transform_indices = @transform_5, window_bounds = array<i64: 128, 128>}, {pipeline_mode = #tpu.pipeline_mode<synchronous>, transform_indices = @transform_6, window_bounds = array<i64: 1, 128>}, {pipeline_mode = #tpu.pipeline_mode<synchronous>, transform_indices = @transform_7, window_bounds = array<i64: 128, 128>}, {pipeline_mode = #tpu.pipeline_mode<synchronous>, transform_indices = @transform_8, window_bounds = array<i64: 1, 128>}, {pipeline_mode = #tpu.pipeline_mode<synchronous>, transform_indices = @transform_9, window_bounds = array<i64: 4, 32, 128>}, {pipeline_mode = #tpu.pipeline_mode<synchronous>, transform_indices = @transform_10, window_bounds = array<i64: 1, 128>}, {pipeline_mode = #tpu.pipeline_mode<synchronous>, transform_indices = @transform_11, window_bounds = array<i64: 1, 128>}, {pipeline_mode = #tpu.pipeline_mode<synchronous>, transform_indices = @transform_12, window_bounds = array<i64: 1, 128>}, {pipeline_mode = #tpu.pipeline_mode<synchronous>, transform_indices = @transform_13, window_bounds = array<i64: 1, 128>}, {pipeline_mode = #tpu.pipeline_mode<synchronous>, transform_indices = @transform_14, window_bounds = array<i64: 1, 128>}, {pipeline_mode = #tpu.pipeline_mode<synchronous>, transform_indices = @transform_15, window_bounds = array<i64: 128, 256>}, {pipeline_mode = #tpu.pipeline_mode<synchronous>, transform_indices = @transform_16, window_bounds = array<i64: 1, 256>}, {pipeline_mode = #tpu.pipeline_mode<synchronous>, transform_indices = @transform_17, window_bounds = array<i64: 256, 128>}, {pipeline_mode = #tpu.pipeline_mode<synchronous>, transform_indices = @transform_18, window_bounds = array<i64: 1, 128>}, {pipeline_mode = #tpu.pipeline_mode<synchronous>, transform_indices = @transform_19, window_bounds = array<i64: 1, 128>}, {pipeline_mode = #tpu.pipeline_mode<synchronous>, transform_indices = @transform_20, window_bounds = array<i64: 1, 128>}, {transform_indices = @transform_21, window_bounds = array<i64: 1, 8, 128>}]} {
    %c0 = arith.constant 0 : index
    %c0_0 = arith.constant 0 : index
    %c0_1 = arith.constant 0 : index
    %0 = vector.load %arg1[%c0, %c0_0, %c0_1] : memref<1x8x128xf32, #tpu.memory_space<vmem>>, vector<1x8x128xf32>
    %1 = vector.shape_cast %0 : vector<1x8x128xf32> to vector<8x128xf32>
    %c0_2 = arith.constant 0 : index
    %c0_3 = arith.constant 0 : index
    %2 = vector.load %arg12[%c0_2, %c0_3] : memref<1x128xf32, #tpu.memory_space<vmem>>, vector<1x128xf32>
    %c0_4 = arith.constant 0 : index
    %c0_5 = arith.constant 0 : index
    %3 = vector.load %arg13[%c0_4, %c0_5] : memref<1x128xf32, #tpu.memory_space<vmem>>, vector<1x128xf32>
    %cst = arith.constant dense<0.000000e+00> : vector<8xf32>
    %4 = vector.multi_reduction <add>, %1, %cst [1] : vector<8x128xf32> to vector<8xf32>
    %5 = vector.shape_cast %4 : vector<8xf32> to vector<8x1xf32>
    %cst_6 = arith.constant 1.280000e+02 : f32
    %6 = vector.broadcast %cst_6 : f32 to vector<8x1xf32>
    %7 = arith.divf %5, %6 : vector<8x1xf32>
    %8 = vector.broadcast %7 : vector<8x1xf32> to vector<8x128xf32>
    %9 = arith.subf %1, %8 : vector<8x128xf32>
    %10 = arith.mulf %9, %9 : vector<8x128xf32>
    %cst_7 = arith.constant dense<0.000000e+00> : vector<8xf32>
    %11 = vector.multi_reduction <add>, %10, %cst_7 [1] : vector<8x128xf32> to vector<8xf32>
    %12 = vector.shape_cast %11 : vector<8xf32> to vector<8x1xf32>
    %cst_8 = arith.constant 0.00787401571 : f32
    %13 = vector.broadcast %cst_8 : f32 to vector<8x1xf32>
    %14 = arith.mulf %12, %13 : vector<8x1xf32>
    %15 = math.sqrt %14 : vector<8x1xf32>
    %cst_9 = arith.constant 9.99999997E-7 : f32
    %16 = vector.broadcast %cst_9 : f32 to vector<8x1xf32>
    %17 = arith.addf %15, %16 : vector<8x1xf32>
    %18 = tpu.reciprocal %17 {approx = true} : vector<8x1xf32> -> vector<8x1xf32>
    %19 = vector.broadcast %2 : vector<1x128xf32> to vector<8x128xf32>
    %20 = arith.mulf %19, %9 : vector<8x128xf32>
    %21 = vector.broadcast %18 : vector<8x1xf32> to vector<8x128xf32>
    %22 = arith.mulf %20, %21 : vector<8x128xf32>
    %23 = vector.broadcast %3 : vector<1x128xf32> to vector<8x128xf32>
    %24 = arith.addf %22, %23 : vector<8x128xf32>
    %25 = arith.truncf %24 : vector<8x128xf32> to vector<8x128xbf16>
    %c0_10 = arith.constant 0 : index
    %c0_11 = arith.constant 0 : index
    %26 = vector.load %arg4[%c0_10, %c0_11] : memref<128x128xbf16, #tpu.memory_space<vmem>>, vector<128x128xbf16>
    %cst_12 = arith.constant dense<0.000000e+00> : vector<8x128xf32>
    %27 = tpu.matmul %25, %26, %cst_12 {dimension_numbers = #tpu.dot_dimension_numbers<[1], [0], [0], [1], [0, 0, 1, 1], [], []>} : vector<8x128xbf16>, vector<128x128xbf16>, vector<8x128xf32> -> vector<8x128xf32>
    %c0_13 = arith.constant 0 : index
    %c0_14 = arith.constant 0 : index
    %28 = vector.load %arg5[%c0_13, %c0_14] : memref<1x128xf32, #tpu.memory_space<vmem>>, vector<1x128xf32>
    %29 = vector.broadcast %28 : vector<1x128xf32> to vector<8x128xf32>
    %30 = arith.addf %27, %29 : vector<8x128xf32>
    %c0_15 = arith.constant 0 : index
    %c0_16 = arith.constant 0 : index
    %31 = vector.load %arg6[%c0_15, %c0_16] : memref<128x128xbf16, #tpu.memory_space<vmem>>, vector<128x128xbf16>
    %cst_17 = arith.constant dense<0.000000e+00> : vector<8x128xf32>
    %32 = tpu.matmul %25, %31, %cst_17 {dimension_numbers = #tpu.dot_dimension_numbers<[1], [0], [0], [1], [0, 0, 1, 1], [], []>} : vector<8x128xbf16>, vector<128x128xbf16>, vector<8x128xf32> -> vector<8x128xf32>
    %c0_18 = arith.constant 0 : index
    %c0_19 = arith.constant 0 : index
    %33 = vector.load %arg7[%c0_18, %c0_19] : memref<1x128xf32, #tpu.memory_space<vmem>>, vector<1x128xf32>
    %34 = vector.broadcast %33 : vector<1x128xf32> to vector<8x128xf32>
    %35 = arith.addf %32, %34 : vector<8x128xf32>
    %c0_20 = arith.constant 0 : index
    %c0_21 = arith.constant 0 : index
    %36 = vector.load %arg8[%c0_20, %c0_21] : memref<128x128xbf16, #tpu.memory_space<vmem>>, vector<128x128xbf16>
    %cst_22 = arith.constant dense<0.000000e+00> : vector<8x128xf32>
    %37 = tpu.matmul %25, %36, %cst_22 {dimension_numbers = #tpu.dot_dimension_numbers<[1], [0], [0], [1], [0, 0, 1, 1], [], []>} : vector<8x128xbf16>, vector<128x128xbf16>, vector<8x128xf32> -> vector<8x128xf32>
    %c0_23 = arith.constant 0 : index
    %c0_24 = arith.constant 0 : index
    %38 = vector.load %arg9[%c0_23, %c0_24] : memref<1x128xf32, #tpu.memory_space<vmem>>, vector<1x128xf32>
    %39 = vector.broadcast %38 : vector<1x128xf32> to vector<8x128xf32>
    %40 = arith.addf %37, %39 : vector<8x128xf32>
    %41 = vector.shape_cast %30 : vector<8x128xf32> to vector<8x4x32xf32>
    %42 = tpu.transpose %41, [1, 0, 2] : vector<8x4x32xf32> -> vector<4x8x32xf32>
    %43 = vector.shape_cast %35 : vector<8x128xf32> to vector<8x4x32xf32>
    %44 = tpu.transpose %43, [1, 0, 2] : vector<8x4x32xf32> -> vector<4x8x32xf32>
    %45 = vector.shape_cast %40 : vector<8x128xf32> to vector<8x4x32xf32>
    %46 = tpu.transpose %45, [1, 0, 2] : vector<8x4x32xf32> -> vector<4x8x32xf32>
    %47 = arith.truncf %42 : vector<4x8x32xf32> to vector<4x8x32xbf16>
    %48 = arith.truncf %44 : vector<4x8x32xf32> to vector<4x8x32xbf16>
    "tpu.trace_start"() <{level = 10 : i32, message = "hqd,hkd->hqk"}> : () -> ()
    %cst_25 = arith.constant dense<0.000000e+00> : vector<4x8x8xf32>
    %49 = tpu.matmul %47, %48, %cst_25 {dimension_numbers = #tpu.dot_dimension_numbers<[2], [2], [1], [1], [0, 0, 0, 1, 1, 1], [0], [0]>} : vector<4x8x32xbf16>, vector<4x8x32xbf16>, vector<4x8x8xf32> -> vector<4x8x8xf32>
    "tpu.trace_stop"() : () -> ()
    %cst_26 = arith.constant 0.176776692 : f32
    %50 = vector.broadcast %cst_26 : f32 to vector<4x8x8xf32>
    %51 = arith.mulf %49, %50 : vector<4x8x8xf32>
    %c0_27 = arith.constant 0 : index
    %c0_28 = arith.constant 0 : index
    %c0_29 = arith.constant 0 : index
    %52 = vector.load %arg2[%c0_27, %c0_28, %c0_29] : memref<1x1x8xf32, #tpu.memory_space<vmem>>, vector<1x1x8xf32>
    %53 = vector.shape_cast %52 : vector<1x1x8xf32> to vector<1x8xf32>
    %54 = vector.shape_cast %53 : vector<1x8xf32> to vector<1x1x8xf32>
    %55 = vector.broadcast %54 : vector<1x1x8xf32> to vector<4x8x8xf32>
    %56 = arith.addf %51, %55 : vector<4x8x8xf32>
    %cst_30 = arith.constant dense<0xFF800000> : vector<4x8xf32>
    %57 = vector.multi_reduction <maximumf>, %56, %cst_30 [2] : vector<4x8x8xf32> to vector<4x8xf32>
    %58 = vector.shape_cast %57 : vector<4x8xf32> to vector<4x8x1xf32>
    %59 = vector.broadcast %58 : vector<4x8x1xf32> to vector<4x8x8xf32>
    %60 = arith.subf %56, %59 : vector<4x8x8xf32>
    %61 = math.exp %60 : vector<4x8x8xf32>
    %cst_31 = arith.constant dense<0.000000e+00> : vector<4x8xf32>
    %62 = vector.multi_reduction <add>, %61, %cst_31 [2] : vector<4x8x8xf32> to vector<4x8xf32>
    %63 = vector.shape_cast %62 : vector<4x8xf32> to vector<4x8x1xf32>
    %64 = tpu.reciprocal %63 {approx = true} : vector<4x8x1xf32> -> vector<4x8x1xf32>
    %65 = vector.broadcast %64 : vector<4x8x1xf32> to vector<4x8x8xf32>
    %66 = arith.mulf %61, %65 : vector<4x8x8xf32>
    %67 = arith.truncf %66 : vector<4x8x8xf32> to vector<4x8x8xbf16>
    %68 = arith.truncf %46 : vector<4x8x32xf32> to vector<4x8x32xbf16>
    "tpu.trace_start"() <{level = 10 : i32, message = "hqk,hkd->hqd"}> : () -> ()
    %cst_32 = arith.constant dense<0.000000e+00> : vector<4x8x32xf32>
    %69 = tpu.matmul %67, %68, %cst_32 {dimension_numbers = #tpu.dot_dimension_numbers<[2], [1], [1], [2], [0, 0, 0, 1, 1, 2], [0], [0]>} : vector<4x8x8xbf16>, vector<4x8x32xbf16>, vector<4x8x32xf32> -> vector<4x8x32xf32>
    "tpu.trace_stop"() : () -> ()
    %70 = arith.truncf %69 : vector<4x8x32xf32> to vector<4x8x32xbf16>
    %c0_33 = arith.constant 0 : index
    %c0_34 = arith.constant 0 : index
    %c0_35 = arith.constant 0 : index
    %71 = vector.load %arg10[%c0_33, %c0_34, %c0_35] : memref<4x32x128xbf16, #tpu.memory_space<vmem>>, vector<4x32x128xbf16>
    "tpu.trace_start"() <{level = 10 : i32, message = "hqd,hde->hqe"}> : () -> ()
    %cst_36 = arith.constant dense<0.000000e+00> : vector<4x8x128xf32>
    %72 = tpu.matmul %70, %71, %cst_36 {dimension_numbers = #tpu.dot_dimension_numbers<[2], [1], [1], [2], [0, 0, 0, 1, 1, 2], [0], [0]>} : vector<4x8x32xbf16>, vector<4x32x128xbf16>, vector<4x8x128xf32> -> vector<4x8x128xf32>
    "tpu.trace_stop"() : () -> ()
    %cst_37 = arith.constant dense<0.000000e+00> : vector<8x128xf32>
    %73 = vector.multi_reduction <add>, %72, %cst_37 [0] : vector<4x8x128xf32> to vector<8x128xf32>
    %c0_38 = arith.constant 0 : index
    %c0_39 = arith.constant 0 : index
    %74 = vector.load %arg11[%c0_38, %c0_39] : memref<1x128xf32, #tpu.memory_space<vmem>>, vector<1x128xf32>
    %75 = vector.broadcast %74 : vector<1x128xf32> to vector<8x128xf32>
    %76 = arith.addf %73, %75 : vector<8x128xf32>
    %77 = arith.addf %1, %76 : vector<8x128xf32>
    %c0_40 = arith.constant 0 : index
    %c0_41 = arith.constant 0 : index
    %78 = vector.load %arg14[%c0_40, %c0_41] : memref<1x128xf32, #tpu.memory_space<vmem>>, vector<1x128xf32>
    %c0_42 = arith.constant 0 : index
    %c0_43 = arith.constant 0 : index
    %79 = vector.load %arg15[%c0_42, %c0_43] : memref<1x128xf32, #tpu.memory_space<vmem>>, vector<1x128xf32>
    %cst_44 = arith.constant dense<0.000000e+00> : vector<8xf32>
    %80 = vector.multi_reduction <add>, %77, %cst_44 [1] : vector<8x128xf32> to vector<8xf32>
    %81 = vector.shape_cast %80 : vector<8xf32> to vector<8x1xf32>
    %cst_45 = arith.constant 1.280000e+02 : f32
    %82 = vector.broadcast %cst_45 : f32 to vector<8x1xf32>
    %83 = arith.divf %81, %82 : vector<8x1xf32>
    %84 = vector.broadcast %83 : vector<8x1xf32> to vector<8x128xf32>
    %85 = arith.subf %77, %84 : vector<8x128xf32>
    %86 = arith.mulf %85, %85 : vector<8x128xf32>
    %cst_46 = arith.constant dense<0.000000e+00> : vector<8xf32>
    %87 = vector.multi_reduction <add>, %86, %cst_46 [1] : vector<8x128xf32> to vector<8xf32>
    %88 = vector.shape_cast %87 : vector<8xf32> to vector<8x1xf32>
    %cst_47 = arith.constant 0.00787401571 : f32
    %89 = vector.broadcast %cst_47 : f32 to vector<8x1xf32>
    %90 = arith.mulf %88, %89 : vector<8x1xf32>
    %91 = math.sqrt %90 : vector<8x1xf32>
    %cst_48 = arith.constant 9.99999997E-7 : f32
    %92 = vector.broadcast %cst_48 : f32 to vector<8x1xf32>
    %93 = arith.addf %91, %92 : vector<8x1xf32>
    %94 = tpu.reciprocal %93 {approx = true} : vector<8x1xf32> -> vector<8x1xf32>
    %95 = vector.broadcast %78 : vector<1x128xf32> to vector<8x128xf32>
    %96 = arith.mulf %95, %85 : vector<8x128xf32>
    %97 = vector.broadcast %94 : vector<8x1xf32> to vector<8x128xf32>
    %98 = arith.mulf %96, %97 : vector<8x128xf32>
    %99 = vector.broadcast %79 : vector<1x128xf32> to vector<8x128xf32>
    %100 = arith.addf %98, %99 : vector<8x128xf32>
    %101 = arith.truncf %100 : vector<8x128xf32> to vector<8x128xbf16>
    %c0_49 = arith.constant 0 : index
    %c0_50 = arith.constant 0 : index
    %102 = vector.load %arg16[%c0_49, %c0_50] : memref<128x256xbf16, #tpu.memory_space<vmem>>, vector<128x256xbf16>
    %cst_51 = arith.constant dense<0.000000e+00> : vector<8x256xf32>
    %103 = tpu.matmul %101, %102, %cst_51 {dimension_numbers = #tpu.dot_dimension_numbers<[1], [0], [0], [1], [0, 0, 1, 1], [], []>} : vector<8x128xbf16>, vector<128x256xbf16>, vector<8x256xf32> -> vector<8x256xf32>
    %c0_52 = arith.constant 0 : index
    %c0_53 = arith.constant 0 : index
    %104 = vector.load %arg17[%c0_52, %c0_53] : memref<1x256xf32, #tpu.memory_space<vmem>>, vector<1x256xf32>
    %105 = vector.broadcast %104 : vector<1x256xf32> to vector<8x256xf32>
    %106 = arith.addf %103, %105 : vector<8x256xf32>
    %cst_54 = arith.constant 0.000000e+00 : f32
    %107 = vector.broadcast %cst_54 : f32 to vector<8x256xf32>
    %108 = arith.maximumf %106, %107 : vector<8x256xf32>
    %109 = arith.truncf %108 : vector<8x256xf32> to vector<8x256xbf16>
    %c0_55 = arith.constant 0 : index
    %c0_56 = arith.constant 0 : index
    %110 = vector.load %arg18[%c0_55, %c0_56] : memref<256x128xbf16, #tpu.memory_space<vmem>>, vector<256x128xbf16>
    %cst_57 = arith.constant dense<0.000000e+00> : vector<8x128xf32>
    %111 = tpu.matmul %109, %110, %cst_57 {dimension_numbers = #tpu.dot_dimension_numbers<[1], [0], [0], [1], [0, 0, 1, 1], [], []>} : vector<8x256xbf16>, vector<256x128xbf16>, vector<8x128xf32> -> vector<8x128xf32>
    %c0_58 = arith.constant 0 : index
    %c0_59 = arith.constant 0 : index
    %112 = vector.load %arg19[%c0_58, %c0_59] : memref<1x128xf32, #tpu.memory_space<vmem>>, vector<1x128xf32>
    %113 = vector.broadcast %112 : vector<1x128xf32> to vector<8x128xf32>
    %114 = arith.addf %111, %113 : vector<8x128xf32>
    %115 = arith.addf %77, %114 : vector<8x128xf32>
    %c0_60 = arith.constant 0 : index
    %c0_61 = arith.constant 0 : index
    %116 = vector.load %arg20[%c0_60, %c0_61] : memref<1x128xf32, #tpu.memory_space<vmem>>, vector<1x128xf32>
    %c0_62 = arith.constant 0 : index
    %c0_63 = arith.constant 0 : index
    %117 = vector.load %arg21[%c0_62, %c0_63] : memref<1x128xf32, #tpu.memory_space<vmem>>, vector<1x128xf32>
    %cst_64 = arith.constant dense<0.000000e+00> : vector<8xf32>
    %118 = vector.multi_reduction <add>, %115, %cst_64 [1] : vector<8x128xf32> to vector<8xf32>
    %119 = vector.shape_cast %118 : vector<8xf32> to vector<8x1xf32>
    %cst_65 = arith.constant 1.280000e+02 : f32
    %120 = vector.broadcast %cst_65 : f32 to vector<8x1xf32>
    %121 = arith.divf %119, %120 : vector<8x1xf32>
    %122 = vector.broadcast %121 : vector<8x1xf32> to vector<8x128xf32>
    %123 = arith.subf %115, %122 : vector<8x128xf32>
    %124 = arith.mulf %123, %123 : vector<8x128xf32>
    %cst_66 = arith.constant dense<0.000000e+00> : vector<8xf32>
    %125 = vector.multi_reduction <add>, %124, %cst_66 [1] : vector<8x128xf32> to vector<8xf32>
    %126 = vector.shape_cast %125 : vector<8xf32> to vector<8x1xf32>
    %cst_67 = arith.constant 0.00787401571 : f32
    %127 = vector.broadcast %cst_67 : f32 to vector<8x1xf32>
    %128 = arith.mulf %126, %127 : vector<8x1xf32>
    %129 = math.sqrt %128 : vector<8x1xf32>
    %cst_68 = arith.constant 9.99999997E-7 : f32
    %130 = vector.broadcast %cst_68 : f32 to vector<8x1xf32>
    %131 = arith.addf %129, %130 : vector<8x1xf32>
    %132 = tpu.reciprocal %131 {approx = true} : vector<8x1xf32> -> vector<8x1xf32>
    %133 = vector.broadcast %116 : vector<1x128xf32> to vector<8x128xf32>
    %134 = arith.mulf %133, %123 : vector<8x128xf32>
    %135 = vector.broadcast %132 : vector<8x1xf32> to vector<8x128xf32>
    %136 = arith.mulf %134, %135 : vector<8x128xf32>
    %137 = vector.broadcast %117 : vector<1x128xf32> to vector<8x128xf32>
    %138 = arith.addf %136, %137 : vector<8x128xf32>
    %c0_69 = arith.constant 0 : index
    %c0_70 = arith.constant 0 : index
    %c0_71 = arith.constant 0 : index
    %139 = vector.load %arg22[%c0_69, %c0_70, %c0_71] : memref<1x8x128xf32, #tpu.memory_space<vmem>>, vector<1x8x128xf32>
    %140 = vector.shape_cast %139 : vector<1x8x128xf32> to vector<8x128xf32>
    %141 = vector.shape_cast %138 : vector<8x128xf32> to vector<1x8x128xf32>
    tpu.vector_store %arg22[%c0_69, %c0_70, %c0_71], %141 {strides = array<i32>} : memref<1x8x128xf32, #tpu.memory_space<vmem>>, vector<1x8x128xf32>,
    return
  }
  func.func @transform_0(%arg0: i32) -> (i32, i32, i32) {
    %c0_i32 = arith.constant 0 : i32
    %c0_i32_0 = arith.constant 0 : i32
    %c0_i32_1 = arith.constant 0 : i32
    return %arg0, %c0_i32, %c0_i32_0 : i32, i32, i32
  }
  func.func @transform_1(%arg0: i32) -> (i32, i32, i32) {
    %c0_i32 = arith.constant 0 : i32
    %c0_i32_0 = arith.constant 0 : i32
    %c0_i32_1 = arith.constant 0 : i32
    return %arg0, %c0_i32, %c0_i32_0 : i32, i32, i32
  }
  func.func @transform_2(%arg0: i32) -> (i32, i32) {
    %c0_i32 = arith.constant 0 : i32
    %c0_i32_0 = arith.constant 0 : i32
    %c0_i32_1 = arith.constant 0 : i32
    return %c0_i32, %c0_i32_0 : i32, i32
  }
  func.func @transform_3(%arg0: i32) -> (i32, i32) {
    %c0_i32 = arith.constant 0 : i32
    %c0_i32_0 = arith.constant 0 : i32
    %c0_i32_1 = arith.constant 0 : i32
    return %c0_i32, %c0_i32_0 : i32, i32
  }
  func.func @transform_4(%arg0: i32) -> (i32, i32) {
    %c0_i32 = arith.constant 0 : i32
    %c0_i32_0 = arith.constant 0 : i32
    %c0_i32_1 = arith.constant 0 : i32
    return %c0_i32, %c0_i32_0 : i32, i32
  }
  func.func @transform_5(%arg0: i32) -> (i32, i32) {
    %c0_i32 = arith.constant 0 : i32
    %c0_i32_0 = arith.constant 0 : i32
    %c0_i32_1 = arith.constant 0 : i32
    return %c0_i32, %c0_i32_0 : i32, i32
  }
  func.func @transform_6(%arg0: i32) -> (i32, i32) {
    %c0_i32 = arith.constant 0 : i32
    %c0_i32_0 = arith.constant 0 : i32
    %c0_i32_1 = arith.constant 0 : i32
    return %c0_i32, %c0_i32_0 : i32, i32
  }
  func.func @transform_7(%arg0: i32) -> (i32, i32) {
    %c0_i32 = arith.constant 0 : i32
    %c0_i32_0 = arith.constant 0 : i32
    %c0_i32_1 = arith.constant 0 : i32
    return %c0_i32, %c0_i32_0 : i32, i32
  }
  func.func @transform_8(%arg0: i32) -> (i32, i32) {
    %c0_i32 = arith.constant 0 : i32
    %c0_i32_0 = arith.constant 0 : i32
    %c0_i32_1 = arith.constant 0 : i32
    return %c0_i32, %c0_i32_0 : i32, i32
  }
  func.func @transform_9(%arg0: i32) -> (i32, i32, i32) {
    %c0_i32 = arith.constant 0 : i32
    %c0_i32_0 = arith.constant 0 : i32
    %c0_i32_1 = arith.constant 0 : i32
    %c0_i32_2 = arith.constant 0 : i32
    return %c0_i32, %c0_i32_0, %c0_i32_1 : i32, i32, i32
  }
  func.func @transform_10(%arg0: i32) -> (i32, i32) {
    %c0_i32 = arith.constant 0 : i32
    %c0_i32_0 = arith.constant 0 : i32
    %c0_i32_1 = arith.constant 0 : i32
    return %c0_i32, %c0_i32_0 : i32, i32
  }
  func.func @transform_11(%arg0: i32) -> (i32, i32) {
    %c0_i32 = arith.constant 0 : i32
    %c0_i32_0 = arith.constant 0 : i32
    %c0_i32_1 = arith.constant 0 : i32
    return %c0_i32, %c0_i32_0 : i32, i32
  }
  func.func @transform_12(%arg0: i32) -> (i32, i32) {
    %c0_i32 = arith.constant 0 : i32
    %c0_i32_0 = arith.constant 0 : i32
    %c0_i32_1 = arith.constant 0 : i32
    return %c0_i32, %c0_i32_0 : i32, i32
  }
  func.func @transform_13(%arg0: i32) -> (i32, i32) {
    %c0_i32 = arith.constant 0 : i32
    %c0_i32_0 = arith.constant 0 : i32
    %c0_i32_1 = arith.constant 0 : i32
    return %c0_i32, %c0_i32_0 : i32, i32
  }
  func.func @transform_14(%arg0: i32) -> (i32, i32) {
    %c0_i32 = arith.constant 0 : i32
    %c0_i32_0 = arith.constant 0 : i32
    %c0_i32_1 = arith.constant 0 : i32
    return %c0_i32, %c0_i32_0 : i32, i32
  }
  func.func @transform_15(%arg0: i32) -> (i32, i32) {
    %c0_i32 = arith.constant 0 : i32
    %c0_i32_0 = arith.constant 0 : i32
    %c0_i32_1 = arith.constant 0 : i32
    return %c0_i32, %c0_i32_0 : i32, i32
  }
  func.func @transform_16(%arg0: i32) -> (i32, i32) {
    %c0_i32 = arith.constant 0 : i32
    %c0_i32_0 = arith.constant 0 : i32
    %c0_i32_1 = arith.constant 0 : i32
    return %c0_i32, %c0_i32_0 : i32, i32
  }
  func.func @transform_17(%arg0: i32) -> (i32, i32) {
    %c0_i32 = arith.constant 0 : i32
    %c0_i32_0 = arith.constant 0 : i32
    %c0_i32_1 = arith.constant 0 : i32
    return %c0_i32, %c0_i32_0 : i32, i32
  }
  func.func @transform_18(%arg0: i32) -> (i32, i32) {
    %c0_i32 = arith.constant 0 : i32
    %c0_i32_0 = arith.constant 0 : i32
    %c0_i32_1 = arith.constant 0 : i32
    return %c0_i32, %c0_i32_0 : i32, i32
  }
  func.func @transform_19(%arg0: i32) -> (i32, i32) {
    %c0_i32 = arith.constant 0 : i32
    %c0_i32_0 = arith.constant 0 : i32
    %c0_i32_1 = arith.constant 0 : i32
    return %c0_i32, %c0_i32_0 : i32, i32
  }
  func.func @transform_20(%arg0: i32) -> (i32, i32) {
    %c0_i32 = arith.constant 0 : i32
    %c0_i32_0 = arith.constant 0 : i32
    %c0_i32_1 = arith.constant 0 : i32
    return %c0_i32, %c0_i32_0 : i32, i32
  }
  func.func @transform_21(%arg0: i32) -> (i32, i32, i32) {
    %c0_i32 = arith.constant 0 : i32
    %c0_i32_0 = arith.constant 0 : i32
    %c0_i32_1 = arith.constant 0 : i32
    return %arg0, %c0_i32, %c0_i32_0 : i32, i32, i32
  }
}

module attributes {stable_mosaic.version = 11 : i64} {
  func.func @encoder_layer_kernel(%arg0: i32, %arg1: memref<1x8x128xf32, #tpu.memory_space<vmem>>, %arg2: memref<1x1x8xf32, #tpu.memory_space<vmem>>, %arg3: memref<8x128xf32, #tpu.memory_space<vmem>>, %arg4: memref<128x128xbf16, #tpu.memory_space<vmem>>, %arg5: memref<1x128xf32, #tpu.memory_space<vmem>>, %arg6: memref<128x128xbf16, #tpu.memory_space<vmem>>, %arg7: memref<1x128xf32, #tpu.memory_space<vmem>>, %arg8: memref<128x128xbf16, #tpu.memory_space<vmem>>, %arg9: memref<1x128xf32, #tpu.memory_space<vmem>>, %arg10: memref<4x32x128xbf16, #tpu.memory_space<vmem>>, %arg11: memref<1x128xf32, #tpu.memory_space<vmem>>, %arg12: memref<1x128xf32, #tpu.memory_space<vmem>>, %arg13: memref<1x128xf32, #tpu.memory_space<vmem>>, %arg14: memref<1x128xf32, #tpu.memory_space<vmem>>, %arg15: memref<1x128xf32, #tpu.memory_space<vmem>>, %arg16: memref<128x256xbf16, #tpu.memory_space<vmem>>, %arg17: memref<1x256xf32, #tpu.memory_space<vmem>>, %arg18: memref<256x128xbf16, #tpu.memory_space<vmem>>, %arg19: memref<1x128xf32, #tpu.memory_space<vmem>>, %arg20: memref<1x128xf32, #tpu.memory_space<vmem>>, %arg21: memref<1x128xf32, #tpu.memory_space<vmem>>, %arg22: memref<1x8x128xf32, #tpu.memory_space<vmem>>) attributes {dimension_semantics = [#tpu.dimension_semantics<parallel>], iteration_bounds = array<i64: 2>, scalar_prefetch = 0 : i64, scratch_operands = 0 : i64, tpu.core_type = #tpu.core_type<tc>, window_params = [{transform_indices = @transform_0, window_bounds = array<i64: 1, 8, 128>}, {transform_indices = @transform_1, window_bounds = array<i64: 1, 1, 8>}, {pipeline_mode = #tpu.pipeline_mode<synchronous>, transform_indices = @transform_2, window_bounds = array<i64: 8, 128>}, {pipeline_mode = #tpu.pipeline_mode<synchronous>, transform_indices = @transform_3, window_bounds = array<i64: 128, 128>}, {pipeline_mode = #tpu.pipeline_mode<synchronous>, transform_indices = @transform_4, window_bounds = array<i64: 1, 128>}, {pipeline_mode = #tpu.pipeline_mode<synchronous>, transform_indices = @transform_5, window_bounds = array<i64: 128, 128>}, {pipeline_mode = #tpu.pipeline_mode<synchronous>, transform_indices = @transform_6, window_bounds = array<i64: 1, 128>}, {pipeline_mode = #tpu.pipeline_mode<synchronous>, transform_indices = @transform_7, window_bounds = array<i64: 128, 128>}, {pipeline_mode = #tpu.pipeline_mode<synchronous>, transform_indices = @transform_8, window_bounds = array<i64: 1, 128>}, {pipeline_mode = #tpu.pipeline_mode<synchronous>, transform_indices = @transform_9, window_bounds = array<i64: 4, 32, 128>}, {pipeline_mode = #tpu.pipeline_mode<synchronous>, transform_indices = @transform_10, window_bounds = array<i64: 1, 128>}, {pipeline_mode = #tpu.pipeline_mode<synchronous>, transform_indices = @transform_11, window_bounds = array<i64: 1, 128>}, {pipeline_mode = #tpu.pipeline_mode<synchronous>, transform_indices = @transform_12, window_bounds = array<i64: 1, 128>}, {pipeline_mode = #tpu.pipeline_mode<synchronous>, transform_indices = @transform_13, window_bounds = array<i64: 1, 128>}, {pipeline_mode = #tpu.pipeline_mode<synchronous>, transform_indices = @transform_14, window_bounds = array<i64: 1, 128>}, {pipeline_mode = #tpu.pipeline_mode<synchronous>, transform_indices = @transform_15, window_bounds = array<i64: 128, 256>}, {pipeline_mode = #tpu.pipeline_mode<synchronous>, transform_indices = @transform_16, window_bounds = array<i64: 1, 256>}, {pipeline_mode = #tpu.pipeline_mode<synchronous>, transform_indices = @transform_17, window_bounds = array<i64: 256, 128>}, {pipeline_mode = #tpu.pipeline_mode<synchronous>, transform_indices = @transform_18, window_bounds = array<i64: 1, 128>}, {pipeline_mode = #tpu.pipeline_mode<synchronous>, transform_indices = @transform_19, window_bounds = array<i64: 1, 128>}, {pipeline_mode = #tpu.pipeline_mode<synchronous>, transform_indices = @transform_20, window_bounds = array<i64: 1, 128>}, {transform_indices = @transform_21, window_bounds = array<i64: 1, 8, 128>}]} {
    %c0 = arith.constant 0 : index
    %c0_0 = arith.constant 0 : index
    %c0_1 = arith.constant 0 : index
    %0 = vector.load %arg1[%c0, %c0_0, %c0_1] : memref<1x8x128xf32, #tpu.memory_space<vmem>>, vector<1x8x128xf32>
    %1 = vector.shape_cast %0 : vector<1x8x128xf32> to vector<8x128xf32>
    %cst = arith.constant 11.3137083 : f32
    %2 = vector.broadcast %cst : f32 to vector<8x128xf32>
    %3 = arith.mulf %1, %2 : vector<8x128xf32>
    %c0_2 = arith.constant 0 : index
    %c0_3 = arith.constant 0 : index
    %4 = vector.load %arg3[%c0_2, %c0_3] : memref<8x128xf32, #tpu.memory_space<vmem>>, vector<8x128xf32>
    %5 = arith.addf %3, %4 : vector<8x128xf32>
    %c0_4 = arith.constant 0 : index
    %c0_5 = arith.constant 0 : index
    %6 = vector.load %arg12[%c0_4, %c0_5] : memref<1x128xf32, #tpu.memory_space<vmem>>, vector<1x128xf32>
    %c0_6 = arith.constant 0 : index
    %c0_7 = arith.constant 0 : index
    %7 = vector.load %arg13[%c0_6, %c0_7] : memref<1x128xf32, #tpu.memory_space<vmem>>, vector<1x128xf32>
    %cst_8 = arith.constant dense<0.000000e+00> : vector<8xf32>
    %8 = vector.multi_reduction <add>, %5, %cst_8 [1] : vector<8x128xf32> to vector<8xf32>
    %9 = vector.shape_cast %8 : vector<8xf32> to vector<8x1xf32>
    %cst_9 = arith.constant 1.280000e+02 : f32
    %10 = vector.broadcast %cst_9 : f32 to vector<8x1xf32>
    %11 = arith.divf %9, %10 : vector<8x1xf32>
    %12 = vector.broadcast %11 : vector<8x1xf32> to vector<8x128xf32>
    %13 = arith.subf %5, %12 : vector<8x128xf32>
    %14 = arith.mulf %13, %13 : vector<8x128xf32>
    %cst_10 = arith.constant dense<0.000000e+00> : vector<8xf32>
    %15 = vector.multi_reduction <add>, %14, %cst_10 [1] : vector<8x128xf32> to vector<8xf32>
    %16 = vector.shape_cast %15 : vector<8xf32> to vector<8x1xf32>
    %cst_11 = arith.constant 0.00787401571 : f32
    %17 = vector.broadcast %cst_11 : f32 to vector<8x1xf32>
    %18 = arith.mulf %16, %17 : vector<8x1xf32>
    %19 = math.sqrt %18 : vector<8x1xf32>
    %cst_12 = arith.constant 9.99999997E-7 : f32
    %20 = vector.broadcast %cst_12 : f32 to vector<8x1xf32>
    %21 = arith.addf %19, %20 : vector<8x1xf32>
    %22 = tpu.reciprocal %21 {approx = true} : vector<8x1xf32> -> vector<8x1xf32>
    %23 = vector.broadcast %6 : vector<1x128xf32> to vector<8x128xf32>
    %24 = arith.mulf %23, %13 : vector<8x128xf32>
    %25 = vector.broadcast %22 : vector<8x1xf32> to vector<8x128xf32>
    %26 = arith.mulf %24, %25 : vector<8x128xf32>
    %27 = vector.broadcast %7 : vector<1x128xf32> to vector<8x128xf32>
    %28 = arith.addf %26, %27 : vector<8x128xf32>
    %29 = arith.truncf %28 : vector<8x128xf32> to vector<8x128xbf16>
    %c0_13 = arith.constant 0 : index
    %c0_14 = arith.constant 0 : index
    %30 = vector.load %arg4[%c0_13, %c0_14] : memref<128x128xbf16, #tpu.memory_space<vmem>>, vector<128x128xbf16>
    %cst_15 = arith.constant dense<0.000000e+00> : vector<8x128xf32>
    %31 = tpu.matmul %29, %30, %cst_15 {dimension_numbers = #tpu.dot_dimension_numbers<[1], [0], [0], [1], [0, 0, 1, 1], [], []>} : vector<8x128xbf16>, vector<128x128xbf16>, vector<8x128xf32> -> vector<8x128xf32>
    %c0_16 = arith.constant 0 : index
    %c0_17 = arith.constant 0 : index
    %32 = vector.load %arg5[%c0_16, %c0_17] : memref<1x128xf32, #tpu.memory_space<vmem>>, vector<1x128xf32>
    %33 = vector.broadcast %32 : vector<1x128xf32> to vector<8x128xf32>
    %34 = arith.addf %31, %33 : vector<8x128xf32>
    %c0_18 = arith.constant 0 : index
    %c0_19 = arith.constant 0 : index
    %35 = vector.load %arg6[%c0_18, %c0_19] : memref<128x128xbf16, #tpu.memory_space<vmem>>, vector<128x128xbf16>
    %cst_20 = arith.constant dense<0.000000e+00> : vector<8x128xf32>
    %36 = tpu.matmul %29, %35, %cst_20 {dimension_numbers = #tpu.dot_dimension_numbers<[1], [0], [0], [1], [0, 0, 1, 1], [], []>} : vector<8x128xbf16>, vector<128x128xbf16>, vector<8x128xf32> -> vector<8x128xf32>
    %c0_21 = arith.constant 0 : index
    %c0_22 = arith.constant 0 : index
    %37 = vector.load %arg7[%c0_21, %c0_22] : memref<1x128xf32, #tpu.memory_space<vmem>>, vector<1x128xf32>
    %38 = vector.broadcast %37 : vector<1x128xf32> to vector<8x128xf32>
    %39 = arith.addf %36, %38 : vector<8x128xf32>
    %c0_23 = arith.constant 0 : index
    %c0_24 = arith.constant 0 : index
    %40 = vector.load %arg8[%c0_23, %c0_24] : memref<128x128xbf16, #tpu.memory_space<vmem>>, vector<128x128xbf16>
    %cst_25 = arith.constant dense<0.000000e+00> : vector<8x128xf32>
    %41 = tpu.matmul %29, %40, %cst_25 {dimension_numbers = #tpu.dot_dimension_numbers<[1], [0], [0], [1], [0, 0, 1, 1], [], []>} : vector<8x128xbf16>, vector<128x128xbf16>, vector<8x128xf32> -> vector<8x128xf32>
    %c0_26 = arith.constant 0 : index
    %c0_27 = arith.constant 0 : index
    %42 = vector.load %arg9[%c0_26, %c0_27] : memref<1x128xf32, #tpu.memory_space<vmem>>, vector<1x128xf32>
    %43 = vector.broadcast %42 : vector<1x128xf32> to vector<8x128xf32>
    %44 = arith.addf %41, %43 : vector<8x128xf32>
    %45 = vector.shape_cast %34 : vector<8x128xf32> to vector<8x4x32xf32>
    %46 = tpu.transpose %45, [1, 0, 2] : vector<8x4x32xf32> -> vector<4x8x32xf32>
    %47 = vector.shape_cast %39 : vector<8x128xf32> to vector<8x4x32xf32>
    %48 = tpu.transpose %47, [1, 0, 2] : vector<8x4x32xf32> -> vector<4x8x32xf32>
    %49 = vector.shape_cast %44 : vector<8x128xf32> to vector<8x4x32xf32>
    %50 = tpu.transpose %49, [1, 0, 2] : vector<8x4x32xf32> -> vector<4x8x32xf32>
    %51 = arith.truncf %46 : vector<4x8x32xf32> to vector<4x8x32xbf16>
    %52 = arith.truncf %48 : vector<4x8x32xf32> to vector<4x8x32xbf16>
    "tpu.trace_start"() <{level = 10 : i32, message = "hqd,hkd->hqk"}> : () -> ()
    %cst_28 = arith.constant dense<0.000000e+00> : vector<4x8x8xf32>
    %53 = tpu.matmul %51, %52, %cst_28 {dimension_numbers = #tpu.dot_dimension_numbers<[2], [2], [1], [1], [0, 0, 0, 1, 1, 1], [0], [0]>} : vector<4x8x32xbf16>, vector<4x8x32xbf16>, vector<4x8x8xf32> -> vector<4x8x8xf32>
    "tpu.trace_stop"() : () -> ()
    %cst_29 = arith.constant 0.176776692 : f32
    %54 = vector.broadcast %cst_29 : f32 to vector<4x8x8xf32>
    %55 = arith.mulf %53, %54 : vector<4x8x8xf32>
    %c0_30 = arith.constant 0 : index
    %c0_31 = arith.constant 0 : index
    %c0_32 = arith.constant 0 : index
    %56 = vector.load %arg2[%c0_30, %c0_31, %c0_32] : memref<1x1x8xf32, #tpu.memory_space<vmem>>, vector<1x1x8xf32>
    %57 = vector.shape_cast %56 : vector<1x1x8xf32> to vector<1x8xf32>
    %58 = vector.shape_cast %57 : vector<1x8xf32> to vector<1x1x8xf32>
    %59 = vector.broadcast %58 : vector<1x1x8xf32> to vector<4x8x8xf32>
    %60 = arith.addf %55, %59 : vector<4x8x8xf32>
    %cst_33 = arith.constant dense<0xFF800000> : vector<4x8xf32>
    %61 = vector.multi_reduction <maximumf>, %60, %cst_33 [2] : vector<4x8x8xf32> to vector<4x8xf32>
    %62 = vector.shape_cast %61 : vector<4x8xf32> to vector<4x8x1xf32>
    %63 = vector.broadcast %62 : vector<4x8x1xf32> to vector<4x8x8xf32>
    %64 = arith.subf %60, %63 : vector<4x8x8xf32>
    %65 = math.exp %64 : vector<4x8x8xf32>
    %cst_34 = arith.constant dense<0.000000e+00> : vector<4x8xf32>
    %66 = vector.multi_reduction <add>, %65, %cst_34 [2] : vector<4x8x8xf32> to vector<4x8xf32>
    %67 = vector.shape_cast %66 : vector<4x8xf32> to vector<4x8x1xf32>
    %68 = tpu.reciprocal %67 {approx = true} : vector<4x8x1xf32> -> vector<4x8x1xf32>
    %69 = vector.broadcast %68 : vector<4x8x1xf32> to vector<4x8x8xf32>
    %70 = arith.mulf %65, %69 : vector<4x8x8xf32>
    %71 = arith.truncf %70 : vector<4x8x8xf32> to vector<4x8x8xbf16>
    %72 = arith.truncf %50 : vector<4x8x32xf32> to vector<4x8x32xbf16>
    "tpu.trace_start"() <{level = 10 : i32, message = "hqk,hkd->hqd"}> : () -> ()
    %cst_35 = arith.constant dense<0.000000e+00> : vector<4x8x32xf32>
    %73 = tpu.matmul %71, %72, %cst_35 {dimension_numbers = #tpu.dot_dimension_numbers<[2], [1], [1], [2], [0, 0, 0, 1, 1, 2], [0], [0]>} : vector<4x8x8xbf16>, vector<4x8x32xbf16>, vector<4x8x32xf32> -> vector<4x8x32xf32>
    "tpu.trace_stop"() : () -> ()
    %74 = arith.truncf %73 : vector<4x8x32xf32> to vector<4x8x32xbf16>
    %c0_36 = arith.constant 0 : index
    %c0_37 = arith.constant 0 : index
    %c0_38 = arith.constant 0 : index
    %75 = vector.load %arg10[%c0_36, %c0_37, %c0_38] : memref<4x32x128xbf16, #tpu.memory_space<vmem>>, vector<4x32x128xbf16>
    "tpu.trace_start"() <{level = 10 : i32, message = "hqd,hde->hqe"}> : () -> ()
    %cst_39 = arith.constant dense<0.000000e+00> : vector<4x8x128xf32>
    %76 = tpu.matmul %74, %75, %cst_39 {dimension_numbers = #tpu.dot_dimension_numbers<[2], [1], [1], [2], [0, 0, 0, 1, 1, 2], [0], [0]>} : vector<4x8x32xbf16>, vector<4x32x128xbf16>, vector<4x8x128xf32> -> vector<4x8x128xf32>
    "tpu.trace_stop"() : () -> ()
    %cst_40 = arith.constant dense<0.000000e+00> : vector<8x128xf32>
    %77 = vector.multi_reduction <add>, %76, %cst_40 [0] : vector<4x8x128xf32> to vector<8x128xf32>
    %c0_41 = arith.constant 0 : index
    %c0_42 = arith.constant 0 : index
    %78 = vector.load %arg11[%c0_41, %c0_42] : memref<1x128xf32, #tpu.memory_space<vmem>>, vector<1x128xf32>
    %79 = vector.broadcast %78 : vector<1x128xf32> to vector<8x128xf32>
    %80 = arith.addf %77, %79 : vector<8x128xf32>
    %81 = arith.addf %5, %80 : vector<8x128xf32>
    %c0_43 = arith.constant 0 : index
    %c0_44 = arith.constant 0 : index
    %82 = vector.load %arg14[%c0_43, %c0_44] : memref<1x128xf32, #tpu.memory_space<vmem>>, vector<1x128xf32>
    %c0_45 = arith.constant 0 : index
    %c0_46 = arith.constant 0 : index
    %83 = vector.load %arg15[%c0_45, %c0_46] : memref<1x128xf32, #tpu.memory_space<vmem>>, vector<1x128xf32>
    %cst_47 = arith.constant dense<0.000000e+00> : vector<8xf32>
    %84 = vector.multi_reduction <add>, %81, %cst_47 [1] : vector<8x128xf32> to vector<8xf32>
    %85 = vector.shape_cast %84 : vector<8xf32> to vector<8x1xf32>
    %cst_48 = arith.constant 1.280000e+02 : f32
    %86 = vector.broadcast %cst_48 : f32 to vector<8x1xf32>
    %87 = arith.divf %85, %86 : vector<8x1xf32>
    %88 = vector.broadcast %87 : vector<8x1xf32> to vector<8x128xf32>
    %89 = arith.subf %81, %88 : vector<8x128xf32>
    %90 = arith.mulf %89, %89 : vector<8x128xf32>
    %cst_49 = arith.constant dense<0.000000e+00> : vector<8xf32>
    %91 = vector.multi_reduction <add>, %90, %cst_49 [1] : vector<8x128xf32> to vector<8xf32>
    %92 = vector.shape_cast %91 : vector<8xf32> to vector<8x1xf32>
    %cst_50 = arith.constant 0.00787401571 : f32
    %93 = vector.broadcast %cst_50 : f32 to vector<8x1xf32>
    %94 = arith.mulf %92, %93 : vector<8x1xf32>
    %95 = math.sqrt %94 : vector<8x1xf32>
    %cst_51 = arith.constant 9.99999997E-7 : f32
    %96 = vector.broadcast %cst_51 : f32 to vector<8x1xf32>
    %97 = arith.addf %95, %96 : vector<8x1xf32>
    %98 = tpu.reciprocal %97 {approx = true} : vector<8x1xf32> -> vector<8x1xf32>
    %99 = vector.broadcast %82 : vector<1x128xf32> to vector<8x128xf32>
    %100 = arith.mulf %99, %89 : vector<8x128xf32>
    %101 = vector.broadcast %98 : vector<8x1xf32> to vector<8x128xf32>
    %102 = arith.mulf %100, %101 : vector<8x128xf32>
    %103 = vector.broadcast %83 : vector<1x128xf32> to vector<8x128xf32>
    %104 = arith.addf %102, %103 : vector<8x128xf32>
    %105 = arith.truncf %104 : vector<8x128xf32> to vector<8x128xbf16>
    %c0_52 = arith.constant 0 : index
    %c0_53 = arith.constant 0 : index
    %106 = vector.load %arg16[%c0_52, %c0_53] : memref<128x256xbf16, #tpu.memory_space<vmem>>, vector<128x256xbf16>
    %cst_54 = arith.constant dense<0.000000e+00> : vector<8x256xf32>
    %107 = tpu.matmul %105, %106, %cst_54 {dimension_numbers = #tpu.dot_dimension_numbers<[1], [0], [0], [1], [0, 0, 1, 1], [], []>} : vector<8x128xbf16>, vector<128x256xbf16>, vector<8x256xf32> -> vector<8x256xf32>
    %c0_55 = arith.constant 0 : index
    %c0_56 = arith.constant 0 : index
    %108 = vector.load %arg17[%c0_55, %c0_56] : memref<1x256xf32, #tpu.memory_space<vmem>>, vector<1x256xf32>
    %109 = vector.broadcast %108 : vector<1x256xf32> to vector<8x256xf32>
    %110 = arith.addf %107, %109 : vector<8x256xf32>
    %cst_57 = arith.constant 0.000000e+00 : f32
    %111 = vector.broadcast %cst_57 : f32 to vector<8x256xf32>
    %112 = arith.maximumf %110, %111 : vector<8x256xf32>
    %113 = arith.truncf %112 : vector<8x256xf32> to vector<8x256xbf16>
    %c0_58 = arith.constant 0 : index
    %c0_59 = arith.constant 0 : index
    %114 = vector.load %arg18[%c0_58, %c0_59] : memref<256x128xbf16, #tpu.memory_space<vmem>>, vector<256x128xbf16>
    %cst_60 = arith.constant dense<0.000000e+00> : vector<8x128xf32>
    %115 = tpu.matmul %113, %114, %cst_60 {dimension_numbers = #tpu.dot_dimension_numbers<[1], [0], [0], [1], [0, 0, 1, 1], [], []>} : vector<8x256xbf16>, vector<256x128xbf16>, vector<8x128xf32> -> vector<8x128xf32>
    %c0_61 = arith.constant 0 : index
    %c0_62 = arith.constant 0 : index
    %116 = vector.load %arg19[%c0_61, %c0_62] : memref<1x128xf32, #tpu.memory_space<vmem>>, vector<1x128xf32>
    %117 = vector.broadcast %116 : vector<1x128xf32> to vector<8x128xf32>
    %118 = arith.addf %115, %117 : vector<8x128xf32>
    %119 = arith.addf %81, %118 : vector<8x128xf32>
    %c0_63 = arith.constant 0 : index
    %c0_64 = arith.constant 0 : index
    %c0_65 = arith.constant 0 : index
    %120 = vector.load %arg22[%c0_63, %c0_64, %c0_65] : memref<1x8x128xf32, #tpu.memory_space<vmem>>, vector<1x8x128xf32>
    %121 = vector.shape_cast %120 : vector<1x8x128xf32> to vector<8x128xf32>
    %122 = vector.shape_cast %119 : vector<8x128xf32> to vector<1x8x128xf32>
    tpu.vector_store %arg22[%c0_63, %c0_64, %c0_65], %122 {strides = array<i32>} : memref<1x8x128xf32, #tpu.memory_space<vmem>>, vector<1x8x128xf32>,
    return
  }
  func.func @transform_0(%arg0: i32) -> (i32, i32, i32) {
    %c0_i32 = arith.constant 0 : i32
    %c0_i32_0 = arith.constant 0 : i32
    %c0_i32_1 = arith.constant 0 : i32
    return %arg0, %c0_i32, %c0_i32_0 : i32, i32, i32
  }
  func.func @transform_1(%arg0: i32) -> (i32, i32, i32) {
    %c0_i32 = arith.constant 0 : i32
    %c0_i32_0 = arith.constant 0 : i32
    %c0_i32_1 = arith.constant 0 : i32
    return %arg0, %c0_i32, %c0_i32_0 : i32, i32, i32
  }
  func.func @transform_2(%arg0: i32) -> (i32, i32) {
    %c0_i32 = arith.constant 0 : i32
    %c0_i32_0 = arith.constant 0 : i32
    %c0_i32_1 = arith.constant 0 : i32
    return %c0_i32, %c0_i32_0 : i32, i32
  }
  func.func @transform_3(%arg0: i32) -> (i32, i32) {
    %c0_i32 = arith.constant 0 : i32
    %c0_i32_0 = arith.constant 0 : i32
    %c0_i32_1 = arith.constant 0 : i32
    return %c0_i32, %c0_i32_0 : i32, i32
  }
  func.func @transform_4(%arg0: i32) -> (i32, i32) {
    %c0_i32 = arith.constant 0 : i32
    %c0_i32_0 = arith.constant 0 : i32
    %c0_i32_1 = arith.constant 0 : i32
    return %c0_i32, %c0_i32_0 : i32, i32
  }
  func.func @transform_5(%arg0: i32) -> (i32, i32) {
    %c0_i32 = arith.constant 0 : i32
    %c0_i32_0 = arith.constant 0 : i32
    %c0_i32_1 = arith.constant 0 : i32
    return %c0_i32, %c0_i32_0 : i32, i32
  }
  func.func @transform_6(%arg0: i32) -> (i32, i32) {
    %c0_i32 = arith.constant 0 : i32
    %c0_i32_0 = arith.constant 0 : i32
    %c0_i32_1 = arith.constant 0 : i32
    return %c0_i32, %c0_i32_0 : i32, i32
  }
  func.func @transform_7(%arg0: i32) -> (i32, i32) {
    %c0_i32 = arith.constant 0 : i32
    %c0_i32_0 = arith.constant 0 : i32
    %c0_i32_1 = arith.constant 0 : i32
    return %c0_i32, %c0_i32_0 : i32, i32
  }
  func.func @transform_8(%arg0: i32) -> (i32, i32) {
    %c0_i32 = arith.constant 0 : i32
    %c0_i32_0 = arith.constant 0 : i32
    %c0_i32_1 = arith.constant 0 : i32
    return %c0_i32, %c0_i32_0 : i32, i32
  }
  func.func @transform_9(%arg0: i32) -> (i32, i32, i32) {
    %c0_i32 = arith.constant 0 : i32
    %c0_i32_0 = arith.constant 0 : i32
    %c0_i32_1 = arith.constant 0 : i32
    %c0_i32_2 = arith.constant 0 : i32
    return %c0_i32, %c0_i32_0, %c0_i32_1 : i32, i32, i32
  }
  func.func @transform_10(%arg0: i32) -> (i32, i32) {
    %c0_i32 = arith.constant 0 : i32
    %c0_i32_0 = arith.constant 0 : i32
    %c0_i32_1 = arith.constant 0 : i32
    return %c0_i32, %c0_i32_0 : i32, i32
  }
  func.func @transform_11(%arg0: i32) -> (i32, i32) {
    %c0_i32 = arith.constant 0 : i32
    %c0_i32_0 = arith.constant 0 : i32
    %c0_i32_1 = arith.constant 0 : i32
    return %c0_i32, %c0_i32_0 : i32, i32
  }
  func.func @transform_12(%arg0: i32) -> (i32, i32) {
    %c0_i32 = arith.constant 0 : i32
    %c0_i32_0 = arith.constant 0 : i32
    %c0_i32_1 = arith.constant 0 : i32
    return %c0_i32, %c0_i32_0 : i32, i32
  }
  func.func @transform_13(%arg0: i32) -> (i32, i32) {
    %c0_i32 = arith.constant 0 : i32
    %c0_i32_0 = arith.constant 0 : i32
    %c0_i32_1 = arith.constant 0 : i32
    return %c0_i32, %c0_i32_0 : i32, i32
  }
  func.func @transform_14(%arg0: i32) -> (i32, i32) {
    %c0_i32 = arith.constant 0 : i32
    %c0_i32_0 = arith.constant 0 : i32
    %c0_i32_1 = arith.constant 0 : i32
    return %c0_i32, %c0_i32_0 : i32, i32
  }
  func.func @transform_15(%arg0: i32) -> (i32, i32) {
    %c0_i32 = arith.constant 0 : i32
    %c0_i32_0 = arith.constant 0 : i32
    %c0_i32_1 = arith.constant 0 : i32
    return %c0_i32, %c0_i32_0 : i32, i32
  }
  func.func @transform_16(%arg0: i32) -> (i32, i32) {
    %c0_i32 = arith.constant 0 : i32
    %c0_i32_0 = arith.constant 0 : i32
    %c0_i32_1 = arith.constant 0 : i32
    return %c0_i32, %c0_i32_0 : i32, i32
  }
  func.func @transform_17(%arg0: i32) -> (i32, i32) {
    %c0_i32 = arith.constant 0 : i32
    %c0_i32_0 = arith.constant 0 : i32
    %c0_i32_1 = arith.constant 0 : i32
    return %c0_i32, %c0_i32_0 : i32, i32
  }
  func.func @transform_18(%arg0: i32) -> (i32, i32) {
    %c0_i32 = arith.constant 0 : i32
    %c0_i32_0 = arith.constant 0 : i32
    %c0_i32_1 = arith.constant 0 : i32
    return %c0_i32, %c0_i32_0 : i32, i32
  }
  func.func @transform_19(%arg0: i32) -> (i32, i32) {
    %c0_i32 = arith.constant 0 : i32
    %c0_i32_0 = arith.constant 0 : i32
    %c0_i32_1 = arith.constant 0 : i32
    return %c0_i32, %c0_i32_0 : i32, i32
  }
  func.func @transform_20(%arg0: i32) -> (i32, i32) {
    %c0_i32 = arith.constant 0 : i32
    %c0_i32_0 = arith.constant 0 : i32
    %c0_i32_1 = arith.constant 0 : i32
    return %c0_i32, %c0_i32_0 : i32, i32
  }
  func.func @transform_21(%arg0: i32) -> (i32, i32, i32) {
    %c0_i32 = arith.constant 0 : i32
    %c0_i32_0 = arith.constant 0 : i32
    %c0_i32_1 = arith.constant 0 : i32
    return %arg0, %c0_i32, %c0_i32_0 : i32, i32, i32
  }
}

</mosaic_0001>

<llo_original>
// kernel: encoder_forward.3
$region0: #{encoder_forward.3}
  #allocation0 [shape = 'u32[]', space=smem, size = 0x4, offset = 0x4, fixed_abs, tag = 'smem constant byte address 0x4 - core index']
  #allocation1 [shape = 'u32[144,128]{1,0:T(1,128)}', space=vmem, size = 0x12000, scoped, tag = 'internal scratch']
  %s0 = inlined_call_operand.vmem [shape: f32[2,8,128], index: 0, kind: input, shape index: {}]
  %s1 = inlined_call_operand.vmem [shape: f32[2,1,8], index: 1, kind: input, shape index: {}]
  %s2 = inlined_call_operand.vmem [shape: f32[8,128], index: 2, kind: input, shape index: {}]
  %s3 = inlined_call_operand.vmem [shape: bf16[128,128], index: 3, kind: input, shape index: {}]
  %s4 = inlined_call_operand.vmem [shape: f32[1,128], index: 4, kind: input, shape index: {}]
  %s5 = inlined_call_operand.vmem [shape: bf16[128,128], index: 5, kind: input, shape index: {}]
  %s6 = inlined_call_operand.vmem [shape: f32[1,128], index: 6, kind: input, shape index: {}]
  %s7 = inlined_call_operand.vmem [shape: bf16[128,128], index: 7, kind: input, shape index: {}]
  %s8 = inlined_call_operand.vmem [shape: f32[1,128], index: 8, kind: input, shape index: {}]
  %s9 = inlined_call_operand.vmem [shape: bf16[4,32,128], index: 9, kind: input, shape index: {}]
  %s10 = inlined_call_operand.vmem [shape: f32[1,128], index: 10, kind: input, shape index: {}]
  %s11 = inlined_call_operand.vmem [shape: f32[1,128], index: 11, kind: input, shape index: {}]
  %s12 = inlined_call_operand.vmem [shape: f32[1,128], index: 12, kind: input, shape index: {}]
  %s13 = inlined_call_operand.vmem [shape: f32[1,128], index: 13, kind: input, shape index: {}]
  %s14 = inlined_call_operand.vmem [shape: f32[1,128], index: 14, kind: input, shape index: {}]
  %s15 = inlined_call_operand.vmem [shape: bf16[128,256], index: 15, kind: input, shape index: {}]
  %s16 = inlined_call_operand.vmem [shape: f32[1,256], index: 16, kind: input, shape index: {}]
  %s17 = inlined_call_operand.vmem [shape: bf16[256,128], index: 17, kind: input, shape index: {}]
  %s18 = inlined_call_operand.vmem [shape: f32[1,128], index: 18, kind: input, shape index: {}]
  %s19 = inlined_call_operand.vmem [shape: f32[1,128], index: 19, kind: input, shape index: {}]
  %s20 = inlined_call_operand.vmem [shape: f32[1,128], index: 20, kind: input, shape index: {}]
  %s21 = inlined_call_operand.hbm [shape: f32[2,8,128], index: 21, kind: output, shape index: {}]
  %s22 = sld [smem:[#allocation0]]
  $region117: #{encoder_forward.3} parent=0
    _
  %s24 = ssub.s32 1, %s22
  %s25 = scalar_select 0, %s24, %s22
  $region1: #{encoder_forward.3} parent=0
    #allocation2 [shape = 'u8[8192]{0}', space=vmem, size = 0x2000, scoped, tag = 'output window, operand 0']
    #allocation3 [shape = 's32[2]{0}', space=sflag, size = 0x8, scoped, tag = 'scoped memory for encoder_forward.3']
    %26 = vsyncpa [#allocation3], 0
    %s27 = scalar_lea.sflag [#allocation3], 1
    %28 = vsyncpa %s27, 0
    loop: start=0, step=1, limit=4
    $region2: #{encoder_forward.3} parent=1 // loop_pre_header
      _
    $region3: #{encoder_forward.3} parent=1 // loop_header
      %s30 = sphi 0, %s34
      %p31 = scmp.ge.s32.totalorder %s30, 4
      %s40 = sphi 0, %s42
      %s43 = sphi 0, %s40
      %s44 = sphi 0, %s43
      %s60 = sphi 0, %s44
      %s66 = sphi 0, %s68
      %s69 = sphi 0, %s66
      %s70 = sphi 0, %s69
      %s86 = sphi 0, %s70
      %s90 = sphi 0, %s90
      %s92 = sphi 0, %s90
      %s93 = sphi 0, %s92
      %s107 = sphi 0, %s93
      %s111 = sphi 0, %s111
      %s113 = sphi 0, %s111
      %s114 = sphi 0, %s113
      %s128 = sphi 0, %s114
      %s132 = sphi 0, %s132
      %s134 = sphi 0, %s132
      %s135 = sphi 0, %s134
      %s149 = sphi 0, %s135
      %s153 = sphi 0, %s153
      %s155 = sphi 0, %s153
      %s156 = sphi 0, %s155
      %s170 = sphi 0, %s156
      %s174 = sphi 0, %s174
      %s176 = sphi 0, %s174
      %s177 = sphi 0, %s176
      %s191 = sphi 0, %s177
      %s195 = sphi 0, %s195
      %s197 = sphi 0, %s195
      %s198 = sphi 0, %s197
      %s212 = sphi 0, %s198
      %s216 = sphi 0, %s216
      %s218 = sphi 0, %s216
      %s219 = sphi 0, %s218
      %s233 = sphi 0, %s219
      %s237 = sphi 0, %s237
      %s239 = sphi 0, %s237
      %s240 = sphi 0, %s239
      %s254 = sphi 0, %s240
      %s258 = sphi 0, %s258
      %s260 = sphi 0, %s258
      %s261 = sphi 0, %s260
      %s275 = sphi 0, %s261
      %s279 = sphi 0, %s279
      %s281 = sphi 0, %s279
      %s282 = sphi 0, %s281
      %s296 = sphi 0, %s282
      %s300 = sphi 0, %s300
      %s302 = sphi 0, %s300
      %s303 = sphi 0, %s302
      %s317 = sphi 0, %s303
      %s321 = sphi 0, %s321
      %s323 = sphi 0, %s321
      %s324 = sphi 0, %s323
      %s338 = sphi 0, %s324
      %s342 = sphi 0, %s342
      %s344 = sphi 0, %s342
      %s345 = sphi 0, %s344
      %s359 = sphi 0, %s345
      %s363 = sphi 0, %s363
      %s365 = sphi 0, %s363
      %s366 = sphi 0, %s365
      %s380 = sphi 0, %s366
      %s384 = sphi 0, %s384
      %s386 = sphi 0, %s384
      %s387 = sphi 0, %s386
      %s401 = sphi 0, %s387
      %s405 = sphi 0, %s405
      %s407 = sphi 0, %s405
      %s408 = sphi 0, %s407
      %s422 = sphi 0, %s408
      %s426 = sphi 0, %s426
      %s428 = sphi 0, %s426
      %s429 = sphi 0, %s428
      %s443 = sphi 0, %s429
      %s447 = sphi 0, %s447
      %s449 = sphi 0, %s447
      %s450 = sphi 0, %s449
      %s464 = sphi 0, %s450
      %s468 = sphi 0, %s468
      %s470 = sphi 0, %s468
      %s471 = sphi 0, %s470
      %s485 = sphi 0, %s471
      %s491 = sphi 0, %s493
      %s494 = sphi 0, %s491
      %s495 = sphi 0, %s494
      %s511 = sphi 0, %s495
    $region4: #{encoder_forward.3} parent=1 // loop_header_branch
      %33 = sbr.rel (%p31) target = $region8
    $region5: #{encoder_forward.3} parent=1 // loop_body
      %s35 = ssub.s32 %s30, 1
      %s36 = ssub.s32 %s30, 2
      %s37 = sadd.s32 %s30, 1
      %s38 = ssub.s32 %s30, %s37
      %p39 = scmp.eq.s32.totalorder %s38, 0
      %s41 = sadd.s32 %s40, 1
      %s42 = scalar_select %p39, %s40, %s41
      %p45 = pneg %p39
      %p46 = scmp.eq.s32.totalorder %s30, 1
      %p47 = por %p45, %p46
      %p48 = scmp.ne.s32.totalorder %s40, %s43
      %p49 = scmp.eq.s32.totalorder %s30, 0
      %p50 = por %p48, %p49
      %p51 = scmp.ne.s32.totalorder %s40, %s43
      %p52 = scmp.eq.s32.totalorder %s35, 1
      %p53 = por %p51, %p52
      %p54 = scmp.ne.s32.totalorder %s43, %s44
      %p55 = scmp.eq.s32.totalorder %s35, 0
      %p56 = por %p54, %p55
      %p57 = scmp.ne.s32.totalorder %s43, %s44
      %p58 = scmp.eq.s32.totalorder %s36, 1
      %p59 = por %p57, %p58
      %p61 = scmp.ne.s32.totalorder %s44, %s60
      %p62 = scmp.eq.s32.totalorder %s36, 0
      %p63 = por %p61, %p62
      %s64 = ssub.s32 %s30, %s37
      %p65 = scmp.eq.s32.totalorder %s64, 0
      %s67 = sadd.s32 %s66, 1
      %s68 = scalar_select %p65, %s66, %s67
      %p71 = pneg %p65
      %p72 = scmp.eq.s32.totalorder %s30, 1
      %p73 = por %p71, %p72
      %p74 = scmp.ne.s32.totalorder %s66, %s69
      %p75 = scmp.eq.s32.totalorder %s30, 0
      %p76 = por %p74, %p75
      %p77 = scmp.ne.s32.totalorder %s66, %s69
      %p78 = scmp.eq.s32.totalorder %s35, 1
      %p79 = por %p77, %p78
      %p80 = scmp.ne.s32.totalorder %s69, %s70
      %p81 = scmp.eq.s32.totalorder %s35, 0
      %p82 = por %p80, %p81
      %p83 = scmp.ne.s32.totalorder %s69, %s70
      %p84 = scmp.eq.s32.totalorder %s36, 1
      %p85 = por %p83, %p84
      %p87 = scmp.ne.s32.totalorder %s70, %s86
      %p88 = scmp.eq.s32.totalorder %s36, 0
      %p89 = por %p87, %p88
      %s91 = sadd.s32 %s90, 1
      %p94 = scmp.eq.s32.totalorder %s30, 1
      %p95 = scmp.ne.s32.totalorder %s90, %s92
      %p96 = scmp.eq.s32.totalorder %s30, 0
      %p97 = por %p95, %p96
      %p98 = scmp.ne.s32.totalorder %s90, %s92
      %p99 = scmp.eq.s32.totalorder %s35, 1
      %p100 = por %p98, %p99
      %p101 = scmp.ne.s32.totalorder %s92, %s93
      %p102 = scmp.eq.s32.totalorder %s35, 0
      %p103 = por %p101, %p102
      %p104 = scmp.ne.s32.totalorder %s92, %s93
      %p105 = scmp.eq.s32.totalorder %s36, 1
      %p106 = por %p104, %p105
      %p108 = scmp.ne.s32.totalorder %s93, %s107
      %p109 = scmp.eq.s32.totalorder %s36, 0
      %p110 = por %p108, %p109
      %s112 = sadd.s32 %s111, 1
      %p115 = scmp.eq.s32.totalorder %s30, 1
      %p116 = scmp.ne.s32.totalorder %s111, %s113
      %p117 = scmp.eq.s32.totalorder %s30, 0
      %p118 = por %p116, %p117
      %p119 = scmp.ne.s32.totalorder %s111, %s113
      %p120 = scmp.eq.s32.totalorder %s35, 1
      %p121 = por %p119, %p120
      %p122 = scmp.ne.s32.totalorder %s113, %s114
      %p123 = scmp.eq.s32.totalorder %s35, 0
      %p124 = por %p122, %p123
      %p125 = scmp.ne.s32.totalorder %s113, %s114
      %p126 = scmp.eq.s32.totalorder %s36, 1
      %p127 = por %p125, %p126
      %p129 = scmp.ne.s32.totalorder %s114, %s128
      %p130 = scmp.eq.s32.totalorder %s36, 0
      %p131 = por %p129, %p130
      %s133 = sadd.s32 %s132, 1
      %p136 = scmp.eq.s32.totalorder %s30, 1
      %p137 = scmp.ne.s32.totalorder %s132, %s134
      %p138 = scmp.eq.s32.totalorder %s30, 0
      %p139 = por %p137, %p138
      %p140 = scmp.ne.s32.totalorder %s132, %s134
      %p141 = scmp.eq.s32.totalorder %s35, 1
      %p142 = por %p140, %p141
      %p143 = scmp.ne.s32.totalorder %s134, %s135
      %p144 = scmp.eq.s32.totalorder %s35, 0
      %p145 = por %p143, %p144
      %p146 = scmp.ne.s32.totalorder %s134, %s135
      %p147 = scmp.eq.s32.totalorder %s36, 1
      %p148 = por %p146, %p147
      %p150 = scmp.ne.s32.totalorder %s135, %s149
      %p151 = scmp.eq.s32.totalorder %s36, 0
      %p152 = por %p150, %p151
      %s154 = sadd.s32 %s153, 1
      %p157 = scmp.eq.s32.totalorder %s30, 1
      %p158 = scmp.ne.s32.totalorder %s153, %s155
      %p159 = scmp.eq.s32.totalorder %s30, 0
      %p160 = por %p158, %p159
      %p161 = scmp.ne.s32.totalorder %s153, %s155
      %p162 = scmp.eq.s32.totalorder %s35, 1
      %p163 = por %p161, %p162
      %p164 = scmp.ne.s32.totalorder %s155, %s156
      %p165 = scmp.eq.s32.totalorder %s35, 0
      %p166 = por %p164, %p165
      %p167 = scmp.ne.s32.totalorder %s155, %s156
      %p168 = scmp.eq.s32.totalorder %s36, 1
      %p169 = por %p167, %p168
      %p171 = scmp.ne.s32.totalorder %s156, %s170
      %p172 = scmp.eq.s32.totalorder %s36, 0
      %p173 = por %p171, %p172
      %s175 = sadd.s32 %s174, 1
      %p178 = scmp.eq.s32.totalorder %s30, 1
      %p179 = scmp.ne.s32.totalorder %s174, %s176
      %p180 = scmp.eq.s32.totalorder %s30, 0
      %p181 = por %p179, %p180
      %p182 = scmp.ne.s32.totalorder %s174, %s176
      %p183 = scmp.eq.s32.totalorder %s35, 1
      %p184 = por %p182, %p183
      %p185 = scmp.ne.s32.totalorder %s176, %s177
      %p186 = scmp.eq.s32.totalorder %s35, 0
      %p187 = por %p185, %p186
      %p188 = scmp.ne.s32.totalorder %s176, %s177
      %p189 = scmp.eq.s32.totalorder %s36, 1
      %p190 = por %p188, %p189
      %p192 = scmp.ne.s32.totalorder %s177, %s191
      %p193 = scmp.eq.s32.totalorder %s36, 0
      %p194 = por %p192, %p193
      %s196 = sadd.s32 %s195, 1
      %p199 = scmp.eq.s32.totalorder %s30, 1
      %p200 = scmp.ne.s32.totalorder %s195, %s197
      %p201 = scmp.eq.s32.totalorder %s30, 0
      %p202 = por %p200, %p201
      %p203 = scmp.ne.s32.totalorder %s195, %s197
      %p204 = scmp.eq.s32.totalorder %s35, 1
      %p205 = por %p203, %p204
      %p206 = scmp.ne.s32.totalorder %s197, %s198
      %p207 = scmp.eq.s32.totalorder %s35, 0
      %p208 = por %p206, %p207
      %p209 = scmp.ne.s32.totalorder %s197, %s198
      %p210 = scmp.eq.s32.totalorder %s36, 1
      %p211 = por %p209, %p210
      %p213 = scmp.ne.s32.totalorder %s198, %s212
      %p214 = scmp.eq.s32.totalorder %s36, 0
      %p215 = por %p213, %p214
      %s217 = sadd.s32 %s216, 1
      %p220 = scmp.eq.s32.totalorder %s30, 1
      %p221 = scmp.ne.s32.totalorder %s216, %s218
      %p222 = scmp.eq.s32.totalorder %s30, 0
      %p223 = por %p221, %p222
      %p224 = scmp.ne.s32.totalorder %s216, %s218
      %p225 = scmp.eq.s32.totalorder %s35, 1
      %p226 = por %p224, %p225
      %p227 = scmp.ne.s32.totalorder %s218, %s219
      %p228 = scmp.eq.s32.totalorder %s35, 0
      %p229 = por %p227, %p228
      %p230 = scmp.ne.s32.totalorder %s218, %s219
      %p231 = scmp.eq.s32.totalorder %s36, 1
      %p232 = por %p230, %p231
      %p234 = scmp.ne.s32.totalorder %s219, %s233
      %p235 = scmp.eq.s32.totalorder %s36, 0
      %p236 = por %p234, %p235
      %s238 = sadd.s32 %s237, 1
      %p241 = scmp.eq.s32.totalorder %s30, 1
      %p242 = scmp.ne.s32.totalorder %s237, %s239
      %p243 = scmp.eq.s32.totalorder %s30, 0
      %p244 = por %p242, %p243
      %p245 = scmp.ne.s32.totalorder %s237, %s239
      %p246 = scmp.eq.s32.totalorder %s35, 1
      %p247 = por %p245, %p246
      %p248 = scmp.ne.s32.totalorder %s239, %s240
      %p249 = scmp.eq.s32.totalorder %s35, 0
      %p250 = por %p248, %p249
      %p251 = scmp.ne.s32.totalorder %s239, %s240
      %p252 = scmp.eq.s32.totalorder %s36, 1
      %p253 = por %p251, %p252
      %p255 = scmp.ne.s32.totalorder %s240, %s254
      %p256 = scmp.eq.s32.totalorder %s36, 0
      %p257 = por %p255, %p256
      %s259 = sadd.s32 %s258, 1
      %p262 = scmp.eq.s32.totalorder %s30, 1
      %p263 = scmp.ne.s32.totalorder %s258, %s260
      %p264 = scmp.eq.s32.totalorder %s30, 0
      %p265 = por %p263, %p264
      %p266 = scmp.ne.s32.totalorder %s258, %s260
      %p267 = scmp.eq.s32.totalorder %s35, 1
      %p268 = por %p266, %p267
      %p269 = scmp.ne.s32.totalorder %s260, %s261
      %p270 = scmp.eq.s32.totalorder %s35, 0
      %p271 = por %p269, %p270
      %p272 = scmp.ne.s32.totalorder %s260, %s261
      %p273 = scmp.eq.s32.totalorder %s36, 1
      %p274 = por %p272, %p273
      %p276 = scmp.ne.s32.totalorder %s261, %s275
      %p277 = scmp.eq.s32.totalorder %s36, 0
      %p278 = por %p276, %p277
      %s280 = sadd.s32 %s279, 1
      %p283 = scmp.eq.s32.totalorder %s30, 1
      %p284 = scmp.ne.s32.totalorder %s279, %s281
      %p285 = scmp.eq.s32.totalorder %s30, 0
      %p286 = por %p284, %p285
      %p287 = scmp.ne.s32.totalorder %s279, %s281
      %p288 = scmp.eq.s32.totalorder %s35, 1
      %p289 = por %p287, %p288
      %p290 = scmp.ne.s32.totalorder %s281, %s282
      %p291 = scmp.eq.s32.totalorder %s35, 0
      %p292 = por %p290, %p291
      %p293 = scmp.ne.s32.totalorder %s281, %s282
      %p294 = scmp.eq.s32.totalorder %s36, 1
      %p295 = por %p293, %p294
      %p297 = scmp.ne.s32.totalorder %s282, %s296
      %p298 = scmp.eq.s32.totalorder %s36, 0
      %p299 = por %p297, %p298
      %s301 = sadd.s32 %s300, 1
      %p304 = scmp.eq.s32.totalorder %s30, 1
      %p305 = scmp.ne.s32.totalorder %s300, %s302
      %p306 = scmp.eq.s32.totalorder %s30, 0
      %p307 = por %p305, %p306
      %p308 = scmp.ne.s32.totalorder %s300, %s302
      %p309 = scmp.eq.s32.totalorder %s35, 1
      %p310 = por %p308, %p309
      %p311 = scmp.ne.s32.totalorder %s302, %s303
      %p312 = scmp.eq.s32.totalorder %s35, 0
      %p313 = por %p311, %p312
      %p314 = scmp.ne.s32.totalorder %s302, %s303
      %p315 = scmp.eq.s32.totalorder %s36, 1
      %p316 = por %p314, %p315
      %p318 = scmp.ne.s32.totalorder %s303, %s317
      %p319 = scmp.eq.s32.totalorder %s36, 0
      %p320 = por %p318, %p319
      %s322 = sadd.s32 %s321, 1
      %p325 = scmp.eq.s32.totalorder %s30, 1
      %p326 = scmp.ne.s32.totalorder %s321, %s323
      %p327 = scmp.eq.s32.totalorder %s30, 0
      %p328 = por %p326, %p327
      %p329 = scmp.ne.s32.totalorder %s321, %s323
      %p330 = scmp.eq.s32.totalorder %s35, 1
      %p331 = por %p329, %p330
      %p332 = scmp.ne.s32.totalorder %s323, %s324
      %p333 = scmp.eq.s32.totalorder %s35, 0
      %p334 = por %p332, %p333
      %p335 = scmp.ne.s32.totalorder %s323, %s324
      %p336 = scmp.eq.s32.totalorder %s36, 1
      %p337 = por %p335, %p336
      %p339 = scmp.ne.s32.totalorder %s324, %s338
      %p340 = scmp.eq.s32.totalorder %s36, 0
      %p341 = por %p339, %p340
      %s343 = sadd.s32 %s342, 1
      %p346 = scmp.eq.s32.totalorder %s30, 1
      %p347 = scmp.ne.s32.totalorder %s342, %s344
      %p348 = scmp.eq.s32.totalorder %s30, 0
      %p349 = por %p347, %p348
      %p350 = scmp.ne.s32.totalorder %s342, %s344
      %p351 = scmp.eq.s32.totalorder %s35, 1
      %p352 = por %p350, %p351
      %p353 = scmp.ne.s32.totalorder %s344, %s345
      %p354 = scmp.eq.s32.totalorder %s35, 0
      %p355 = por %p353, %p354
      %p356 = scmp.ne.s32.totalorder %s344, %s345
      %p357 = scmp.eq.s32.totalorder %s36, 1
      %p358 = por %p356, %p357
      %p360 = scmp.ne.s32.totalorder %s345, %s359
      %p361 = scmp.eq.s32.totalorder %s36, 0
      %p362 = por %p360, %p361
      %s364 = sadd.s32 %s363, 1
      %p367 = scmp.eq.s32.totalorder %s30, 1
      %p368 = scmp.ne.s32.totalorder %s363, %s365
      %p369 = scmp.eq.s32.totalorder %s30, 0
      %p370 = por %p368, %p369
      %p371 = scmp.ne.s32.totalorder %s363, %s365
      %p372 = scmp.eq.s32.totalorder %s35, 1
      %p373 = por %p371, %p372
      %p374 = scmp.ne.s32.totalorder %s365, %s366
      %p375 = scmp.eq.s32.totalorder %s35, 0
      %p376 = por %p374, %p375
      %p377 = scmp.ne.s32.totalorder %s365, %s366
      %p378 = scmp.eq.s32.totalorder %s36, 1
      %p379 = por %p377, %p378
      %p381 = scmp.ne.s32.totalorder %s366, %s380
      %p382 = scmp.eq.s32.totalorder %s36, 0
      %p383 = por %p381, %p382
      %s385 = sadd.s32 %s384, 1
      %p388 = scmp.eq.s32.totalorder %s30, 1
      %p389 = scmp.ne.s32.totalorder %s384, %s386
      %p390 = scmp.eq.s32.totalorder %s30, 0
      %p391 = por %p389, %p390
      %p392 = scmp.ne.s32.totalorder %s384, %s386
      %p393 = scmp.eq.s32.totalorder %s35, 1
      %p394 = por %p392, %p393
      %p395 = scmp.ne.s32.totalorder %s386, %s387
      %p396 = scmp.eq.s32.totalorder %s35, 0
      %p397 = por %p395, %p396
      %p398 = scmp.ne.s32.totalorder %s386, %s387
      %p399 = scmp.eq.s32.totalorder %s36, 1
      %p400 = por %p398, %p399
      %p402 = scmp.ne.s32.totalorder %s387, %s401
      %p403 = scmp.eq.s32.totalorder %s36, 0
      %p404 = por %p402, %p403
      %s406 = sadd.s32 %s405, 1
      %p409 = scmp.eq.s32.totalorder %s30, 1
      %p410 = scmp.ne.s32.totalorder %s405, %s407
      %p411 = scmp.eq.s32.totalorder %s30, 0
      %p412 = por %p410, %p411
      %p413 = scmp.ne.s32.totalorder %s405, %s407
      %p414 = scmp.eq.s32.totalorder %s35, 1
      %p415 = por %p413, %p414
      %p416 = scmp.ne.s32.totalorder %s407, %s408
      %p417 = scmp.eq.s32.totalorder %s35, 0
      %p418 = por %p416, %p417
      %p419 = scmp.ne.s32.totalorder %s407, %s408
      %p420 = scmp.eq.s32.totalorder %s36, 1
      %p421 = por %p419, %p420
      %p423 = scmp.ne.s32.totalorder %s408, %s422
      %p424 = scmp.eq.s32.totalorder %s36, 0
      %p425 = por %p423, %p424
      %s427 = sadd.s32 %s426, 1
      %p430 = scmp.eq.s32.totalorder %s30, 1
      %p431 = scmp.ne.s32.totalorder %s426, %s428
      %p432 = scmp.eq.s32.totalorder %s30, 0
      %p433 = por %p431, %p432
      %p434 = scmp.ne.s32.totalorder %s426, %s428
      %p435 = scmp.eq.s32.totalorder %s35, 1
      %p436 = por %p434, %p435
      %p437 = scmp.ne.s32.totalorder %s428, %s429
      %p438 = scmp.eq.s32.totalorder %s35, 0
      %p439 = por %p437, %p438
      %p440 = scmp.ne.s32.totalorder %s428, %s429
      %p441 = scmp.eq.s32.totalorder %s36, 1
      %p442 = por %p440, %p441
      %p444 = scmp.ne.s32.totalorder %s429, %s443
      %p445 = scmp.eq.s32.totalorder %s36, 0
      %p446 = por %p444, %p445
      %s448 = sadd.s32 %s447, 1
      %p451 = scmp.eq.s32.totalorder %s30, 1
      %p452 = scmp.ne.s32.totalorder %s447, %s449
      %p453 = scmp.eq.s32.totalorder %s30, 0
      %p454 = por %p452, %p453
      %p455 = scmp.ne.s32.totalorder %s447, %s449
      %p456 = scmp.eq.s32.totalorder %s35, 1
      %p457 = por %p455, %p456
      %p458 = scmp.ne.s32.totalorder %s449, %s450
      %p459 = scmp.eq.s32.totalorder %s35, 0
      %p460 = por %p458, %p459
      %p461 = scmp.ne.s32.totalorder %s449, %s450
      %p462 = scmp.eq.s32.totalorder %s36, 1
      %p463 = por %p461, %p462
      %p465 = scmp.ne.s32.totalorder %s450, %s464
      %p466 = scmp.eq.s32.totalorder %s36, 0
      %p467 = por %p465, %p466
      %s469 = sadd.s32 %s468, 1
      %p472 = scmp.eq.s32.totalorder %s30, 1
      %p473 = scmp.ne.s32.totalorder %s468, %s470
      %p474 = scmp.eq.s32.totalorder %s30, 0
      %p475 = por %p473, %p474
      %p476 = scmp.ne.s32.totalorder %s468, %s470
      %p477 = scmp.eq.s32.totalorder %s35, 1
      %p478 = por %p476, %p477
      %p479 = scmp.ne.s32.totalorder %s470, %s471
      %p480 = scmp.eq.s32.totalorder %s35, 0
      %p481 = por %p479, %p480
      %p482 = scmp.ne.s32.totalorder %s470, %s471
      %p483 = scmp.eq.s32.totalorder %s36, 1
      %p484 = por %p482, %p483
      %p486 = scmp.ne.s32.totalorder %s471, %s485
      %p487 = scmp.eq.s32.totalorder %s36, 0
      %p488 = por %p486, %p487
      %s489 = ssub.s32 %s30, %s37
      %p490 = scmp.eq.s32.totalorder %s489, 0
      %s492 = sadd.s32 %s491, 1
      %s493 = scalar_select %p490, %s491, %s492
      %p496 = pneg %p490
      %p497 = scmp.eq.s32.totalorder %s30, 1
      %p498 = por %p496, %p497
      %p499 = scmp.ne.s32.totalorder %s491, %s494
      %p500 = scmp.eq.s32.totalorder %s30, 0
      %p501 = por %p499, %p500
      %p502 = scmp.ne.s32.totalorder %s491, %s494
      %p503 = scmp.eq.s32.totalorder %s35, 1
      %p504 = por %p502, %p503
      %p505 = scmp.ne.s32.totalorder %s494, %s495
      %p506 = scmp.eq.s32.totalorder %s35, 0
      %p507 = por %p505, %p506
      %p508 = scmp.ne.s32.totalorder %s494, %s495
      %p509 = scmp.eq.s32.totalorder %s36, 1
      %p510 = por %p508, %p509
      %p512 = scmp.ne.s32.totalorder %s495, %s511
      %p513 = scmp.eq.s32.totalorder %s36, 0
      %p514 = por %p512, %p513
      %p515 = scmp.le.s32.totalorder 1, %s30
      %p516 = scmp.lt.s32.totalorder %s30, 3
      %p517 = pnand %p515, %p516
      %p518 = pneg %p517
      // Predicated region
      $region9: #{encoder_forward.3} parent=5 // pred_check
        _
      $region10: #{encoder_forward.3} parent=5 // pred_check_branch
        %520 = sbr.rel (%p517) target = $region12
      $region11: #{encoder_forward.3} parent=5 // pred_region
        %s521 = ssub.s32 %s30, 1
        // Predicated region
        $region13: #{encoder_forward.3} parent=11 // pred_check
          %p522 = pneg %p103
        $region14: #{encoder_forward.3} parent=11 // pred_check_branch
          %524 = sbr.rel (%p522) target = $region16
        $region15: #{encoder_forward.3} parent=11 // pred_region
          _
        $region16: #{encoder_forward.3} parent=11 // pred_fallthru
          _
        // Predicated region
        $region17: #{encoder_forward.3} parent=11 // pred_check
          %p525 = pneg %p124
        $region18: #{encoder_forward.3} parent=11 // pred_check_branch
          %527 = sbr.rel (%p525) target = $region20
        $region19: #{encoder_forward.3} parent=11 // pred_region
          _
        $region20: #{encoder_forward.3} parent=11 // pred_fallthru
          _
        // Predicated region
        $region21: #{encoder_forward.3} parent=11 // pred_check
          %p528 = pneg %p145
        $region22: #{encoder_forward.3} parent=11 // pred_check_branch
          %530 = sbr.rel (%p528) target = $region24
        $region23: #{encoder_forward.3} parent=11 // pred_region
          _
        $region24: #{encoder_forward.3} parent=11 // pred_fallthru
          _
        // Predicated region
        $region25: #{encoder_forward.3} parent=11 // pred_check
          %p531 = pneg %p166
        $region26: #{encoder_forward.3} parent=11 // pred_check_branch
          %533 = sbr.rel (%p531) target = $region28
        $region27: #{encoder_forward.3} parent=11 // pred_region
          _
        $region28: #{encoder_forward.3} parent=11 // pred_fallthru
          _
        // Predicated region
        $region29: #{encoder_forward.3} parent=11 // pred_check
          %p534 = pneg %p187
        $region30: #{encoder_forward.3} parent=11 // pred_check_branch
          %536 = sbr.rel (%p534) target = $region32
        $region31: #{encoder_forward.3} parent=11 // pred_region
          _
        $region32: #{encoder_forward.3} parent=11 // pred_fallthru
          _
        // Predicated region
        $region33: #{encoder_forward.3} parent=11 // pred_check
          %p537 = pneg %p208
        $region34: #{encoder_forward.3} parent=11 // pred_check_branch
          %539 = sbr.rel (%p537) target = $region36
        $region35: #{encoder_forward.3} parent=11 // pred_region
          _
        $region36: #{encoder_forward.3} parent=11 // pred_fallthru
          _
        // Predicated region
        $region37: #{encoder_forward.3} parent=11 // pred_check
          %p540 = pneg %p229
        $region38: #{encoder_forward.3} parent=11 // pred_check_branch
          %542 = sbr.rel (%p540) target = $region40
        $region39: #{encoder_forward.3} parent=11 // pred_region
          _
        $region40: #{encoder_forward.3} parent=11 // pred_fallthru
          _
        // Predicated region
        $region41: #{encoder_forward.3} parent=11 // pred_check
          %p543 = pneg %p250
        $region42: #{encoder_forward.3} parent=11 // pred_check_branch
          %545 = sbr.rel (%p543) target = $region44
        $region43: #{encoder_forward.3} parent=11 // pred_region
          _
        $region44: #{encoder_forward.3} parent=11 // pred_fallthru
          _
        // Predicated region
        $region45: #{encoder_forward.3} parent=11 // pred_check
          %p546 = pneg %p271
        $region46: #{encoder_forward.3} parent=11 // pred_check_branch
          %548 = sbr.rel (%p546) target = $region48
        $region47: #{encoder_forward.3} parent=11 // pred_region
          _
        $region48: #{encoder_forward.3} parent=11 // pred_fallthru
          _
        // Predicated region
        $region49: #{encoder_forward.3} parent=11 // pred_check
          %p549 = pneg %p292
        $region50: #{encoder_forward.3} parent=11 // pred_check_branch
          %551 = sbr.rel (%p549) target = $region52
        $region51: #{encoder_forward.3} parent=11 // pred_region
          _
        $region52: #{encoder_forward.3} parent=11 // pred_fallthru
          _
        // Predicated region
        $region53: #{encoder_forward.3} parent=11 // pred_check
          %p552 = pneg %p313
        $region54: #{encoder_forward.3} parent=11 // pred_check_branch
          %554 = sbr.rel (%p552) target = $region56
        $region55: #{encoder_forward.3} parent=11 // pred_region
          _
        $region56: #{encoder_forward.3} parent=11 // pred_fallthru
          _
        // Predicated region
        $region57: #{encoder_forward.3} parent=11 // pred_check
          %p555 = pneg %p334
        $region58: #{encoder_forward.3} parent=11 // pred_check_branch
          %557 = sbr.rel (%p555) target = $region60
        $region59: #{encoder_forward.3} parent=11 // pred_region
          _
        $region60: #{encoder_forward.3} parent=11 // pred_fallthru
          _
        // Predicated region
        $region61: #{encoder_forward.3} parent=11 // pred_check
          %p558 = pneg %p355
        $region62: #{encoder_forward.3} parent=11 // pred_check_branch
          %560 = sbr.rel (%p558) target = $region64
        $region63: #{encoder_forward.3} parent=11 // pred_region
          _
        $region64: #{encoder_forward.3} parent=11 // pred_fallthru
          _
        // Predicated region
        $region65: #{encoder_forward.3} parent=11 // pred_check
          %p561 = pneg %p376
        $region66: #{encoder_forward.3} parent=11 // pred_check_branch
          %563 = sbr.rel (%p561) target = $region68
        $region67: #{encoder_forward.3} parent=11 // pred_region
          _
        $region68: #{encoder_forward.3} parent=11 // pred_fallthru
          _
        // Predicated region
        $region69: #{encoder_forward.3} parent=11 // pred_check
          %p564 = pneg %p397
        $region70: #{encoder_forward.3} parent=11 // pred_check_branch
          %566 = sbr.rel (%p564) target = $region72
        $region71: #{encoder_forward.3} parent=11 // pred_region
          _
        $region72: #{encoder_forward.3} parent=11 // pred_fallthru
          _
        // Predicated region
        $region73: #{encoder_forward.3} parent=11 // pred_check
          %p567 = pneg %p418
        $region74: #{encoder_forward.3} parent=11 // pred_check_branch
          %569 = sbr.rel (%p567) target = $region76
        $region75: #{encoder_forward.3} parent=11 // pred_region
          _
        $region76: #{encoder_forward.3} parent=11 // pred_fallthru
          _
        // Predicated region
        $region77: #{encoder_forward.3} parent=11 // pred_check
          %p570 = pneg %p439
        $region78: #{encoder_forward.3} parent=11 // pred_check_branch
          %572 = sbr.rel (%p570) target = $region80
        $region79: #{encoder_forward.3} parent=11 // pred_region
          _
        $region80: #{encoder_forward.3} parent=11 // pred_fallthru
          _
        // Predicated region
        $region81: #{encoder_forward.3} parent=11 // pred_check
          %p573 = pneg %p460
        $region82: #{encoder_forward.3} parent=11 // pred_check_branch
          %575 = sbr.rel (%p573) target = $region84
        $region83: #{encoder_forward.3} parent=11 // pred_region
          _
        $region84: #{encoder_forward.3} parent=11 // pred_fallthru
          _
        // Predicated region
        $region85: #{encoder_forward.3} parent=11 // pred_check
          %p576 = pneg %p481
        $region86: #{encoder_forward.3} parent=11 // pred_check_branch
          %578 = sbr.rel (%p576) target = $region88
        $region87: #{encoder_forward.3} parent=11 // pred_region
          _
        $region88: #{encoder_forward.3} parent=11 // pred_fallthru
          _
      $region12: #{encoder_forward.3} parent=5 // pred_fallthru
        _
      %p579 = scmp.lt.s32.totalorder %s30, 2
      // Predicated region
      $region89: #{encoder_forward.3} parent=5 // pred_check
        %p580 = pneg %p579
      $region90: #{encoder_forward.3} parent=5 // pred_check_branch
        %582 = sbr.rel (%p580) target = $region92
      $region91: #{encoder_forward.3} parent=5 // pred_region
        // Predicated region
        $region93: #{encoder_forward.3} parent=91 // pred_check
          %p583 = pneg %p50
        $region94: #{encoder_forward.3} parent=91 // pred_check_branch
          %585 = sbr.rel (%p583) target = $region96
        $region95: #{encoder_forward.3} parent=91 // pred_region
          %p586 = scmp.lt.s32.totalorder %s30, 1
          %s587 = scalar_select %p586, %s30, 1
          %s588 = smul.addr %s587, 8
          %s589 = scalar_lea.vmem %s0, %s588
        $region96: #{encoder_forward.3} parent=91 // pred_fallthru
          _
        // Predicated region
        $region97: #{encoder_forward.3} parent=91 // pred_check
          %p590 = pneg %p76
        $region98: #{encoder_forward.3} parent=91 // pred_check_branch
          %592 = sbr.rel (%p590) target = $region100
        $region99: #{encoder_forward.3} parent=91 // pred_region
          %p593 = scmp.lt.s32.totalorder %s30, 1
          %s594 = scalar_select %p593, %s30, 1
          %s595 = scalar_lea.vmem %s1, %s594
        $region100: #{encoder_forward.3} parent=91 // pred_fallthru
          _
      $region92: #{encoder_forward.3} parent=5 // pred_fallthru
        _
      %p596 = scmp.le.s32.totalorder 1, %s30
      %p597 = scmp.lt.s32.totalorder %s30, 3
      %p598 = pnand %p596, %p597
      %p599 = pneg %p598
      // Predicated region
      $region101: #{encoder_forward.3} parent=5 // pred_check
        _
      $region102: #{encoder_forward.3} parent=5 // pred_check_branch
        %601 = sbr.rel (%p598) target = $region104
      $region103: #{encoder_forward.3} parent=5 // pred_region
        %s602 = ssub.s32 %s30, 1
        %p603 = scmp.lt.s32.totalorder %s35, 1
        %s604 = scalar_select %p603, %s35, 1
        %s605 = smul.addr %s604, 8
        %s606 = scalar_lea.vmem %s0, %s605
        %p607 = pneg %p56
        %p608 = pneg %p53
        %p609 = scmp.lt.s32.totalorder %s35, 1
        %s610 = scalar_select %p609, %s35, 1
        %s611 = scalar_lea.vmem %s1, %s610
        %p612 = pneg %p82
        %p613 = pneg %p79
        %p614 = pneg %p103
        %p615 = pneg %p100
        %p616 = pneg %p124
        %p617 = pneg %p121
        %p618 = pneg %p145
        %p619 = pneg %p142
        %p620 = pneg %p166
        %p621 = pneg %p163
        %p622 = pneg %p187
        %p623 = pneg %p184
        %p624 = pneg %p208
        %p625 = pneg %p205
        %p626 = pneg %p229
        %p627 = pneg %p226
        %p628 = pneg %p250
        %p629 = pneg %p247
        %p630 = pneg %p271
        %p631 = pneg %p268
        %p632 = pneg %p292
        %p633 = pneg %p289
        %p634 = pneg %p313
        %p635 = pneg %p310
        %p636 = pneg %p334
        %p637 = pneg %p331
        %p638 = pneg %p355
        %p639 = pneg %p352
        %p640 = pneg %p376
        %p641 = pneg %p373
        %p642 = pneg %p397
        %p643 = pneg %p394
        %p644 = pneg %p418
        %p645 = pneg %p415
        %p646 = pneg %p439
        %p647 = pneg %p436
        %p648 = pneg %p460
        %p649 = pneg %p457
        %p650 = pneg %p481
        %p651 = pneg %p478
        %p652 = pneg %p507
        %p653 = pneg %p504
        %s654 = sand.u32 %s494, 1
        %s655 = scalar_lea.sflag [#allocation3], %s654
        %s656 = sand.u32 %s494, 1
        %s657 = smul.addr %s656, 8
        %s658 = scalar_lea.vmem [#allocation2], %s657
        %p659 = scmp.lt.s32.totalorder %s35, 1
        %s660 = scalar_select %p659, %s35, 1
        %s661 = smul.addr %s660, 8
        %s662 = scalar_lea.vmem %s0, %s661
        %p663 = scmp.lt.s32.totalorder %s35, 1
        %s664 = scalar_select %p663, %s35, 1
        %s665 = scalar_lea.vmem %s1, %s664
        %v667 = vld [vmem:[%s662] sm:$0xff]
        %v668 = vld [vmem:[%s11] sm:$0x1]
        %v669 = vld [vmem:[%s12] sm:$0x1]
        %670 = vadd.xlane.f32.xlu0 %v667
        %v671 = vpop.xlane.xlu0 %670
        %v672 = vrcp.pop 128.0
        %v673 = vmul.f32 %v671, %v672
        %v674 = vsub.f32 %v667, %v673
        %v675 = vmul.f32 %v674, %v674
        %676 = vadd.xlane.f32.xlu0 %v675
        %v677 = vpop.xlane.xlu0 %676
        %v678 = vmul.f32 %v677, 0.007874016
        %v679 = vrsqrt.pop %v678
        %v680 = vmul.f32 %v678, %v679
        %vm681 = vcmp.eq.f32.partialorder %v678, inf
        %v682 = vsel %vm681, %v678, %v680
        %vm683 = vcmp.eq.f32.partialorder %v678, 0.0
        %v684 = vand.u32 %v678, 2147483648
        %v685 = vsel %vm683, %v684, %v682
        %v686 = vadd.f32 %v685, 1e-06
        %v687 = vrcp.pop %v686
        %v689 = vlaneseq
        %v690 = vshrl.u32 %v689, 7
        %v691 = vsub.s32 0, %v690
        %v692 = vrot.slane %v668, %v691
        %v694 = vmul.f32 %v692, %v674
        %v695 = vmul.f32 %v694, %v687
        %v697 = vlaneseq
        %v698 = vshrl.u32 %v697, 7
        %v699 = vsub.s32 0, %v698
        %v700 = vrot.slane %v669, %v699
        %v702 = vadd.f32 %v695, %v700
        %v703 = vpack.c.bf16 %v702, %v702
        %v704 = vld [vmem:[%s3] sm:$0xf]
        %v705 = vld [vmem:[%s3 + $0x4] sm:$0xf]
        %v706 = vld [vmem:[%s3 + $0x8] sm:$0xf]
        %v707 = vld [vmem:[%s3 + $0xc] sm:$0xf]
        %v708 = vld [vmem:[%s3 + $0x10] sm:$0xf]
        %v709 = vld [vmem:[%s3 + $0x14] sm:$0xf]
        %v710 = vld [vmem:[%s3 + $0x18] sm:$0xf]
        %v711 = vld [vmem:[%s3 + $0x1c] sm:$0xf]
        %v712 = vld [vmem:[%s3 + $0x20] sm:$0xf]
        %v713 = vld [vmem:[%s3 + $0x24] sm:$0xf]
        %v714 = vld [vmem:[%s3 + $0x28] sm:$0xf]
        %v715 = vld [vmem:[%s3 + $0x2c] sm:$0xf]
        %v716 = vld [vmem:[%s3 + $0x30] sm:$0xf]
        %v717 = vld [vmem:[%s3 + $0x34] sm:$0xf]
        %v718 = vld [vmem:[%s3 + $0x38] sm:$0xf]
        %v719 = vld [vmem:[%s3 + $0x3c] sm:$0xf]
        %v720 = vld [vmem:[%s4] sm:$0x1]
        %v722 = vlaneseq
        %v723 = vshrl.u32 %v722, 7
        %v724 = vsub.s32 0, %v723
        %v725 = vrot.slane %v720, %v724
        %v743 = vunpack.c.l.b16 %v704
        %v744 = vunpack.c.l.b16 %v705
        %v745 = vunpack.c.l.b16 %v706
        %v746 = vunpack.c.l.b16 %v707
        %v747 = vunpack.c.l.b16 %v708
        %v748 = vunpack.c.l.b16 %v709
        %v749 = vunpack.c.l.b16 %v710
        %v750 = vunpack.c.l.b16 %v711
        %v751 = vunpack.c.l.b16 %v712
        %v752 = vunpack.c.l.b16 %v713
        %v753 = vunpack.c.l.b16 %v714
        %v754 = vunpack.c.l.b16 %v715
        %v755 = vunpack.c.l.b16 %v716
        %v756 = vunpack.c.l.b16 %v717
        %v757 = vunpack.c.l.b16 %v718
        %v758 = vunpack.c.l.b16 %v719
        %v759 = vpack.c.b16 %v744, %v743
        %v760 = vpack.c.b16 %v746, %v745
        %v761 = vpack.c.b16 %v748, %v747
        %v762 = vpack.c.b16 %v750, %v749
        %v763 = vpack.c.b16 %v752, %v751
        %v764 = vpack.c.b16 %v754, %v753
        %v765 = vpack.c.b16 %v756, %v755
        %v766 = vpack.c.b16 %v758, %v757
        %775 = vmatprep.subr.bf16.mxu0 0
        %776 = vmatpush1.bf16.msra.mxu0 %v766
        %777 = vmatprep.subr.bf16.mxu0 0
        %778 = vmatpush1.bf16.msra.mxu0 %v765
        %779 = vmatprep.subr.bf16.mxu0 0
        %780 = vmatpush1.bf16.msra.mxu0 %v764
        %781 = vmatprep.subr.bf16.mxu0 0
        %782 = vmatpush1.bf16.msra.mxu0 %v763
        %783 = vmatprep.subr.bf16.mxu0 0
        %784 = vmatpush1.bf16.msra.mxu0 %v762
        %785 = vmatprep.subr.bf16.mxu0 0
        %786 = vmatpush1.bf16.msra.mxu0 %v761
        %787 = vmatprep.subr.bf16.mxu0 0
        %788 = vmatpush1.bf16.msra.mxu0 %v760
        %789 = vmatprep.subr.bf16.mxu0 0
        %790 = vmatpush1.bf16.msra.mxu0 %v759
        %791 = vmatprep.subr.bf16.mxu0 0
        %792 = vmatpush2.bf16.msra.mxu0 0
        %793 = vmatprep.subr.bf16.mxu0 0
        %794 = vmatpush2.bf16.msra.mxu0 0
        %795 = vmatprep.subr.bf16.mxu0 0
        %796 = vmatpush2.bf16.msra.mxu0 0
        %797 = vmatprep.subr.bf16.mxu0 0
        %798 = vmatpush2.bf16.msra.mxu0 0
        %799 = vmatprep.subr.bf16.mxu0 0
        %800 = vmatpush2.bf16.msra.mxu0 0
        %801 = vmatprep.subr.bf16.mxu0 0
        %802 = vmatpush2.bf16.msra.mxu0 0
        %803 = vmatprep.subr.bf16.mxu0 0
        %804 = vmatpush2.bf16.msra.mxu0 0
        %805 = vmatprep.subr.bf16.mxu0 0
        %806 = vmatpush2.bf16.msra.mxu0 0
        %807 = vmatprep.mubr.bf16.mxu0 0
        %808 = vmatmul.mubr.bf16.gmra.mxu0 %v703
        %v809 = vpop.f32.mrf.mxu0
        %v810 = vadd.f32 %v725, %v809
        %v811 = vpop.f32.mrf.mxu0
        %v812 = vpop.f32.mrf.mxu0
        %v813 = vpop.f32.mrf.mxu0
        %814 = vdwg.mxu0
        %v815 = vld [vmem:[%s5] sm:$0xf]
        %v816 = vld [vmem:[%s5 + $0x4] sm:$0xf]
        %v817 = vld [vmem:[%s5 + $0x8] sm:$0xf]
        %v818 = vld [vmem:[%s5 + $0xc] sm:$0xf]
        %v819 = vld [vmem:[%s5 + $0x10] sm:$0xf]
        %v820 = vld [vmem:[%s5 + $0x14] sm:$0xf]
        %v821 = vld [vmem:[%s5 + $0x18] sm:$0xf]
        %v822 = vld [vmem:[%s5 + $0x1c] sm:$0xf]
        %v823 = vld [vmem:[%s5 + $0x20] sm:$0xf]
        %v824 = vld [vmem:[%s5 + $0x24] sm:$0xf]
        %v825 = vld [vmem:[%s5 + $0x28] sm:$0xf]
        %v826 = vld [vmem:[%s5 + $0x2c] sm:$0xf]
        %v827 = vld [vmem:[%s5 + $0x30] sm:$0xf]
        %v828 = vld [vmem:[%s5 + $0x34] sm:$0xf]
        %v829 = vld [vmem:[%s5 + $0x38] sm:$0xf]
        %v830 = vld [vmem:[%s5 + $0x3c] sm:$0xf]
        %v831 = vld [vmem:[%s6] sm:$0x1]
        %v833 = vlaneseq
        %v834 = vshrl.u32 %v833, 7
        %v835 = vsub.s32 0, %v834
        %v836 = vrot.slane %v831, %v835
        %v854 = vunpack.c.l.b16 %v815
        %v855 = vunpack.c.l.b16 %v816
        %v856 = vunpack.c.l.b16 %v817
        %v857 = vunpack.c.l.b16 %v818
        %v858 = vunpack.c.l.b16 %v819
        %v859 = vunpack.c.l.b16 %v820
        %v860 = vunpack.c.l.b16 %v821
        %v861 = vunpack.c.l.b16 %v822
        %v862 = vunpack.c.l.b16 %v823
        %v863 = vunpack.c.l.b16 %v824
        %v864 = vunpack.c.l.b16 %v825
        %v865 = vunpack.c.l.b16 %v826
        %v866 = vunpack.c.l.b16 %v827
        %v867 = vunpack.c.l.b16 %v828
        %v868 = vunpack.c.l.b16 %v829
        %v869 = vunpack.c.l.b16 %v830
        %v870 = vpack.c.b16 %v855, %v854
        %v871 = vpack.c.b16 %v857, %v856
        %v872 = vpack.c.b16 %v859, %v858
        %v873 = vpack.c.b16 %v861, %v860
        %v874 = vpack.c.b16 %v863, %v862
        %v875 = vpack.c.b16 %v865, %v864
        %v876 = vpack.c.b16 %v867, %v866
        %v877 = vpack.c.b16 %v869, %v868
        %886 = vmatprep.subr.bf16.mxu0 0
        %887 = vmatpush1.bf16.msra.mxu0 %v877
        %888 = vmatprep.subr.bf16.mxu0 0
        %889 = vmatpush1.bf16.msra.mxu0 %v876
        %890 = vmatprep.subr.bf16.mxu0 0
        %891 = vmatpush1.bf16.msra.mxu0 %v875
        %892 = vmatprep.subr.bf16.mxu0 0
        %893 = vmatpush1.bf16.msra.mxu0 %v874
        %894 = vmatprep.subr.bf16.mxu0 0
        %895 = vmatpush1.bf16.msra.mxu0 %v873
        %896 = vmatprep.subr.bf16.mxu0 0
        %897 = vmatpush1.bf16.msra.mxu0 %v872
        %898 = vmatprep.subr.bf16.mxu0 0
        %899 = vmatpush1.bf16.msra.mxu0 %v871
        %900 = vmatprep.subr.bf16.mxu0 0
        %901 = vmatpush1.bf16.msra.mxu0 %v870
        %902 = vmatprep.subr.bf16.mxu0 0
        %903 = vmatpush2.bf16.msra.mxu0 0
        %904 = vmatprep.subr.bf16.mxu0 0
        %905 = vmatpush2.bf16.msra.mxu0 0
        %906 = vmatprep.subr.bf16.mxu0 0
        %907 = vmatpush2.bf16.msra.mxu0 0
        %908 = vmatprep.subr.bf16.mxu0 0
        %909 = vmatpush2.bf16.msra.mxu0 0
        %910 = vmatprep.subr.bf16.mxu0 0
        %911 = vmatpush2.bf16.msra.mxu0 0
        %912 = vmatprep.subr.bf16.mxu0 0
        %913 = vmatpush2.bf16.msra.mxu0 0
        %914 = vmatprep.subr.bf16.mxu0 0
        %915 = vmatpush2.bf16.msra.mxu0 0
        %916 = vmatprep.subr.bf16.mxu0 0
        %917 = vmatpush2.bf16.msra.mxu0 0
        %918 = vmatprep.mubr.bf16.mxu0 0
        %919 = vmatmul.mubr.bf16.gmra.mxu0 %v703
        %v920 = vpop.f32.mrf.mxu0
        %v921 = vadd.f32 %v836, %v920
        %v922 = vpop.f32.mrf.mxu0
        %v923 = vpop.f32.mrf.mxu0
        %v924 = vpop.f32.mrf.mxu0
        %925 = vdwg.mxu0
        %v926 = vld [vmem:[%s7] sm:$0xf]
        %v927 = vld [vmem:[%s7 + $0x4] sm:$0xf]
        %v928 = vld [vmem:[%s7 + $0x8] sm:$0xf]
        %v929 = vld [vmem:[%s7 + $0xc] sm:$0xf]
        %v930 = vld [vmem:[%s7 + $0x10] sm:$0xf]
        %v931 = vld [vmem:[%s7 + $0x14] sm:$0xf]
        %v932 = vld [vmem:[%s7 + $0x18] sm:$0xf]
        %v933 = vld [vmem:[%s7 + $0x1c] sm:$0xf]
        %v934 = vld [vmem:[%s7 + $0x20] sm:$0xf]
        %v935 = vld [vmem:[%s7 + $0x24] sm:$0xf]
        %v936 = vld [vmem:[%s7 + $0x28] sm:$0xf]
        %v937 = vld [vmem:[%s7 + $0x2c] sm:$0xf]
        %v938 = vld [vmem:[%s7 + $0x30] sm:$0xf]
        %v939 = vld [vmem:[%s7 + $0x34] sm:$0xf]
        %v940 = vld [vmem:[%s7 + $0x38] sm:$0xf]
        %v941 = vld [vmem:[%s7 + $0x3c] sm:$0xf]
        %v942 = vld [vmem:[%s8] sm:$0x1]
        %v944 = vlaneseq
        %v945 = vshrl.u32 %v944, 7
        %v946 = vsub.s32 0, %v945
        %v947 = vrot.slane %v942, %v946
        %v965 = vunpack.c.l.b16 %v926
        %v966 = vunpack.c.l.b16 %v927
        %v967 = vunpack.c.l.b16 %v928
        %v968 = vunpack.c.l.b16 %v929
        %v969 = vunpack.c.l.b16 %v930
        %v970 = vunpack.c.l.b16 %v931
        %v971 = vunpack.c.l.b16 %v932
        %v972 = vunpack.c.l.b16 %v933
        %v973 = vunpack.c.l.b16 %v934
        %v974 = vunpack.c.l.b16 %v935
        %v975 = vunpack.c.l.b16 %v936
        %v976 = vunpack.c.l.b16 %v937
        %v977 = vunpack.c.l.b16 %v938
        %v978 = vunpack.c.l.b16 %v939
        %v979 = vunpack.c.l.b16 %v940
        %v980 = vunpack.c.l.b16 %v941
        %v981 = vpack.c.b16 %v966, %v965
        %v982 = vpack.c.b16 %v968, %v967
        %v983 = vpack.c.b16 %v970, %v969
        %v984 = vpack.c.b16 %v972, %v971
        %v985 = vpack.c.b16 %v974, %v973
        %v986 = vpack.c.b16 %v976, %v975
        %v987 = vpack.c.b16 %v978, %v977
        %v988 = vpack.c.b16 %v980, %v979
        %997 = vmatprep.subr.bf16.mxu0 0
        %998 = vmatpush1.bf16.msra.mxu0 %v988
        %999 = vmatprep.subr.bf16.mxu0 0
        %1000 = vmatpush1.bf16.msra.mxu0 %v987
        %1001 = vmatprep.subr.bf16.mxu0 0
        %1002 = vmatpush1.bf16.msra.mxu0 %v986
        %1003 = vmatprep.subr.bf16.mxu0 0
        %1004 = vmatpush1.bf16.msra.mxu0 %v985
        %1005 = vmatprep.subr.bf16.mxu0 0
        %1006 = vmatpush1.bf16.msra.mxu0 %v984
        %1007 = vmatprep.subr.bf16.mxu0 0
        %1008 = vmatpush1.bf16.msra.mxu0 %v983
        %1009 = vmatprep.subr.bf16.mxu0 0
        %1010 = vmatpush1.bf16.msra.mxu0 %v982
        %1011 = vmatprep.subr.bf16.mxu0 0
        %1012 = vmatpush1.bf16.msra.mxu0 %v981
        %1013 = vmatprep.subr.bf16.mxu0 0
        %1014 = vmatpush2.bf16.msra.mxu0 0
        %1015 = vmatprep.subr.bf16.mxu0 0
        %1016 = vmatpush2.bf16.msra.mxu0 0
        %1017 = vmatprep.subr.bf16.mxu0 0
        %1018 = vmatpush2.bf16.msra.mxu0 0
        %1019 = vmatprep.subr.bf16.mxu0 0
        %1020 = vmatpush2.bf16.msra.mxu0 0
        %1021 = vmatprep.subr.bf16.mxu0 0
        %1022 = vmatpush2.bf16.msra.mxu0 0
        %1023 = vmatprep.subr.bf16.mxu0 0
        %1024 = vmatpush2.bf16.msra.mxu0 0
        %1025 = vmatprep.subr.bf16.mxu0 0
        %1026 = vmatpush2.bf16.msra.mxu0 0
        %1027 = vmatprep.subr.bf16.mxu0 0
        %1028 = vmatpush2.bf16.msra.mxu0 0
        %1029 = vmatprep.mubr.bf16.mxu0 0
        %1030 = vmatmul.mubr.bf16.gmra.mxu0 %v703
        %v1031 = vpop.f32.mrf.mxu0
        %v1032 = vadd.f32 %v947, %v1031
        %v1033 = vpop.f32.mrf.mxu0
        %v1034 = vpop.f32.mrf.mxu0
        %v1035 = vpop.f32.mrf.mxu0
        %1036 = vdwg.mxu0
        %1038 = vrot.lane.b32.xlu0 %v810, 96
        %v1039 = vpop.permute.xlu0 %1038
        %1041 = vrot.lane.b32.xlu0 %v810, 64
        %v1042 = vpop.permute.xlu0 %1041
        %1044 = vrot.lane.b32.xlu0 %v810, 32
        %v1045 = vpop.permute.xlu0 %1044
        %v1047 = vcombine.low %v810, %v1042
        %v1048 = vcombine.high %v810, %v1042
        %v1050 = vunpack.c.l.s4 1983009808
        %v1051 = vunpack.c.0.s8 %v1050
        %v1052 = vlaneseq
        %v1053 = vshrl.u32 %v1052, 7
        %v1054 = vsub.s32 %v1051, %v1053
        %v1055 = vrot.slane %v1047, %v1054
        %v1057 = vunpack.c.l.s4 1983009808
        %v1058 = vunpack.c.0.s8 %v1057
        %v1059 = vlaneseq
        %v1060 = vshrl.u32 %v1059, 7
        %v1061 = vsub.s32 %v1058, %v1060
        %v1062 = vrot.slane %v1048, %v1061
        %v1063 = vcombine.low %v1039, %v1045
        %v1064 = vcombine.high %v1039, %v1045
        %v1066 = vunpack.c.l.s4 1983009808
        %v1067 = vunpack.c.0.s8 %v1066
        %v1068 = vlaneseq
        %v1069 = vshrl.u32 %v1068, 7
        %v1070 = vsub.s32 %v1067, %v1069
        %v1071 = vrot.slane %v1063, %v1070
        %v1073 = vunpack.c.l.s4 1983009808
        %v1074 = vunpack.c.0.s8 %v1073
        %v1075 = vlaneseq
        %v1076 = vshrl.u32 %v1075, 7
        %v1077 = vsub.s32 %v1074, %v1076
        %v1078 = vrot.slane %v1064, %v1077
        %v1079 = vcombine.low %v1055, %v1071
        %v1080 = vcombine.high %v1055, %v1071
        %v1082 = vunpack.c.l.s4 1934713408
        %v1083 = vunpack.c.0.s8 %v1082
        %v1084 = vlaneseq
        %v1085 = vshrl.u32 %v1084, 7
        %v1086 = vsub.s32 %v1083, %v1085
        %v1087 = vrot.slane %v1079, %v1086
        %v1089 = vunpack.c.l.s4 1934713408
        %v1090 = vunpack.c.0.s8 %v1089
        %v1091 = vlaneseq
        %v1092 = vshrl.u32 %v1091, 7
        %v1093 = vsub.s32 %v1090, %v1092
        %v1094 = vrot.slane %v1080, %v1093
        %v1095 = vcombine.low %v1062, %v1078
        %v1096 = vcombine.high %v1062, %v1078
        %v1098 = vunpack.c.l.s4 1934713408
        %v1099 = vunpack.c.0.s8 %v1098
        %v1100 = vlaneseq
        %v1101 = vshrl.u32 %v1100, 7
        %v1102 = vsub.s32 %v1099, %v1101
        %v1103 = vrot.slane %v1095, %v1102
        %v1105 = vunpack.c.l.s4 1934713408
        %v1106 = vunpack.c.0.s8 %v1105
        %v1107 = vlaneseq
        %v1108 = vshrl.u32 %v1107, 7
        %v1109 = vsub.s32 %v1106, %v1108
        %v1110 = vrot.slane %v1096, %v1109
        %v1111 = vcombine.high %v1087, 0.0
        %v1112 = vcombine.high %v1094, 0.0
        %v1113 = vcombine.high %v1103, 0.0
        %v1114 = vcombine.high %v1110, 0.0
        %v1115 = vcombine.low %v1087, %v1094
        %v1117 = vunpack.c.l.s4 1983009808
        %v1118 = vunpack.c.0.s8 %v1117
        %v1119 = vlaneseq
        %v1120 = vshrl.u32 %v1119, 7
        %v1121 = vsub.s32 %v1118, %v1120
        %v1122 = vrot.slane %v1115, %v1121
        %v1123 = vcombine.low %v1111, %v1112
        %v1125 = vunpack.c.l.s4 1983009808
        %v1126 = vunpack.c.0.s8 %v1125
        %v1127 = vlaneseq
        %v1128 = vshrl.u32 %v1127, 7
        %v1129 = vsub.s32 %v1126, %v1128
        %v1130 = vrot.slane %v1123, %v1129
        %v1131 = vcombine.low %v1103, %v1110
        %v1133 = vunpack.c.l.s4 1983009808
        %v1134 = vunpack.c.0.s8 %v1133
        %v1135 = vlaneseq
        %v1136 = vshrl.u32 %v1135, 7
        %v1137 = vsub.s32 %v1134, %v1136
        %v1138 = vrot.slane %v1131, %v1137
        %v1139 = vcombine.low %v1113, %v1114
        %v1141 = vunpack.c.l.s4 1983009808
        %v1142 = vunpack.c.0.s8 %v1141
        %v1143 = vlaneseq
        %v1144 = vshrl.u32 %v1143, 7
        %v1145 = vsub.s32 %v1142, %v1144
        %v1146 = vrot.slane %v1139, %v1145
        %v1147 = vcombine.low %v1122, %v1130
        %v1148 = vcombine.high %v1122, %v1130
        %v1150 = vunpack.c.l.s4 1934713408
        %v1151 = vunpack.c.0.s8 %v1150
        %v1152 = vlaneseq
        %v1153 = vshrl.u32 %v1152, 7
        %v1154 = vsub.s32 %v1151, %v1153
        %v1155 = vrot.slane %v1147, %v1154
        %v1157 = vunpack.c.l.s4 1934713408
        %v1158 = vunpack.c.0.s8 %v1157
        %v1159 = vlaneseq
        %v1160 = vshrl.u32 %v1159, 7
        %v1161 = vsub.s32 %v1158, %v1160
        %v1162 = vrot.slane %v1148, %v1161
        %v1163 = vcombine.low %v1138, %v1146
        %v1164 = vcombine.high %v1138, %v1146
        %v1166 = vunpack.c.l.s4 1934713408
        %v1167 = vunpack.c.0.s8 %v1166
        %v1168 = vlaneseq
        %v1169 = vshrl.u32 %v1168, 7
        %v1170 = vsub.s32 %v1167, %v1169
        %v1171 = vrot.slane %v1163, %v1170
        %v1173 = vunpack.c.l.s4 1934713408
        %v1174 = vunpack.c.0.s8 %v1173
        %v1175 = vlaneseq
        %v1176 = vshrl.u32 %v1175, 7
        %v1177 = vsub.s32 %v1174, %v1176
        %v1178 = vrot.slane %v1164, %v1177
        %v1179 = vcombine.low %v1155, %v1171
        %v1180 = vcombine.high %v1155, %v1171
        %v1181 = vcombine.low %v1162, %v1178
        %v1182 = vcombine.high %v1162, %v1178
        %1184 = vrot.lane.b32.xlu0 %v921, 96
        %v1185 = vpop.permute.xlu0 %1184
        %1187 = vrot.lane.b32.xlu0 %v921, 64
        %v1188 = vpop.permute.xlu0 %1187
        %1190 = vrot.lane.b32.xlu0 %v921, 32
        %v1191 = vpop.permute.xlu0 %1190
        %v1193 = vcombine.low %v921, %v1188
        %v1194 = vcombine.high %v921, %v1188
        %v1196 = vunpack.c.l.s4 1983009808
        %v1197 = vunpack.c.0.s8 %v1196
        %v1198 = vlaneseq
        %v1199 = vshrl.u32 %v1198, 7
        %v1200 = vsub.s32 %v1197, %v1199
        %v1201 = vrot.slane %v1193, %v1200
        %v1203 = vunpack.c.l.s4 1983009808
        %v1204 = vunpack.c.0.s8 %v1203
        %v1205 = vlaneseq
        %v1206 = vshrl.u32 %v1205, 7
        %v1207 = vsub.s32 %v1204, %v1206
        %v1208 = vrot.slane %v1194, %v1207
        %v1209 = vcombine.low %v1185, %v1191
        %v1210 = vcombine.high %v1185, %v1191
        %v1212 = vunpack.c.l.s4 1983009808
        %v1213 = vunpack.c.0.s8 %v1212
        %v1214 = vlaneseq
        %v1215 = vshrl.u32 %v1214, 7
        %v1216 = vsub.s32 %v1213, %v1215
        %v1217 = vrot.slane %v1209, %v1216
        %v1219 = vunpack.c.l.s4 1983009808
        %v1220 = vunpack.c.0.s8 %v1219
        %v1221 = vlaneseq
        %v1222 = vshrl.u32 %v1221, 7
        %v1223 = vsub.s32 %v1220, %v1222
        %v1224 = vrot.slane %v1210, %v1223
        %v1225 = vcombine.low %v1201, %v1217
        %v1226 = vcombine.high %v1201, %v1217
        %v1228 = vunpack.c.l.s4 1934713408
        %v1229 = vunpack.c.0.s8 %v1228
        %v1230 = vlaneseq
        %v1231 = vshrl.u32 %v1230, 7
        %v1232 = vsub.s32 %v1229, %v1231
        %v1233 = vrot.slane %v1225, %v1232
        %v1235 = vunpack.c.l.s4 1934713408
        %v1236 = vunpack.c.0.s8 %v1235
        %v1237 = vlaneseq
        %v1238 = vshrl.u32 %v1237, 7
        %v1239 = vsub.s32 %v1236, %v1238
        %v1240 = vrot.slane %v1226, %v1239
        %v1241 = vcombine.low %v1208, %v1224
        %v1242 = vcombine.high %v1208, %v1224
        %v1244 = vunpack.c.l.s4 1934713408
        %v1245 = vunpack.c.0.s8 %v1244
        %v1246 = vlaneseq
        %v1247 = vshrl.u32 %v1246, 7
        %v1248 = vsub.s32 %v1245, %v1247
        %v1249 = vrot.slane %v1241, %v1248
        %v1251 = vunpack.c.l.s4 1934713408
        %v1252 = vunpack.c.0.s8 %v1251
        %v1253 = vlaneseq
        %v1254 = vshrl.u32 %v1253, 7
        %v1255 = vsub.s32 %v1252, %v1254
        %v1256 = vrot.slane %v1242, %v1255
        %v1257 = vcombine.high %v1233, 0.0
        %v1258 = vcombine.high %v1240, 0.0
        %v1259 = vcombine.high %v1249, 0.0
        %v1260 = vcombine.high %v1256, 0.0
        %v1261 = vcombine.low %v1233, %v1240
        %v1263 = vunpack.c.l.s4 1983009808
        %v1264 = vunpack.c.0.s8 %v1263
        %v1265 = vlaneseq
        %v1266 = vshrl.u32 %v1265, 7
        %v1267 = vsub.s32 %v1264, %v1266
        %v1268 = vrot.slane %v1261, %v1267
        %v1269 = vcombine.low %v1257, %v1258
        %v1271 = vunpack.c.l.s4 1983009808
        %v1272 = vunpack.c.0.s8 %v1271
        %v1273 = vlaneseq
        %v1274 = vshrl.u32 %v1273, 7
        %v1275 = vsub.s32 %v1272, %v1274
        %v1276 = vrot.slane %v1269, %v1275
        %v1277 = vcombine.low %v1249, %v1256
        %v1279 = vunpack.c.l.s4 1983009808
        %v1280 = vunpack.c.0.s8 %v1279
        %v1281 = vlaneseq
        %v1282 = vshrl.u32 %v1281, 7
        %v1283 = vsub.s32 %v1280, %v1282
        %v1284 = vrot.slane %v1277, %v1283
        %v1285 = vcombine.low %v1259, %v1260
        %v1287 = vunpack.c.l.s4 1983009808
        %v1288 = vunpack.c.0.s8 %v1287
        %v1289 = vlaneseq
        %v1290 = vshrl.u32 %v1289, 7
        %v1291 = vsub.s32 %v1288, %v1290
        %v1292 = vrot.slane %v1285, %v1291
        %v1293 = vcombine.low %v1268, %v1276
        %v1294 = vcombine.high %v1268, %v1276
        %v1296 = vunpack.c.l.s4 1934713408
        %v1297 = vunpack.c.0.s8 %v1296
        %v1298 = vlaneseq
        %v1299 = vshrl.u32 %v1298, 7
        %v1300 = vsub.s32 %v1297, %v1299
        %v1301 = vrot.slane %v1293, %v1300
        %v1303 = vunpack.c.l.s4 1934713408
        %v1304 = vunpack.c.0.s8 %v1303
        %v1305 = vlaneseq
        %v1306 = vshrl.u32 %v1305, 7
        %v1307 = vsub.s32 %v1304, %v1306
        %v1308 = vrot.slane %v1294, %v1307
        %v1309 = vcombine.low %v1284, %v1292
        %v1310 = vcombine.high %v1284, %v1292
        %v1312 = vunpack.c.l.s4 1934713408
        %v1313 = vunpack.c.0.s8 %v1312
        %v1314 = vlaneseq
        %v1315 = vshrl.u32 %v1314, 7
        %v1316 = vsub.s32 %v1313, %v1315
        %v1317 = vrot.slane %v1309, %v1316
        %v1319 = vunpack.c.l.s4 1934713408
        %v1320 = vunpack.c.0.s8 %v1319
        %v1321 = vlaneseq
        %v1322 = vshrl.u32 %v1321, 7
        %v1323 = vsub.s32 %v1320, %v1322
        %v1324 = vrot.slane %v1310, %v1323
        %v1325 = vcombine.low %v1301, %v1317
        %v1326 = vcombine.high %v1301, %v1317
        %v1327 = vcombine.low %v1308, %v1324
        %v1328 = vcombine.high %v1308, %v1324
        %1330 = vrot.lane.b32.xlu0 %v1032, 96
        %v1331 = vpop.permute.xlu0 %1330
        %1333 = vrot.lane.b32.xlu0 %v1032, 64
        %v1334 = vpop.permute.xlu0 %1333
        %1336 = vrot.lane.b32.xlu0 %v1032, 32
        %v1337 = vpop.permute.xlu0 %1336
        %v1339 = vcombine.low %v1032, %v1334
        %v1340 = vcombine.high %v1032, %v1334
        %v1342 = vunpack.c.l.s4 1983009808
        %v1343 = vunpack.c.0.s8 %v1342
        %v1344 = vlaneseq
        %v1345 = vshrl.u32 %v1344, 7
        %v1346 = vsub.s32 %v1343, %v1345
        %v1347 = vrot.slane %v1339, %v1346
        %v1349 = vunpack.c.l.s4 1983009808
        %v1350 = vunpack.c.0.s8 %v1349
        %v1351 = vlaneseq
        %v1352 = vshrl.u32 %v1351, 7
        %v1353 = vsub.s32 %v1350, %v1352
        %v1354 = vrot.slane %v1340, %v1353
        %v1355 = vcombine.low %v1331, %v1337
        %v1356 = vcombine.high %v1331, %v1337
        %v1358 = vunpack.c.l.s4 1983009808
        %v1359 = vunpack.c.0.s8 %v1358
        %v1360 = vlaneseq
        %v1361 = vshrl.u32 %v1360, 7
        %v1362 = vsub.s32 %v1359, %v1361
        %v1363 = vrot.slane %v1355, %v1362
        %v1365 = vunpack.c.l.s4 1983009808
        %v1366 = vunpack.c.0.s8 %v1365
        %v1367 = vlaneseq
        %v1368 = vshrl.u32 %v1367, 7
        %v1369 = vsub.s32 %v1366, %v1368
        %v1370 = vrot.slane %v1356, %v1369
        %v1371 = vcombine.low %v1347, %v1363
        %v1372 = vcombine.high %v1347, %v1363
        %v1374 = vunpack.c.l.s4 1934713408
        %v1375 = vunpack.c.0.s8 %v1374
        %v1376 = vlaneseq
        %v1377 = vshrl.u32 %v1376, 7
        %v1378 = vsub.s32 %v1375, %v1377
        %v1379 = vrot.slane %v1371, %v1378
        %v1381 = vunpack.c.l.s4 1934713408
        %v1382 = vunpack.c.0.s8 %v1381
        %v1383 = vlaneseq
        %v1384 = vshrl.u32 %v1383, 7
        %v1385 = vsub.s32 %v1382, %v1384
        %v1386 = vrot.slane %v1372, %v1385
        %v1387 = vcombine.low %v1354, %v1370
        %v1388 = vcombine.high %v1354, %v1370
        %v1390 = vunpack.c.l.s4 1934713408
        %v1391 = vunpack.c.0.s8 %v1390
        %v1392 = vlaneseq
        %v1393 = vshrl.u32 %v1392, 7
        %v1394 = vsub.s32 %v1391, %v1393
        %v1395 = vrot.slane %v1387, %v1394
        %v1397 = vunpack.c.l.s4 1934713408
        %v1398 = vunpack.c.0.s8 %v1397
        %v1399 = vlaneseq
        %v1400 = vshrl.u32 %v1399, 7
        %v1401 = vsub.s32 %v1398, %v1400
        %v1402 = vrot.slane %v1388, %v1401
        %v1403 = vcombine.high %v1379, 0.0
        %v1404 = vcombine.high %v1386, 0.0
        %v1405 = vcombine.high %v1395, 0.0
        %v1406 = vcombine.high %v1402, 0.0
        %v1407 = vcombine.low %v1379, %v1386
        %v1409 = vunpack.c.l.s4 1983009808
        %v1410 = vunpack.c.0.s8 %v1409
        %v1411 = vlaneseq
        %v1412 = vshrl.u32 %v1411, 7
        %v1413 = vsub.s32 %v1410, %v1412
        %v1414 = vrot.slane %v1407, %v1413
        %v1415 = vcombine.low %v1403, %v1404
        %v1417 = vunpack.c.l.s4 1983009808
        %v1418 = vunpack.c.0.s8 %v1417
        %v1419 = vlaneseq
        %v1420 = vshrl.u32 %v1419, 7
        %v1421 = vsub.s32 %v1418, %v1420
        %v1422 = vrot.slane %v1415, %v1421
        %v1423 = vcombine.low %v1395, %v1402
        %v1425 = vunpack.c.l.s4 1983009808
        %v1426 = vunpack.c.0.s8 %v1425
        %v1427 = vlaneseq
        %v1428 = vshrl.u32 %v1427, 7
        %v1429 = vsub.s32 %v1426, %v1428
        %v1430 = vrot.slane %v1423, %v1429
        %v1431 = vcombine.low %v1405, %v1406
        %v1433 = vunpack.c.l.s4 1983009808
        %v1434 = vunpack.c.0.s8 %v1433
        %v1435 = vlaneseq
        %v1436 = vshrl.u32 %v1435, 7
        %v1437 = vsub.s32 %v1434, %v1436
        %v1438 = vrot.slane %v1431, %v1437
        %v1439 = vcombine.low %v1414, %v1422
        %v1440 = vcombine.high %v1414, %v1422
        %v1442 = vunpack.c.l.s4 1934713408
        %v1443 = vunpack.c.0.s8 %v1442
        %v1444 = vlaneseq
        %v1445 = vshrl.u32 %v1444, 7
        %v1446 = vsub.s32 %v1443, %v1445
        %v1447 = vrot.slane %v1439, %v1446
        %v1449 = vunpack.c.l.s4 1934713408
        %v1450 = vunpack.c.0.s8 %v1449
        %v1451 = vlaneseq
        %v1452 = vshrl.u32 %v1451, 7
        %v1453 = vsub.s32 %v1450, %v1452
        %v1454 = vrot.slane %v1440, %v1453
        %v1455 = vcombine.low %v1430, %v1438
        %v1456 = vcombine.high %v1430, %v1438
        %v1458 = vunpack.c.l.s4 1934713408
        %v1459 = vunpack.c.0.s8 %v1458
        %v1460 = vlaneseq
        %v1461 = vshrl.u32 %v1460, 7
        %v1462 = vsub.s32 %v1459, %v1461
        %v1463 = vrot.slane %v1455, %v1462
        %v1465 = vunpack.c.l.s4 1934713408
        %v1466 = vunpack.c.0.s8 %v1465
        %v1467 = vlaneseq
        %v1468 = vshrl.u32 %v1467, 7
        %v1469 = vsub.s32 %v1466, %v1468
        %v1470 = vrot.slane %v1456, %v1469
        %v1471 = vcombine.low %v1447, %v1463
        %v1472 = vcombine.high %v1447, %v1463
        %v1473 = vcombine.low %v1454, %v1470
        %v1474 = vcombine.high %v1454, %v1470
        %v1475 = vpack.c.bf16 %v1179, %v1179
        %v1476 = vpack.c.bf16 %v1180, %v1180
        %v1477 = vpack.c.bf16 %v1181, %v1181
        %v1478 = vpack.c.bf16 %v1182, %v1182
        %v1479 = vpack.c.bf16 %v1325, %v1325
        %v1480 = vpack.c.bf16 %v1326, %v1326
        %v1481 = vpack.c.bf16 %v1327, %v1327
        %v1482 = vpack.c.bf16 %v1328, %v1328
        %vm1483 = vcmask 261120
        %v1485 = vsel %vm1483, %v1475, 0
        %v1488 = vsel %vm1483, %v1479, 0
        %1490 = vmatprep.subr.bf16.mxu0 0
        %1491 = vmatpush1.bf16.xpose.msra.mxu0 0
        %1492 = vmatprep.subr.bf16.mxu0 0
        %1493 = vmatpush1.bf16.xpose.msra.mxu0 0
        %1494 = vmatprep.subr.bf16.mxu0 0
        %1495 = vmatpush1.bf16.xpose.msra.mxu0 0
        %1496 = vmatprep.subr.bf16.mxu0 0
        %1497 = vmatpush1.bf16.xpose.msra.mxu0 0
        %1498 = vmatprep.subr.bf16.mxu0 0
        %1499 = vmatpush1.bf16.xpose.msra.mxu0 0
        %1500 = vmatprep.subr.bf16.mxu0 0
        %1501 = vmatpush1.bf16.xpose.msra.mxu0 0
        %1502 = vmatprep.subr.bf16.mxu0 0
        %1503 = vmatpush1.bf16.xpose.msra.mxu0 0
        %1504 = vmatprep.subr.bf16.mxu0 0
        %1505 = vmatpush1.bf16.xpose.msra.mxu0 %v1488
        %1506 = vmatprep.subr.bf16.mxu0 0
        %1507 = vmatpush2.bf16.xpose.msra.mxu0 0
        %1508 = vmatprep.subr.bf16.mxu0 0
        %1509 = vmatpush2.bf16.xpose.msra.mxu0 0
        %1510 = vmatprep.subr.bf16.mxu0 0
        %1511 = vmatpush2.bf16.xpose.msra.mxu0 0
        %1512 = vmatprep.subr.bf16.mxu0 0
        %1513 = vmatpush2.bf16.xpose.msra.mxu0 0
        %1514 = vmatprep.subr.bf16.mxu0 0
        %1515 = vmatpush2.bf16.xpose.msra.mxu0 0
        %1516 = vmatprep.subr.bf16.mxu0 0
        %1517 = vmatpush2.bf16.xpose.msra.mxu0 0
        %1518 = vmatprep.subr.bf16.mxu0 0
        %1519 = vmatpush2.bf16.xpose.msra.mxu0 0
        %1520 = vmatprep.subr.bf16.mxu0 0
        %1521 = vmatpush2.bf16.xpose.msra.mxu0 0
        %1522 = vmatprep.mubr.bf16.mxu0 0
        %1523 = vmatmul.mubr.bf16.gmra.mxu0 %v1485
        %v1524 = vpop.f32.mrf.mxu0
        %v1525 = vadd.f32 0.0, %v1524
        %v1526 = vpop.f32.mrf.mxu0
        %v1527 = vpop.f32.mrf.mxu0
        %v1528 = vpop.f32.mrf.mxu0
        %1529 = vdwg.mxu0
        %v1531 = vsel %vm1483, %v1476, 0
        %v1534 = vsel %vm1483, %v1480, 0
        %1536 = vmatprep.subr.bf16.mxu0 0
        %1537 = vmatpush1.bf16.xpose.msra.mxu0 0
        %1538 = vmatprep.subr.bf16.mxu0 0
        %1539 = vmatpush1.bf16.xpose.msra.mxu0 0
        %1540 = vmatprep.subr.bf16.mxu0 0
        %1541 = vmatpush1.bf16.xpose.msra.mxu0 0
        %1542 = vmatprep.subr.bf16.mxu0 0
        %1543 = vmatpush1.bf16.xpose.msra.mxu0 0
        %1544 = vmatprep.subr.bf16.mxu0 0
        %1545 = vmatpush1.bf16.xpose.msra.mxu0 0
        %1546 = vmatprep.subr.bf16.mxu0 0
        %1547 = vmatpush1.bf16.xpose.msra.mxu0 0
        %1548 = vmatprep.subr.bf16.mxu0 0
        %1549 = vmatpush1.bf16.xpose.msra.mxu0 0
        %1550 = vmatprep.subr.bf16.mxu0 0
        %1551 = vmatpush1.bf16.xpose.msra.mxu0 %v1534
        %1552 = vmatprep.subr.bf16.mxu0 0
        %1553 = vmatpush2.bf16.xpose.msra.mxu0 0
        %1554 = vmatprep.subr.bf16.mxu0 0
        %1555 = vmatpush2.bf16.xpose.msra.mxu0 0
        %1556 = vmatprep.subr.bf16.mxu0 0
        %1557 = vmatpush2.bf16.xpose.msra.mxu0 0
        %1558 = vmatprep.subr.bf16.mxu0 0
        %1559 = vmatpush2.bf16.xpose.msra.mxu0 0
        %1560 = vmatprep.subr.bf16.mxu0 0
        %1561 = vmatpush2.bf16.xpose.msra.mxu0 0
        %1562 = vmatprep.subr.bf16.mxu0 0
        %1563 = vmatpush2.bf16.xpose.msra.mxu0 0
        %1564 = vmatprep.subr.bf16.mxu0 0
        %1565 = vmatpush2.bf16.xpose.msra.mxu0 0
        %1566 = vmatprep.subr.bf16.mxu0 0
        %1567 = vmatpush2.bf16.xpose.msra.mxu0 0
        %1568 = vmatprep.mubr.bf16.mxu0 0
        %1569 = vmatmul.mubr.bf16.gmra.mxu0 %v1531
        %v1570 = vpop.f32.mrf.mxu0
        %v1571 = vadd.f32 0.0, %v1570
        %v1572 = vpop.f32.mrf.mxu0
        %v1573 = vpop.f32.mrf.mxu0
        %v1574 = vpop.f32.mrf.mxu0
        %1575 = vdwg.mxu0
        %v1577 = vsel %vm1483, %v1477, 0
        %v1580 = vsel %vm1483, %v1481, 0
        %1582 = vmatprep.subr.bf16.mxu0 0
        %1583 = vmatpush1.bf16.xpose.msra.mxu0 0
        %1584 = vmatprep.subr.bf16.mxu0 0
        %1585 = vmatpush1.bf16.xpose.msra.mxu0 0
        %1586 = vmatprep.subr.bf16.mxu0 0
        %1587 = vmatpush1.bf16.xpose.msra.mxu0 0
        %1588 = vmatprep.subr.bf16.mxu0 0
        %1589 = vmatpush1.bf16.xpose.msra.mxu0 0
        %1590 = vmatprep.subr.bf16.mxu0 0
        %1591 = vmatpush1.bf16.xpose.msra.mxu0 0
        %1592 = vmatprep.subr.bf16.mxu0 0
        %1593 = vmatpush1.bf16.xpose.msra.mxu0 0
        %1594 = vmatprep.subr.bf16.mxu0 0
        %1595 = vmatpush1.bf16.xpose.msra.mxu0 0
        %1596 = vmatprep.subr.bf16.mxu0 0
        %1597 = vmatpush1.bf16.xpose.msra.mxu0 %v1580
        %1598 = vmatprep.subr.bf16.mxu0 0
        %1599 = vmatpush2.bf16.xpose.msra.mxu0 0
        %1600 = vmatprep.subr.bf16.mxu0 0
        %1601 = vmatpush2.bf16.xpose.msra.mxu0 0
        %1602 = vmatprep.subr.bf16.mxu0 0
        %1603 = vmatpush2.bf16.xpose.msra.mxu0 0
        %1604 = vmatprep.subr.bf16.mxu0 0
        %1605 = vmatpush2.bf16.xpose.msra.mxu0 0
        %1606 = vmatprep.subr.bf16.mxu0 0
        %1607 = vmatpush2.bf16.xpose.msra.mxu0 0
        %1608 = vmatprep.subr.bf16.mxu0 0
        %1609 = vmatpush2.bf16.xpose.msra.mxu0 0
        %1610 = vmatprep.subr.bf16.mxu0 0
        %1611 = vmatpush2.bf16.xpose.msra.mxu0 0
        %1612 = vmatprep.subr.bf16.mxu0 0
        %1613 = vmatpush2.bf16.xpose.msra.mxu0 0
        %1614 = vmatprep.mubr.bf16.mxu0 0
        %1615 = vmatmul.mubr.bf16.gmra.mxu0 %v1577
        %v1616 = vpop.f32.mrf.mxu0
        %v1617 = vadd.f32 0.0, %v1616
        %v1618 = vpop.f32.mrf.mxu0
        %v1619 = vpop.f32.mrf.mxu0
        %v1620 = vpop.f32.mrf.mxu0
        %1621 = vdwg.mxu0
        %v1623 = vsel %vm1483, %v1478, 0
        %v1626 = vsel %vm1483, %v1482, 0
        %1628 = vmatprep.subr.bf16.mxu0 0
        %1629 = vmatpush1.bf16.xpose.msra.mxu0 0
        %1630 = vmatprep.subr.bf16.mxu0 0
        %1631 = vmatpush1.bf16.xpose.msra.mxu0 0
        %1632 = vmatprep.subr.bf16.mxu0 0
        %1633 = vmatpush1.bf16.xpose.msra.mxu0 0
        %1634 = vmatprep.subr.bf16.mxu0 0
        %1635 = vmatpush1.bf16.xpose.msra.mxu0 0
        %1636 = vmatprep.subr.bf16.mxu0 0
        %1637 = vmatpush1.bf16.xpose.msra.mxu0 0
        %1638 = vmatprep.subr.bf16.mxu0 0
        %1639 = vmatpush1.bf16.xpose.msra.mxu0 0
        %1640 = vmatprep.subr.bf16.mxu0 0
        %1641 = vmatpush1.bf16.xpose.msra.mxu0 0
        %1642 = vmatprep.subr.bf16.mxu0 0
        %1643 = vmatpush1.bf16.xpose.msra.mxu0 %v1626
        %1644 = vmatprep.subr.bf16.mxu0 0
        %1645 = vmatpush2.bf16.xpose.msra.mxu0 0
        %1646 = vmatprep.subr.bf16.mxu0 0
        %1647 = vmatpush2.bf16.xpose.msra.mxu0 0
        %1648 = vmatprep.subr.bf16.mxu0 0
        %1649 = vmatpush2.bf16.xpose.msra.mxu0 0
        %1650 = vmatprep.subr.bf16.mxu0 0
        %1651 = vmatpush2.bf16.xpose.msra.mxu0 0
        %1652 = vmatprep.subr.bf16.mxu0 0
        %1653 = vmatpush2.bf16.xpose.msra.mxu0 0
        %1654 = vmatprep.subr.bf16.mxu0 0
        %1655 = vmatpush2.bf16.xpose.msra.mxu0 0
        %1656 = vmatprep.subr.bf16.mxu0 0
        %1657 = vmatpush2.bf16.xpose.msra.mxu0 0
        %1658 = vmatprep.subr.bf16.mxu0 0
        %1659 = vmatpush2.bf16.xpose.msra.mxu0 0
        %1660 = vmatprep.mubr.bf16.mxu0 0
        %1661 = vmatmul.mubr.bf16.gmra.mxu0 %v1623
        %v1662 = vpop.f32.mrf.mxu0
        %v1663 = vadd.f32 0.0, %v1662
        %v1664 = vpop.f32.mrf.mxu0
        %v1665 = vpop.f32.mrf.mxu0
        %v1666 = vpop.f32.mrf.mxu0
        %1667 = vdwg.mxu0
        %v1668 = vmul.f32 %v1525, 0.17677669
        %v1669 = vmul.f32 %v1571, 0.17677669
        %v1670 = vmul.f32 %v1617, 0.17677669
        %v1671 = vmul.f32 %v1663, 0.17677669
        %v1672 = vld [vmem:[%s665] sm:$0x1]
        %v1674 = vlaneseq
        %v1675 = vshrl.u32 %v1674, 7
        %v1676 = vsub.s32 0, %v1675
        %v1677 = vrot.slane %v1672, %v1676
        %v1679 = vadd.f32 %v1668, %v1677
        %v1680 = vadd.f32 %v1669, %v1677
        %v1681 = vadd.f32 %v1670, %v1677
        %v1682 = vadd.f32 %v1671, %v1677
        %vm1683 = vcmask 64512
        %v1684 = vsel %vm1683, %v1679, -inf
        %1685 = vmax.xlane.f32.xlu0 %v1684
        %v1686 = vpop.xlane.xlu0 %1685
        %v1687 = vsel %vm1683, %v1680, -inf
        %1688 = vmax.xlane.f32.xlu0 %v1687
        %v1689 = vpop.xlane.xlu0 %1688
        %v1690 = vsel %vm1683, %v1681, -inf
        %1691 = vmax.xlane.f32.xlu0 %v1690
        %v1692 = vpop.xlane.xlu0 %1691
        %v1693 = vsel %vm1683, %v1682, -inf
        %1694 = vmax.xlane.f32.xlu0 %v1693
        %v1695 = vpop.xlane.xlu0 %1694
        %v1696 = vsub.f32 %v1679, %v1686
        %v1697 = vsub.f32 %v1680, %v1689
        %v1698 = vsub.f32 %v1681, %v1692
        %v1699 = vsub.f32 %v1682, %v1695
        %v1700 = vmul.f32 %v1696, 1.442695
        %v1701 = vpow.pop %v1700
        %v1702 = vmul.f32 %v1697, 1.442695
        %v1703 = vpow.pop %v1702
        %v1704 = vmul.f32 %v1698, 1.442695
        %v1705 = vpow.pop %v1704
        %v1706 = vmul.f32 %v1699, 1.442695
        %v1707 = vpow.pop %v1706
        %v1708 = vsel %vm1683, %v1701, 0.0
        %1709 = vadd.xlane.f32.xlu0 %v1708
        %v1710 = vpop.xlane.xlu0 %1709
        %v1711 = vsel %vm1683, %v1703, 0.0
        %1712 = vadd.xlane.f32.xlu0 %v1711
        %v1713 = vpop.xlane.xlu0 %1712
        %v1714 = vsel %vm1683, %v1705, 0.0
        %1715 = vadd.xlane.f32.xlu0 %v1714
        %v1716 = vpop.xlane.xlu0 %1715
        %v1717 = vsel %vm1683, %v1707, 0.0
        %1718 = vadd.xlane.f32.xlu0 %v1717
        %v1719 = vpop.xlane.xlu0 %1718
        %v1720 = vrcp.pop %v1710
        %v1721 = vrcp.pop %v1713
        %v1722 = vrcp.pop %v1716
        %v1723 = vrcp.pop %v1719
        %v1724 = vmul.f32 %v1701, %v1720
        %v1725 = vmul.f32 %v1703, %v1721
        %v1726 = vmul.f32 %v1705, %v1722
        %v1727 = vmul.f32 %v1707, %v1723
        %v1728 = vpack.c.bf16 %v1724, %v1724
        %v1729 = vpack.c.bf16 %v1725, %v1725
        %v1730 = vpack.c.bf16 %v1726, %v1726
        %v1731 = vpack.c.bf16 %v1727, %v1727
        %v1732 = vpack.c.bf16 %v1471, %v1471
        %v1733 = vpack.c.bf16 %v1472, %v1472
        %v1734 = vpack.c.bf16 %v1473, %v1473
        %v1735 = vpack.c.bf16 %v1474, %v1474
        %v1737 = vsel %vm1683, %v1728, 0
        %vm1739 = vcmask 1043456
        %v1741 = vsel %vm1739, %v1732, 0
        %1743 = vmatprep.subr.bf16.mxu0 0
        %1744 = vmatpush1.bf16.msra.mxu0 0
        %1745 = vmatprep.subr.bf16.mxu0 0
        %1746 = vmatpush1.bf16.msra.mxu0 0
        %1747 = vmatprep.subr.bf16.mxu0 0
        %1748 = vmatpush1.bf16.msra.mxu0 0
        %1749 = vmatprep.subr.bf16.mxu0 0
        %1750 = vmatpush1.bf16.msra.mxu0 0
        %1751 = vmatprep.subr.bf16.mxu0 0
        %1752 = vmatpush1.bf16.msra.mxu0 0
        %1753 = vmatprep.subr.bf16.mxu0 0
        %1754 = vmatpush1.bf16.msra.mxu0 0
        %1755 = vmatprep.subr.bf16.mxu0 0
        %1756 = vmatpush1.bf16.msra.mxu0 0
        %1757 = vmatprep.subr.bf16.mxu0 0
        %1758 = vmatpush1.bf16.msra.mxu0 %v1741
        %1759 = vmatprep.subr.bf16.mxu0 0
        %1760 = vmatpush2.bf16.msra.mxu0 0
        %1761 = vmatprep.subr.bf16.mxu0 0
        %1762 = vmatpush2.bf16.msra.mxu0 0
        %1763 = vmatprep.subr.bf16.mxu0 0
        %1764 = vmatpush2.bf16.msra.mxu0 0
        %1765 = vmatprep.subr.bf16.mxu0 0
        %1766 = vmatpush2.bf16.msra.mxu0 0
        %1767 = vmatprep.subr.bf16.mxu0 0
        %1768 = vmatpush2.bf16.msra.mxu0 0
        %1769 = vmatprep.subr.bf16.mxu0 0
        %1770 = vmatpush2.bf16.msra.mxu0 0
        %1771 = vmatprep.subr.bf16.mxu0 0
        %1772 = vmatpush2.bf16.msra.mxu0 0
        %1773 = vmatprep.subr.bf16.mxu0 0
        %1774 = vmatpush2.bf16.msra.mxu0 0
        %1775 = vmatprep.mubr.bf16.mxu0 0
        %1776 = vmatmul.mubr.bf16.gmra.mxu0 %v1737
        %v1777 = vpop.f32.mrf.mxu0
        %v1778 = vadd.f32 0.0, %v1777
        %v1779 = vpop.f32.mrf.mxu0
        %v1780 = vpop.f32.mrf.mxu0
        %v1781 = vpop.f32.mrf.mxu0
        %1782 = vdwg.mxu0
        %v1784 = vsel %vm1683, %v1729, 0
        %v1787 = vsel %vm1739, %v1733, 0
        %1789 = vmatprep.subr.bf16.mxu0 0
        %1790 = vmatpush1.bf16.msra.mxu0 0
        %1791 = vmatprep.subr.bf16.mxu0 0
        %1792 = vmatpush1.bf16.msra.mxu0 0
        %1793 = vmatprep.subr.bf16.mxu0 0
        %1794 = vmatpush1.bf16.msra.mxu0 0
        %1795 = vmatprep.subr.bf16.mxu0 0
        %1796 = vmatpush1.bf16.msra.mxu0 0
        %1797 = vmatprep.subr.bf16.mxu0 0
        %1798 = vmatpush1.bf16.msra.mxu0 0
        %1799 = vmatprep.subr.bf16.mxu0 0
        %1800 = vmatpush1.bf16.msra.mxu0 0
        %1801 = vmatprep.subr.bf16.mxu0 0
        %1802 = vmatpush1.bf16.msra.mxu0 0
        %1803 = vmatprep.subr.bf16.mxu0 0
        %1804 = vmatpush1.bf16.msra.mxu0 %v1787
        %1805 = vmatprep.subr.bf16.mxu0 0
        %1806 = vmatpush2.bf16.msra.mxu0 0
        %1807 = vmatprep.subr.bf16.mxu0 0
        %1808 = vmatpush2.bf16.msra.mxu0 0
        %1809 = vmatprep.subr.bf16.mxu0 0
        %1810 = vmatpush2.bf16.msra.mxu0 0
        %1811 = vmatprep.subr.bf16.mxu0 0
        %1812 = vmatpush2.bf16.msra.mxu0 0
        %1813 = vmatprep.subr.bf16.mxu0 0
        %1814 = vmatpush2.bf16.msra.mxu0 0
        %1815 = vmatprep.subr.bf16.mxu0 0
        %1816 = vmatpush2.bf16.msra.mxu0 0
        %1817 = vmatprep.subr.bf16.mxu0 0
        %1818 = vmatpush2.bf16.msra.mxu0 0
        %1819 = vmatprep.subr.bf16.mxu0 0
        %1820 = vmatpush2.bf16.msra.mxu0 0
        %1821 = vmatprep.mubr.bf16.mxu0 0
        %1822 = vmatmul.mubr.bf16.gmra.mxu0 %v1784
        %v1823 = vpop.f32.mrf.mxu0
        %v1824 = vadd.f32 0.0, %v1823
        %v1825 = vpop.f32.mrf.mxu0
        %v1826 = vpop.f32.mrf.mxu0
        %v1827 = vpop.f32.mrf.mxu0
        %1828 = vdwg.mxu0
        %v1830 = vsel %vm1683, %v1730, 0
        %v1833 = vsel %vm1739, %v1734, 0
        %1835 = vmatprep.subr.bf16.mxu0 0
        %1836 = vmatpush1.bf16.msra.mxu0 0
        %1837 = vmatprep.subr.bf16.mxu0 0
        %1838 = vmatpush1.bf16.msra.mxu0 0
        %1839 = vmatprep.subr.bf16.mxu0 0
        %1840 = vmatpush1.bf16.msra.mxu0 0
        %1841 = vmatprep.subr.bf16.mxu0 0
        %1842 = vmatpush1.bf16.msra.mxu0 0
        %1843 = vmatprep.subr.bf16.mxu0 0
        %1844 = vmatpush1.bf16.msra.mxu0 0
        %1845 = vmatprep.subr.bf16.mxu0 0
        %1846 = vmatpush1.bf16.msra.mxu0 0
        %1847 = vmatprep.subr.bf16.mxu0 0
        %1848 = vmatpush1.bf16.msra.mxu0 0
        %1849 = vmatprep.subr.bf16.mxu0 0
        %1850 = vmatpush1.bf16.msra.mxu0 %v1833
        %1851 = vmatprep.subr.bf16.mxu0 0
        %1852 = vmatpush2.bf16.msra.mxu0 0
        %1853 = vmatprep.subr.bf16.mxu0 0
        %1854 = vmatpush2.bf16.msra.mxu0 0
        %1855 = vmatprep.subr.bf16.mxu0 0
        %1856 = vmatpush2.bf16.msra.mxu0 0
        %1857 = vmatprep.subr.bf16.mxu0 0
        %1858 = vmatpush2.bf16.msra.mxu0 0
        %1859 = vmatprep.subr.bf16.mxu0 0
        %1860 = vmatpush2.bf16.msra.mxu0 0
        %1861 = vmatprep.subr.bf16.mxu0 0
        %1862 = vmatpush2.bf16.msra.mxu0 0
        %1863 = vmatprep.subr.bf16.mxu0 0
        %1864 = vmatpush2.bf16.msra.mxu0 0
        %1865 = vmatprep.subr.bf16.mxu0 0
        %1866 = vmatpush2.bf16.msra.mxu0 0
        %1867 = vmatprep.mubr.bf16.mxu0 0
        %1868 = vmatmul.mubr.bf16.gmra.mxu0 %v1830
        %v1869 = vpop.f32.mrf.mxu0
        %v1870 = vadd.f32 0.0, %v1869
        %v1871 = vpop.f32.mrf.mxu0
        %v1872 = vpop.f32.mrf.mxu0
        %v1873 = vpop.f32.mrf.mxu0
        %1874 = vdwg.mxu0
        %v1876 = vsel %vm1683, %v1731, 0
        %v1879 = vsel %vm1739, %v1735, 0
        %1881 = vmatprep.subr.bf16.mxu0 0
        %1882 = vmatpush1.bf16.msra.mxu0 0
        %1883 = vmatprep.subr.bf16.mxu0 0
        %1884 = vmatpush1.bf16.msra.mxu0 0
        %1885 = vmatprep.subr.bf16.mxu0 0
        %1886 = vmatpush1.bf16.msra.mxu0 0
        %1887 = vmatprep.subr.bf16.mxu0 0
        %1888 = vmatpush1.bf16.msra.mxu0 0
        %1889 = vmatprep.subr.bf16.mxu0 0
        %1890 = vmatpush1.bf16.msra.mxu0 0
        %1891 = vmatprep.subr.bf16.mxu0 0
        %1892 = vmatpush1.bf16.msra.mxu0 0
        %1893 = vmatprep.subr.bf16.mxu0 0
        %1894 = vmatpush1.bf16.msra.mxu0 0
        %1895 = vmatprep.subr.bf16.mxu0 0
        %1896 = vmatpush1.bf16.msra.mxu0 %v1879
        %1897 = vmatprep.subr.bf16.mxu0 0
        %1898 = vmatpush2.bf16.msra.mxu0 0
        %1899 = vmatprep.subr.bf16.mxu0 0
        %1900 = vmatpush2.bf16.msra.mxu0 0
        %1901 = vmatprep.subr.bf16.mxu0 0
        %1902 = vmatpush2.bf16.msra.mxu0 0
        %1903 = vmatprep.subr.bf16.mxu0 0
        %1904 = vmatpush2.bf16.msra.mxu0 0
        %1905 = vmatprep.subr.bf16.mxu0 0
        %1906 = vmatpush2.bf16.msra.mxu0 0
        %1907 = vmatprep.subr.bf16.mxu0 0
        %1908 = vmatpush2.bf16.msra.mxu0 0
        %1909 = vmatprep.subr.bf16.mxu0 0
        %1910 = vmatpush2.bf16.msra.mxu0 0
        %1911 = vmatprep.subr.bf16.mxu0 0
        %1912 = vmatpush2.bf16.msra.mxu0 0
        %1913 = vmatprep.mubr.bf16.mxu0 0
        %1914 = vmatmul.mubr.bf16.gmra.mxu0 %v1876
        %v1915 = vpop.f32.mrf.mxu0
        %v1916 = vadd.f32 0.0, %v1915
        %v1917 = vpop.f32.mrf.mxu0
        %v1918 = vpop.f32.mrf.mxu0
        %v1919 = vpop.f32.mrf.mxu0
        %1920 = vdwg.mxu0
        %v1921 = vpack.c.bf16 %v1778, %v1778
        %v1922 = vpack.c.bf16 %v1824, %v1824
        %v1923 = vpack.c.bf16 %v1870, %v1870
        %v1924 = vpack.c.bf16 %v1916, %v1916
        %v1925 = vld [vmem:[%s9] sm:$0xf]
        %v1926 = vld [vmem:[%s9 + $0x4] sm:$0xf]
        %v1927 = vld [vmem:[%s9 + $0x8] sm:$0xf]
        %v1928 = vld [vmem:[%s9 + $0xc] sm:$0xf]
        %v1929 = vld [vmem:[%s9 + $0x10] sm:$0xf]
        %v1930 = vld [vmem:[%s9 + $0x14] sm:$0xf]
        %v1931 = vld [vmem:[%s9 + $0x18] sm:$0xf]
        %v1932 = vld [vmem:[%s9 + $0x1c] sm:$0xf]
        %v1933 = vld [vmem:[%s9 + $0x20] sm:$0xf]
        %v1934 = vld [vmem:[%s9 + $0x24] sm:$0xf]
        %v1935 = vld [vmem:[%s9 + $0x28] sm:$0xf]
        %v1936 = vld [vmem:[%s9 + $0x2c] sm:$0xf]
        %v1937 = vld [vmem:[%s9 + $0x30] sm:$0xf]
        %v1938 = vld [vmem:[%s9 + $0x34] sm:$0xf]
        %v1939 = vld [vmem:[%s9 + $0x38] sm:$0xf]
        %v1940 = vld [vmem:[%s9 + $0x3c] sm:$0xf]
        %v1945 = vunpack.c.l.b16 %v1925
        %v1946 = vunpack.c.l.b16 %v1926
        %v1947 = vunpack.c.l.b16 %v1927
        %v1948 = vunpack.c.l.b16 %v1928
        %v1949 = vpack.c.b16 %v1946, %v1945
        %v1950 = vpack.c.b16 %v1948, %v1947
        %v1954 = vsel %vm1483, %v1921, 0
        %1956 = vmatprep.subr.bf16.mxu0 0
        %1957 = vmatpush1.bf16.msra.mxu0 0
        %1958 = vmatprep.subr.bf16.mxu0 0
        %1959 = vmatpush1.bf16.msra.mxu0 0
        %1960 = vmatprep.subr.bf16.mxu0 0
        %1961 = vmatpush1.bf16.msra.mxu0 0
        %1962 = vmatprep.subr.bf16.mxu0 0
        %1963 = vmatpush1.bf16.msra.mxu0 0
        %1964 = vmatprep.subr.bf16.mxu0 0
        %1965 = vmatpush1.bf16.msra.mxu0 0
        %1966 = vmatprep.subr.bf16.mxu0 0
        %1967 = vmatpush1.bf16.msra.mxu0 0
        %1968 = vmatprep.subr.bf16.mxu0 0
        %1969 = vmatpush1.bf16.msra.mxu0 %v1950
        %1970 = vmatprep.subr.bf16.mxu0 0
        %1971 = vmatpush1.bf16.msra.mxu0 %v1949
        %1972 = vmatprep.subr.bf16.mxu0 0
        %1973 = vmatpush2.bf16.msra.mxu0 0
        %1974 = vmatprep.subr.bf16.mxu0 0
        %1975 = vmatpush2.bf16.msra.mxu0 0
        %1976 = vmatprep.subr.bf16.mxu0 0
        %1977 = vmatpush2.bf16.msra.mxu0 0
        %1978 = vmatprep.subr.bf16.mxu0 0
        %1979 = vmatpush2.bf16.msra.mxu0 0
        %1980 = vmatprep.subr.bf16.mxu0 0
        %1981 = vmatpush2.bf16.msra.mxu0 0
        %1982 = vmatprep.subr.bf16.mxu0 0
        %1983 = vmatpush2.bf16.msra.mxu0 0
        %1984 = vmatprep.subr.bf16.mxu0 0
        %1985 = vmatpush2.bf16.msra.mxu0 0
        %1986 = vmatprep.subr.bf16.mxu0 0
        %1987 = vmatpush2.bf16.msra.mxu0 0
        %1988 = vmatprep.mubr.bf16.mxu0 0
        %1989 = vmatmul.mubr.bf16.gmra.mxu0 %v1954
        %v1990 = vpop.f32.mrf.mxu0
        %v1991 = vadd.f32 0.0, %v1990
        %v1992 = vpop.f32.mrf.mxu0
        %v1993 = vpop.f32.mrf.mxu0
        %v1994 = vpop.f32.mrf.mxu0
        %1995 = vdwg.mxu0
        %v2000 = vunpack.c.l.b16 %v1929
        %v2001 = vunpack.c.l.b16 %v1930
        %v2002 = vunpack.c.l.b16 %v1931
        %v2003 = vunpack.c.l.b16 %v1932
        %v2004 = vpack.c.b16 %v2001, %v2000
        %v2005 = vpack.c.b16 %v2003, %v2002
        %v2009 = vsel %vm1483, %v1922, 0
        %2011 = vmatprep.subr.bf16.mxu0 0
        %2012 = vmatpush1.bf16.msra.mxu0 0
        %2013 = vmatprep.subr.bf16.mxu0 0
        %2014 = vmatpush1.bf16.msra.mxu0 0
        %2015 = vmatprep.subr.bf16.mxu0 0
        %2016 = vmatpush1.bf16.msra.mxu0 0
        %2017 = vmatprep.subr.bf16.mxu0 0
        %2018 = vmatpush1.bf16.msra.mxu0 0
        %2019 = vmatprep.subr.bf16.mxu0 0
        %2020 = vmatpush1.bf16.msra.mxu0 0
        %2021 = vmatprep.subr.bf16.mxu0 0
        %2022 = vmatpush1.bf16.msra.mxu0 0
        %2023 = vmatprep.subr.bf16.mxu0 0
        %2024 = vmatpush1.bf16.msra.mxu0 %v2005
        %2025 = vmatprep.subr.bf16.mxu0 0
        %2026 = vmatpush1.bf16.msra.mxu0 %v2004
        %2027 = vmatprep.subr.bf16.mxu0 0
        %2028 = vmatpush2.bf16.msra.mxu0 0
        %2029 = vmatprep.subr.bf16.mxu0 0
        %2030 = vmatpush2.bf16.msra.mxu0 0
        %2031 = vmatprep.subr.bf16.mxu0 0
        %2032 = vmatpush2.bf16.msra.mxu0 0
        %2033 = vmatprep.subr.bf16.mxu0 0
        %2034 = vmatpush2.bf16.msra.mxu0 0
        %2035 = vmatprep.subr.bf16.mxu0 0
        %2036 = vmatpush2.bf16.msra.mxu0 0
        %2037 = vmatprep.subr.bf16.mxu0 0
        %2038 = vmatpush2.bf16.msra.mxu0 0
        %2039 = vmatprep.subr.bf16.mxu0 0
        %2040 = vmatpush2.bf16.msra.mxu0 0
        %2041 = vmatprep.subr.bf16.mxu0 0
        %2042 = vmatpush2.bf16.msra.mxu0 0
        %2043 = vmatprep.mubr.bf16.mxu0 0
        %2044 = vmatmul.mubr.bf16.gmra.mxu0 %v2009
        %v2045 = vpop.f32.mrf.mxu0
        %v2046 = vadd.f32 0.0, %v2045
        %v2047 = vpop.f32.mrf.mxu0
        %v2048 = vpop.f32.mrf.mxu0
        %v2049 = vpop.f32.mrf.mxu0
        %2050 = vdwg.mxu0
        %v2055 = vunpack.c.l.b16 %v1933
        %v2056 = vunpack.c.l.b16 %v1934
        %v2057 = vunpack.c.l.b16 %v1935
        %v2058 = vunpack.c.l.b16 %v1936
        %v2059 = vpack.c.b16 %v2056, %v2055
        %v2060 = vpack.c.b16 %v2058, %v2057
        %v2064 = vsel %vm1483, %v1923, 0
        %2066 = vmatprep.subr.bf16.mxu0 0
        %2067 = vmatpush1.bf16.msra.mxu0 0
        %2068 = vmatprep.subr.bf16.mxu0 0
        %2069 = vmatpush1.bf16.msra.mxu0 0
        %2070 = vmatprep.subr.bf16.mxu0 0
        %2071 = vmatpush1.bf16.msra.mxu0 0
        %2072 = vmatprep.subr.bf16.mxu0 0
        %2073 = vmatpush1.bf16.msra.mxu0 0
        %2074 = vmatprep.subr.bf16.mxu0 0
        %2075 = vmatpush1.bf16.msra.mxu0 0
        %2076 = vmatprep.subr.bf16.mxu0 0
        %2077 = vmatpush1.bf16.msra.mxu0 0
        %2078 = vmatprep.subr.bf16.mxu0 0
        %2079 = vmatpush1.bf16.msra.mxu0 %v2060
        %2080 = vmatprep.subr.bf16.mxu0 0
        %2081 = vmatpush1.bf16.msra.mxu0 %v2059
        %2082 = vmatprep.subr.bf16.mxu0 0
        %2083 = vmatpush2.bf16.msra.mxu0 0
        %2084 = vmatprep.subr.bf16.mxu0 0
        %2085 = vmatpush2.bf16.msra.mxu0 0
        %2086 = vmatprep.subr.bf16.mxu0 0
        %2087 = vmatpush2.bf16.msra.mxu0 0
        %2088 = vmatprep.subr.bf16.mxu0 0
        %2089 = vmatpush2.bf16.msra.mxu0 0
        %2090 = vmatprep.subr.bf16.mxu0 0
        %2091 = vmatpush2.bf16.msra.mxu0 0
        %2092 = vmatprep.subr.bf16.mxu0 0
        %2093 = vmatpush2.bf16.msra.mxu0 0
        %2094 = vmatprep.subr.bf16.mxu0 0
        %2095 = vmatpush2.bf16.msra.mxu0 0
        %2096 = vmatprep.subr.bf16.mxu0 0
        %2097 = vmatpush2.bf16.msra.mxu0 0
        %2098 = vmatprep.mubr.bf16.mxu0 0
        %2099 = vmatmul.mubr.bf16.gmra.mxu0 %v2064
        %v2100 = vpop.f32.mrf.mxu0
        %v2101 = vadd.f32 0.0, %v2100
        %v2102 = vpop.f32.mrf.mxu0
        %v2103 = vpop.f32.mrf.mxu0
        %v2104 = vpop.f32.mrf.mxu0
        %2105 = vdwg.mxu0
        %v2110 = vunpack.c.l.b16 %v1937
        %v2111 = vunpack.c.l.b16 %v1938
        %v2112 = vunpack.c.l.b16 %v1939
        %v2113 = vunpack.c.l.b16 %v1940
        %v2114 = vpack.c.b16 %v2111, %v2110
        %v2115 = vpack.c.b16 %v2113, %v2112
        %v2119 = vsel %vm1483, %v1924, 0
        %2121 = vmatprep.subr.bf16.mxu0 0
        %2122 = vmatpush1.bf16.msra.mxu0 0
        %2123 = vmatprep.subr.bf16.mxu0 0
        %2124 = vmatpush1.bf16.msra.mxu0 0
        %2125 = vmatprep.subr.bf16.mxu0 0
        %2126 = vmatpush1.bf16.msra.mxu0 0
        %2127 = vmatprep.subr.bf16.mxu0 0
        %2128 = vmatpush1.bf16.msra.mxu0 0
        %2129 = vmatprep.subr.bf16.mxu0 0
        %2130 = vmatpush1.bf16.msra.mxu0 0
        %2131 = vmatprep.subr.bf16.mxu0 0
        %2132 = vmatpush1.bf16.msra.mxu0 0
        %2133 = vmatprep.subr.bf16.mxu0 0
        %2134 = vmatpush1.bf16.msra.mxu0 %v2115
        %2135 = vmatprep.subr.bf16.mxu0 0
        %2136 = vmatpush1.bf16.msra.mxu0 %v2114
        %2137 = vmatprep.subr.bf16.mxu0 0
        %2138 = vmatpush2.bf16.msra.mxu0 0
        %2139 = vmatprep.subr.bf16.mxu0 0
        %2140 = vmatpush2.bf16.msra.mxu0 0
        %2141 = vmatprep.subr.bf16.mxu0 0
        %2142 = vmatpush2.bf16.msra.mxu0 0
        %2143 = vmatprep.subr.bf16.mxu0 0
        %2144 = vmatpush2.bf16.msra.mxu0 0
        %2145 = vmatprep.subr.bf16.mxu0 0
        %2146 = vmatpush2.bf16.msra.mxu0 0
        %2147 = vmatprep.subr.bf16.mxu0 0
        %2148 = vmatpush2.bf16.msra.mxu0 0
        %2149 = vmatprep.subr.bf16.mxu0 0
        %2150 = vmatpush2.bf16.msra.mxu0 0
        %2151 = vmatprep.subr.bf16.mxu0 0
        %2152 = vmatpush2.bf16.msra.mxu0 0
        %2153 = vmatprep.mubr.bf16.mxu0 0
        %2154 = vmatmul.mubr.bf16.gmra.mxu0 %v2119
        %v2155 = vpop.f32.mrf.mxu0
        %v2156 = vadd.f32 0.0, %v2155
        %v2157 = vpop.f32.mrf.mxu0
        %v2158 = vpop.f32.mrf.mxu0
        %v2159 = vpop.f32.mrf.mxu0
        %2160 = vdwg.mxu0
        %v2161 = vadd.f32 %v1991, %v2046
        %v2162 = vadd.f32 %v2161, %v2101
        %v2163 = vadd.f32 %v2162, %v2156
        %v2164 = vld [vmem:[%s10] sm:$0x1]
        %v2166 = vlaneseq
        %v2167 = vshrl.u32 %v2166, 7
        %v2168 = vsub.s32 0, %v2167
        %v2169 = vrot.slane %v2164, %v2168
        %v2171 = vadd.f32 %v2163, %v2169
        %v2172 = vadd.f32 %v667, %v2171
        %v2173 = vld [vmem:[%s13] sm:$0x1]
        %v2174 = vld [vmem:[%s14] sm:$0x1]
        %2175 = vadd.xlane.f32.xlu0 %v2172
        %v2176 = vpop.xlane.xlu0 %2175
        %v2177 = vmul.f32 %v2176, %v672
        %v2178 = vsub.f32 %v2172, %v2177
        %v2179 = vmul.f32 %v2178, %v2178
        %2180 = vadd.xlane.f32.xlu0 %v2179
        %v2181 = vpop.xlane.xlu0 %2180
        %v2182 = vmul.f32 %v2181, 0.007874016
        %v2183 = vrsqrt.pop %v2182
        %v2184 = vmul.f32 %v2182, %v2183
        %vm2185 = vcmp.eq.f32.partialorder %v2182, inf
        %v2186 = vsel %vm2185, %v2182, %v2184
        %vm2187 = vcmp.eq.f32.partialorder %v2182, 0.0
        %v2188 = vand.u32 %v2182, 2147483648
        %v2189 = vsel %vm2187, %v2188, %v2186
        %v2190 = vadd.f32 %v2189, 1e-06
        %v2191 = vrcp.pop %v2190
        %v2193 = vlaneseq
        %v2194 = vshrl.u32 %v2193, 7
        %v2195 = vsub.s32 0, %v2194
        %v2196 = vrot.slane %v2173, %v2195
        %v2198 = vmul.f32 %v2196, %v2178
        %v2199 = vmul.f32 %v2198, %v2191
        %v2201 = vlaneseq
        %v2202 = vshrl.u32 %v2201, 7
        %v2203 = vsub.s32 0, %v2202
        %v2204 = vrot.slane %v2174, %v2203
        %v2206 = vadd.f32 %v2199, %v2204
        %v2207 = vpack.c.bf16 %v2206, %v2206
        %v2208 = vld [vmem:[%s15] sm:$0xff]
        %v2209 = vld [vmem:[%s15 + $0x8] sm:$0xff]
        %v2210 = vld [vmem:[%s15 + $0x10] sm:$0xff]
        %v2211 = vld [vmem:[%s15 + $0x18] sm:$0xff]
        %v2212 = vld [vmem:[%s15 + $0x20] sm:$0xff]
        %v2213 = vld [vmem:[%s15 + $0x28] sm:$0xff]
        %v2214 = vld [vmem:[%s15 + $0x30] sm:$0xff]
        %v2215 = vld [vmem:[%s15 + $0x38] sm:$0xff]
        %v2216 = vld [vmem:[%s15 + $0x40] sm:$0xff]
        %v2217 = vld [vmem:[%s15 + $0x48] sm:$0xff]
        %v2218 = vld [vmem:[%s15 + $0x50] sm:$0xff]
        %v2219 = vld [vmem:[%s15 + $0x58] sm:$0xff]
        %v2220 = vld [vmem:[%s15 + $0x60] sm:$0xff]
        %v2221 = vld [vmem:[%s15 + $0x68] sm:$0xff]
        %v2222 = vld [vmem:[%s15 + $0x70] sm:$0xff]
        %v2223 = vld [vmem:[%s15 + $0x78] sm:$0xff]
        %v2224 = vld [vmem:[%s16] sm:$0x3]
        %v2226 = vlaneseq
        %v2227 = vshrl.u32 %v2226, 7
        %v2228 = vsub.s32 0, %v2227
        %v2229 = vrot.slane %v2224, %v2228
        %v2230 = vlaneseq
        %v2231 = vshrl.u32 %v2230, 7
        %v2232 = vsub.s32 1, %v2231
        %v2233 = vrot.slane %v2224, %v2232
        %v2252 = vunpack.c.l.b16 %v2208
        %v2253 = vunpack.c.h.b16 %v2208
        %v2254 = vunpack.c.l.b16 %v2209
        %v2255 = vunpack.c.h.b16 %v2209
        %v2256 = vunpack.c.l.b16 %v2210
        %v2257 = vunpack.c.h.b16 %v2210
        %v2258 = vunpack.c.l.b16 %v2211
        %v2259 = vunpack.c.h.b16 %v2211
        %v2260 = vunpack.c.l.b16 %v2212
        %v2261 = vunpack.c.h.b16 %v2212
        %v2262 = vunpack.c.l.b16 %v2213
        %v2263 = vunpack.c.h.b16 %v2213
        %v2264 = vunpack.c.l.b16 %v2214
        %v2265 = vunpack.c.h.b16 %v2214
        %v2266 = vunpack.c.l.b16 %v2215
        %v2267 = vunpack.c.h.b16 %v2215
        %v2268 = vunpack.c.l.b16 %v2216
        %v2269 = vunpack.c.h.b16 %v2216
        %v2270 = vunpack.c.l.b16 %v2217
        %v2271 = vunpack.c.h.b16 %v2217
        %v2272 = vunpack.c.l.b16 %v2218
        %v2273 = vunpack.c.h.b16 %v2218
        %v2274 = vunpack.c.l.b16 %v2219
        %v2275 = vunpack.c.h.b16 %v2219
        %v2276 = vunpack.c.l.b16 %v2220
        %v2277 = vunpack.c.h.b16 %v2220
        %v2278 = vunpack.c.l.b16 %v2221
        %v2279 = vunpack.c.h.b16 %v2221
        %v2280 = vunpack.c.l.b16 %v2222
        %v2281 = vunpack.c.h.b16 %v2222
        %v2282 = vunpack.c.l.b16 %v2223
        %v2283 = vunpack.c.h.b16 %v2223
        %v2284 = vpack.c.b16 %v2254, %v2252
        %v2285 = vpack.c.b16 %v2255, %v2253
        %v2286 = vpack.c.b16 %v2258, %v2256
        %v2287 = vpack.c.b16 %v2259, %v2257
        %v2288 = vpack.c.b16 %v2262, %v2260
        %v2289 = vpack.c.b16 %v2263, %v2261
        %v2290 = vpack.c.b16 %v2266, %v2264
        %v2291 = vpack.c.b16 %v2267, %v2265
        %v2292 = vpack.c.b16 %v2270, %v2268
        %v2293 = vpack.c.b16 %v2271, %v2269
        %v2294 = vpack.c.b16 %v2274, %v2272
        %v2295 = vpack.c.b16 %v2275, %v2273
        %v2296 = vpack.c.b16 %v2278, %v2276
        %v2297 = vpack.c.b16 %v2279, %v2277
        %v2298 = vpack.c.b16 %v2282, %v2280
        %v2299 = vpack.c.b16 %v2283, %v2281
        %2316 = vmatprep.subr.bf16.mxu0 %v2299
        %2317 = vmatpush1.bf16.msra.mxu0 %v2298
        %2318 = vmatprep.subr.bf16.mxu0 %v2297
        %2319 = vmatpush1.bf16.msra.mxu0 %v2296
        %2320 = vmatprep.subr.bf16.mxu0 %v2295
        %2321 = vmatpush1.bf16.msra.mxu0 %v2294
        %2322 = vmatprep.subr.bf16.mxu0 %v2293
        %2323 = vmatpush1.bf16.msra.mxu0 %v2292
        %2324 = vmatprep.subr.bf16.mxu0 %v2291
        %2325 = vmatpush1.bf16.msra.mxu0 %v2290
        %2326 = vmatprep.subr.bf16.mxu0 %v2289
        %2327 = vmatpush1.bf16.msra.mxu0 %v2288
        %2328 = vmatprep.subr.bf16.mxu0 %v2287
        %2329 = vmatpush1.bf16.msra.mxu0 %v2286
        %2330 = vmatprep.subr.bf16.mxu0 %v2285
        %2331 = vmatpush1.bf16.msra.mxu0 %v2284
        %2332 = vmatprep.subr.bf16.mxu0 0
        %2333 = vmatpush2.bf16.msra.mxu0 0
        %2334 = vmatprep.subr.bf16.mxu0 0
        %2335 = vmatpush2.bf16.msra.mxu0 0
        %2336 = vmatprep.subr.bf16.mxu0 0
        %2337 = vmatpush2.bf16.msra.mxu0 0
        %2338 = vmatprep.subr.bf16.mxu0 0
        %2339 = vmatpush2.bf16.msra.mxu0 0
        %2340 = vmatprep.subr.bf16.mxu0 0
        %2341 = vmatpush2.bf16.msra.mxu0 0
        %2342 = vmatprep.subr.bf16.mxu0 0
        %2343 = vmatpush2.bf16.msra.mxu0 0
        %2344 = vmatprep.subr.bf16.mxu0 0
        %2345 = vmatpush2.bf16.msra.mxu0 0
        %2346 = vmatprep.subr.bf16.mxu0 0
        %2347 = vmatpush2.bf16.msra.mxu0 0
        %2348 = vmatprep.mubr.bf16.mxu0 0
        %2349 = vmatmul.mubr.bf16.gmra.mxu0 %v2207
        %v2350 = vpop.f32.mrf.mxu0
        %v2351 = vadd.f32 %v2229, %v2350
        %v2352 = vpop.f32.mrf.mxu0
        %v2353 = vadd.f32 %v2233, %v2352
        %v2354 = vpop.f32.mrf.mxu0
        %v2355 = vpop.f32.mrf.mxu0
        %2356 = vdwg.mxu0
        %v2357 = vmax.f32 %v2351, 0.0
        %v2358 = vmax.f32 %v2353, 0.0
        %v2359 = vpack.c.bf16 %v2357, %v2357
        %v2360 = vpack.c.bf16 %v2358, %v2358
        %v2361 = vld [vmem:[%s17] sm:$0xf]
        %v2362 = vld [vmem:[%s17 + $0x4] sm:$0xf]
        %v2363 = vld [vmem:[%s17 + $0x8] sm:$0xf]
        %v2364 = vld [vmem:[%s17 + $0xc] sm:$0xf]
        %v2365 = vld [vmem:[%s17 + $0x10] sm:$0xf]
        %v2366 = vld [vmem:[%s17 + $0x14] sm:$0xf]
        %v2367 = vld [vmem:[%s17 + $0x18] sm:$0xf]
        %v2368 = vld [vmem:[%s17 + $0x1c] sm:$0xf]
        %v2369 = vld [vmem:[%s17 + $0x20] sm:$0xf]
        %v2370 = vld [vmem:[%s17 + $0x24] sm:$0xf]
        %v2371 = vld [vmem:[%s17 + $0x28] sm:$0xf]
        %v2372 = vld [vmem:[%s17 + $0x2c] sm:$0xf]
        %v2373 = vld [vmem:[%s17 + $0x30] sm:$0xf]
        %v2374 = vld [vmem:[%s17 + $0x34] sm:$0xf]
        %v2375 = vld [vmem:[%s17 + $0x38] sm:$0xf]
        %v2376 = vld [vmem:[%s17 + $0x3c] sm:$0xf]
        %v2377 = vld [vmem:[%s17 + $0x40] sm:$0xf]
        %v2378 = vld [vmem:[%s17 + $0x44] sm:$0xf]
        %v2379 = vld [vmem:[%s17 + $0x48] sm:$0xf]
        %v2380 = vld [vmem:[%s17 + $0x4c] sm:$0xf]
        %v2381 = vld [vmem:[%s17 + $0x50] sm:$0xf]
        %v2382 = vld [vmem:[%s17 + $0x54] sm:$0xf]
        %v2383 = vld [vmem:[%s17 + $0x58] sm:$0xf]
        %v2384 = vld [vmem:[%s17 + $0x5c] sm:$0xf]
        %v2385 = vld [vmem:[%s17 + $0x60] sm:$0xf]
        %v2386 = vld [vmem:[%s17 + $0x64] sm:$0xf]
        %v2387 = vld [vmem:[%s17 + $0x68] sm:$0xf]
        %v2388 = vld [vmem:[%s17 + $0x6c] sm:$0xf]
        %v2389 = vld [vmem:[%s17 + $0x70] sm:$0xf]
        %v2390 = vld [vmem:[%s17 + $0x74] sm:$0xf]
        %v2391 = vld [vmem:[%s17 + $0x78] sm:$0xf]
        %v2392 = vld [vmem:[%s17 + $0x7c] sm:$0xf]
        %v2393 = vld [vmem:[%s18] sm:$0x1]
        %v2395 = vlaneseq
        %v2396 = vshrl.u32 %v2395, 7
        %v2397 = vsub.s32 0, %v2396
        %v2398 = vrot.slane %v2393, %v2397
        %v2432 = vunpack.c.l.b16 %v2361
        %v2433 = vunpack.c.l.b16 %v2362
        %v2434 = vunpack.c.l.b16 %v2363
        %v2435 = vunpack.c.l.b16 %v2364
        %v2436 = vunpack.c.l.b16 %v2365
        %v2437 = vunpack.c.l.b16 %v2366
        %v2438 = vunpack.c.l.b16 %v2367
        %v2439 = vunpack.c.l.b16 %v2368
        %v2440 = vunpack.c.l.b16 %v2369
        %v2441 = vunpack.c.l.b16 %v2370
        %v2442 = vunpack.c.l.b16 %v2371
        %v2443 = vunpack.c.l.b16 %v2372
        %v2444 = vunpack.c.l.b16 %v2373
        %v2445 = vunpack.c.l.b16 %v2374
        %v2446 = vunpack.c.l.b16 %v2375
        %v2447 = vunpack.c.l.b16 %v2376
        %v2448 = vunpack.c.l.b16 %v2377
        %v2449 = vunpack.c.l.b16 %v2378
        %v2450 = vunpack.c.l.b16 %v2379
        %v2451 = vunpack.c.l.b16 %v2380
        %v2452 = vunpack.c.l.b16 %v2381
        %v2453 = vunpack.c.l.b16 %v2382
        %v2454 = vunpack.c.l.b16 %v2383
        %v2455 = vunpack.c.l.b16 %v2384
        %v2456 = vunpack.c.l.b16 %v2385
        %v2457 = vunpack.c.l.b16 %v2386
        %v2458 = vunpack.c.l.b16 %v2387
        %v2459 = vunpack.c.l.b16 %v2388
        %v2460 = vunpack.c.l.b16 %v2389
        %v2461 = vunpack.c.l.b16 %v2390
        %v2462 = vunpack.c.l.b16 %v2391
        %v2463 = vunpack.c.l.b16 %v2392
        %v2464 = vpack.c.b16 %v2433, %v2432
        %v2465 = vpack.c.b16 %v2435, %v2434
        %v2466 = vpack.c.b16 %v2437, %v2436
        %v2467 = vpack.c.b16 %v2439, %v2438
        %v2468 = vpack.c.b16 %v2441, %v2440
        %v2469 = vpack.c.b16 %v2443, %v2442
        %v2470 = vpack.c.b16 %v2445, %v2444
        %v2471 = vpack.c.b16 %v2447, %v2446
        %v2472 = vpack.c.b16 %v2449, %v2448
        %v2473 = vpack.c.b16 %v2451, %v2450
        %v2474 = vpack.c.b16 %v2453, %v2452
        %v2475 = vpack.c.b16 %v2455, %v2454
        %v2476 = vpack.c.b16 %v2457, %v2456
        %v2477 = vpack.c.b16 %v2459, %v2458
        %v2478 = vpack.c.b16 %v2461, %v2460
        %v2479 = vpack.c.b16 %v2463, %v2462
        %2496 = vmatprep.subr.bf16.mxu0 0
        %2497 = vmatpush1.bf16.msra.mxu0 %v2471
        %2498 = vmatprep.subr.bf16.mxu0 0
        %2499 = vmatpush1.bf16.msra.mxu0 %v2470
        %2500 = vmatprep.subr.bf16.mxu0 0
        %2501 = vmatpush1.bf16.msra.mxu0 %v2469
        %2502 = vmatprep.subr.bf16.mxu0 0
        %2503 = vmatpush1.bf16.msra.mxu0 %v2468
        %2504 = vmatprep.subr.bf16.mxu0 0
        %2505 = vmatpush1.bf16.msra.mxu0 %v2467
        %2506 = vmatprep.subr.bf16.mxu0 0
        %2507 = vmatpush1.bf16.msra.mxu0 %v2466
        %2508 = vmatprep.subr.bf16.mxu0 0
        %2509 = vmatpush1.bf16.msra.mxu0 %v2465
        %2510 = vmatprep.subr.bf16.mxu0 0
        %2511 = vmatpush1.bf16.msra.mxu0 %v2464
        %2512 = vmatprep.subr.bf16.mxu0 0
        %2513 = vmatpush2.bf16.msra.mxu0 %v2479
        %2514 = vmatprep.subr.bf16.mxu0 0
        %2515 = vmatpush2.bf16.msra.mxu0 %v2478
        %2516 = vmatprep.subr.bf16.mxu0 0
        %2517 = vmatpush2.bf16.msra.mxu0 %v2477
        %2518 = vmatprep.subr.bf16.mxu0 0
        %2519 = vmatpush2.bf16.msra.mxu0 %v2476
        %2520 = vmatprep.subr.bf16.mxu0 0
        %2521 = vmatpush2.bf16.msra.mxu0 %v2475
        %2522 = vmatprep.subr.bf16.mxu0 0
        %2523 = vmatpush2.bf16.msra.mxu0 %v2474
        %2524 = vmatprep.subr.bf16.mxu0 0
        %2525 = vmatpush2.bf16.msra.mxu0 %v2473
        %2526 = vmatprep.subr.bf16.mxu0 0
        %2527 = vmatpush2.bf16.msra.mxu0 %v2472
        %2528 = vmatprep.mubr.bf16.mxu0 %v2360
        %2529 = vmatmul.mubr.bf16.gmra.mxu0 %v2359
        %v2530 = vpop.f32.mrf.mxu0
        %v2531 = vadd.f32 %v2398, %v2530
        %v2532 = vpop.f32.mrf.mxu0
        %v2533 = vpop.f32.mrf.mxu0
        %v2534 = vpop.f32.mrf.mxu0
        %2535 = vdwg.mxu0
        %v2536 = vadd.f32 %v2172, %v2531
        %v2537 = vld [vmem:[%s19] sm:$0x1]
        %v2538 = vld [vmem:[%s20] sm:$0x1]
        %2539 = vadd.xlane.f32.xlu0 %v2536
        %v2540 = vpop.xlane.xlu0 %2539
        %v2541 = vmul.f32 %v2540, %v672
        %v2542 = vsub.f32 %v2536, %v2541
        %v2543 = vmul.f32 %v2542, %v2542
        %2544 = vadd.xlane.f32.xlu0 %v2543
        %v2545 = vpop.xlane.xlu0 %2544
        %v2546 = vmul.f32 %v2545, 0.007874016
        %v2547 = vrsqrt.pop %v2546
        %v2548 = vmul.f32 %v2546, %v2547
        %vm2549 = vcmp.eq.f32.partialorder %v2546, inf
        %v2550 = vsel %vm2549, %v2546, %v2548
        %vm2551 = vcmp.eq.f32.partialorder %v2546, 0.0
        %v2552 = vand.u32 %v2546, 2147483648
        %v2553 = vsel %vm2551, %v2552, %v2550
        %v2554 = vadd.f32 %v2553, 1e-06
        %v2555 = vrcp.pop %v2554
        %v2557 = vlaneseq
        %v2558 = vshrl.u32 %v2557, 7
        %v2559 = vsub.s32 0, %v2558
        %v2560 = vrot.slane %v2537, %v2559
        %v2562 = vmul.f32 %v2560, %v2542
        %v2563 = vmul.f32 %v2562, %v2555
        %v2565 = vlaneseq
        %v2566 = vshrl.u32 %v2565, 7
        %v2567 = vsub.s32 0, %v2566
        %v2568 = vrot.slane %v2538, %v2567
        %v2570 = vadd.f32 %v2563, %v2568
        %2571 = vst [vmem:[%s658] sm:$0xff] %v2570
        %s2572 = sand.u32 %s494, 1
        %s2573 = scalar_lea.sflag [#allocation3], %s2572
        %s2574 = sand.u32 %s494, 1
        %s2575 = smul.addr %s2574, 8
        %s2576 = scalar_lea.vmem [#allocation2], %s2575
        // Predicated region
        $region105: #{encoder_forward.3} parent=103 // pred_check
          %p2577 = pneg %p504
        $region106: #{encoder_forward.3} parent=103 // pred_check_branch
          %2579 = sbr.rel (%p2577) target = $region108
        $region107: #{encoder_forward.3} parent=103 // pred_region
          %s2581 = ssub.s32 128, 128
          %2582 = vsyncadd %s2573, %s2581
          %s2583 = smul.addr %s35, 128
          %s2584 = scalar_lea.hbm %s21, %s2583
          %s2586 = sshll.u32 %s2576, 4
          %s2587 = int_to_ptr.vmem [resolvable:$true] %s2586
          %2589 = dma.vmem_to_hbm [thread:$0]  %s2587, 128, %s2584, %s2573
        $region108: #{encoder_forward.3} parent=103 // pred_fallthru
          _
      $region104: #{encoder_forward.3} parent=5 // pred_fallthru
        _
      %p2590 = scmp.le.s32.totalorder 2, %s30
      // Predicated region
      $region109: #{encoder_forward.3} parent=5 // pred_check
        %p2591 = pneg %p2590
      $region110: #{encoder_forward.3} parent=5 // pred_check_branch
        %2593 = sbr.rel (%p2591) target = $region112
      $region111: #{encoder_forward.3} parent=5 // pred_region
        %s2594 = ssub.s32 %s30, 2
        // Predicated region
        $region113: #{encoder_forward.3} parent=111 // pred_check
          %p2595 = pneg %p510
        $region114: #{encoder_forward.3} parent=111 // pred_check_branch
          %2597 = sbr.rel (%p2595) target = $region116
        $region115: #{encoder_forward.3} parent=111 // pred_region
          %s2598 = sand.u32 %s495, 1
          %s2599 = scalar_lea.sflag [#allocation3], %s2598
          %s2600 = sand.u32 %s495, 1
          %s2601 = smul.addr %s2600, 8
          %s2602 = scalar_lea.vmem [#allocation2], %s2601
          %2603 = dma.done %s2599, 128
        $region116: #{encoder_forward.3} parent=111 // pred_fallthru
          _
      $region112: #{encoder_forward.3} parent=5 // pred_fallthru
        _
    $region6: #{encoder_forward.3} parent=1 // loop_footer
      %s34 = sadd.s32 1, %s30
    $region7: #{encoder_forward.3} parent=1 // loop_footer_branch
      %29 = sbr.rel target = $region3
    $region8: #{encoder_forward.3} parent=1 // loop_exit
      _
    %2604 = vsyncpa [#allocation3], 1
    %s2605 = scalar_lea.sflag [#allocation3], 1
    %2606 = vsyncpa %s2605, 1

// kernel: encoder_forward.2
$region0: #{encoder_forward.2}
  #allocation0 [shape = 'u32[]', space=smem, size = 0x4, offset = 0x4, fixed_abs, tag = 'smem constant byte address 0x4 - core index']
  #allocation1 [shape = 'u32[144,128]{1,0:T(1,128)}', space=vmem, size = 0x12000, scoped, tag = 'internal scratch']
  %s0 = inlined_call_operand.vmem [shape: f32[2,8,128], index: 0, kind: input, shape index: {}]
  %s1 = inlined_call_operand.vmem [shape: f32[2,1,8], index: 1, kind: input, shape index: {}]
  %s2 = inlined_call_operand.vmem [shape: f32[8,128], index: 2, kind: input, shape index: {}]
  %s3 = inlined_call_operand.hbm [shape: bf16[128,128], index: 3, kind: input, shape index: {}]
  %s4 = inlined_call_operand.vmem [shape: f32[1,128], index: 4, kind: input, shape index: {}]
  %s5 = inlined_call_operand.hbm [shape: bf16[128,128], index: 5, kind: input, shape index: {}]
  %s6 = inlined_call_operand.vmem [shape: f32[1,128], index: 6, kind: input, shape index: {}]
  %s7 = inlined_call_operand.hbm [shape: bf16[128,128], index: 7, kind: input, shape index: {}]
  %s8 = inlined_call_operand.vmem [shape: f32[1,128], index: 8, kind: input, shape index: {}]
  %s9 = inlined_call_operand.hbm [shape: bf16[4,32,128], index: 9, kind: input, shape index: {}]
  %s10 = inlined_call_operand.vmem [shape: f32[1,128], index: 10, kind: input, shape index: {}]
  %s11 = inlined_call_operand.hbm [shape: f32[1,128], index: 11, kind: input, shape index: {}]
  %s12 = inlined_call_operand.hbm [shape: f32[1,128], index: 12, kind: input, shape index: {}]
  %s13 = inlined_call_operand.hbm [shape: f32[1,128], index: 13, kind: input, shape index: {}]
  %s14 = inlined_call_operand.hbm [shape: f32[1,128], index: 14, kind: input, shape index: {}]
  %s15 = inlined_call_operand.vmem [shape: bf16[128,256], index: 15, kind: input, shape index: {}]
  %s16 = inlined_call_operand.hbm [shape: f32[1,256], index: 16, kind: input, shape index: {}]
  %s17 = inlined_call_operand.vmem [shape: bf16[256,128], index: 17, kind: input, shape index: {}]
  %s18 = inlined_call_operand.hbm [shape: f32[1,128], index: 18, kind: input, shape index: {}]
  %s19 = inlined_call_operand.hbm [shape: f32[1,128], index: 19, kind: input, shape index: {}]
  %s20 = inlined_call_operand.hbm [shape: f32[1,128], index: 20, kind: input, shape index: {}]
  %s21 = inlined_call_operand.vmem [shape: f32[2,8,128], index: 21, kind: output, shape index: {}]
  %s22 = sld [smem:[#allocation0]]
  $region165: #{encoder_forward.2} parent=0
    _
  %s24 = ssub.s32 1, %s22
  %s25 = scalar_select 0, %s24, %s22
  $region1: #{encoder_forward.2} parent=0
    #allocation2 [shape = 'u8[32768]{0}', space=vmem, size = 0x8000, scoped, tag = 'input window, operand 3, single buffered']
    #allocation3 [shape = 's32[2]{0}', space=sflag, size = 0x8, scoped, tag = 'scoped memory for encoder_forward.2']
    #allocation4 [shape = 'u8[32768]{0}', space=vmem, size = 0x8000, scoped, tag = 'input window, operand 5, single buffered']
    #allocation5 [shape = 's32[1]{0}', space=sflag, size = 0x4, scoped, tag = 'scoped memory for encoder_forward.2']
    #allocation6 [shape = 'u8[32768]{0}', space=vmem, size = 0x8000, scoped, tag = 'input window, operand 7, single buffered']
    #allocation7 [shape = 'u8[32768]{0}', space=vmem, size = 0x8000, scoped, tag = 'input window, operand 9, single buffered']
    #allocation8 [shape = 's32[1]{0}', space=sflag, size = 0x4, scoped, tag = 'scoped memory for encoder_forward.2']
    #allocation9 [shape = 'u8[512]{0}', space=vmem, size = 0x400, scoped, tag = 'input window, operand 11, single buffered']
    #allocation10 [shape = 'u8[512]{0}', space=vmem, size = 0x400, scoped, tag = 'input window, operand 12, single buffered']
    #allocation11 [shape = 's32[1]{0}', space=sflag, size = 0x4, scoped, tag = 'scoped memory for encoder_forward.2']
    #allocation12 [shape = 'u8[512]{0}', space=vmem, size = 0x400, scoped, tag = 'input window, operand 13, single buffered']
    #allocation13 [shape = 'u8[512]{0}', space=vmem, size = 0x400, scoped, tag = 'input window, operand 14, single buffered']
    #allocation14 [shape = 's32[1]{0}', space=sflag, size = 0x4, scoped, tag = 'scoped memory for encoder_forward.2']
    #allocation15 [shape = 'u8[1024]{0}', space=vmem, size = 0x400, scoped, tag = 'input window, operand 16, single buffered']
    #allocation16 [shape = 'u8[512]{0}', space=vmem, size = 0x400, scoped, tag = 'input window, operand 18, single buffered']
    #allocation17 [shape = 's32[1]{0}', space=sflag, size = 0x4, scoped, tag = 'scoped memory for encoder_forward.2']
    #allocation18 [shape = 'u8[512]{0}', space=vmem, size = 0x400, scoped, tag = 'input window, operand 19, single buffered']
    #allocation19 [shape = 'u8[512]{0}', space=vmem, size = 0x400, scoped, tag = 'input window, operand 20, single buffered']
    #allocation20 [shape = 's32[1]{0}', space=sflag, size = 0x4, scoped, tag = 'scoped memory for encoder_forward.2']
    %26 = vsyncpa [#allocation3], 0
    %27 = vsyncpa [#allocation5], 0
    %28 = vsyncpa [#allocation8], 0
    %29 = vsyncpa [#allocation11], 0
    %30 = vsyncpa [#allocation14], 0
    %31 = vsyncpa [#allocation17], 0
    %32 = vsyncpa [#allocation20], 0
    loop: start=0, step=1, limit=4
    $region2: #{encoder_forward.2} parent=1 // loop_pre_header
      _
    $region3: #{encoder_forward.2} parent=1 // loop_header
      %s34 = sphi 0, %s38
      %p35 = scmp.ge.s32.totalorder %s34, 4
      %s44 = sphi 0, %s46
      %s47 = sphi 0, %s44
      %s48 = sphi 0, %s47
      %s64 = sphi 0, %s48
      %s70 = sphi 0, %s72
      %s73 = sphi 0, %s70
      %s74 = sphi 0, %s73
      %s90 = sphi 0, %s74
      %s94 = sphi 0, %s94
      %s96 = sphi 0, %s94
      %s97 = sphi 0, %s96
      %s111 = sphi 0, %s97
      %s115 = sphi 0, %s115
      %s117 = sphi 0, %s115
      %s118 = sphi 0, %s117
      %s132 = sphi 0, %s118
      %s136 = sphi 0, %s136
      %s138 = sphi 0, %s136
      %s139 = sphi 0, %s138
      %s153 = sphi 0, %s139
      %s157 = sphi 0, %s157
      %s159 = sphi 0, %s157
      %s160 = sphi 0, %s159
      %s174 = sphi 0, %s160
      %s178 = sphi 0, %s178
      %s180 = sphi 0, %s178
      %s181 = sphi 0, %s180
      %s195 = sphi 0, %s181
      %s199 = sphi 0, %s199
      %s201 = sphi 0, %s199
      %s202 = sphi 0, %s201
      %s216 = sphi 0, %s202
      %s220 = sphi 0, %s220
      %s222 = sphi 0, %s220
      %s223 = sphi 0, %s222
      %s237 = sphi 0, %s223
      %s241 = sphi 0, %s241
      %s243 = sphi 0, %s241
      %s244 = sphi 0, %s243
      %s258 = sphi 0, %s244
      %s262 = sphi 0, %s262
      %s264 = sphi 0, %s262
      %s265 = sphi 0, %s264
      %s279 = sphi 0, %s265
      %s283 = sphi 0, %s283
      %s285 = sphi 0, %s283
      %s286 = sphi 0, %s285
      %s300 = sphi 0, %s286
      %s304 = sphi 0, %s304
      %s306 = sphi 0, %s304
      %s307 = sphi 0, %s306
      %s321 = sphi 0, %s307
      %s325 = sphi 0, %s325
      %s327 = sphi 0, %s325
      %s328 = sphi 0, %s327
      %s342 = sphi 0, %s328
      %s346 = sphi 0, %s346
      %s348 = sphi 0, %s346
      %s349 = sphi 0, %s348
      %s363 = sphi 0, %s349
      %s367 = sphi 0, %s367
      %s369 = sphi 0, %s367
      %s370 = sphi 0, %s369
      %s384 = sphi 0, %s370
      %s388 = sphi 0, %s388
      %s390 = sphi 0, %s388
      %s391 = sphi 0, %s390
      %s405 = sphi 0, %s391
      %s409 = sphi 0, %s409
      %s411 = sphi 0, %s409
      %s412 = sphi 0, %s411
      %s426 = sphi 0, %s412
      %s430 = sphi 0, %s430
      %s432 = sphi 0, %s430
      %s433 = sphi 0, %s432
      %s447 = sphi 0, %s433
      %s451 = sphi 0, %s451
      %s453 = sphi 0, %s451
      %s454 = sphi 0, %s453
      %s468 = sphi 0, %s454
      %s472 = sphi 0, %s472
      %s474 = sphi 0, %s472
      %s475 = sphi 0, %s474
      %s489 = sphi 0, %s475
      %s495 = sphi 0, %s497
      %s498 = sphi 0, %s495
      %s499 = sphi 0, %s498
      %s515 = sphi 0, %s499
    $region4: #{encoder_forward.2} parent=1 // loop_header_branch
      %37 = sbr.rel (%p35) target = $region8
    $region5: #{encoder_forward.2} parent=1 // loop_body
      %s39 = ssub.s32 %s34, 1
      %s40 = ssub.s32 %s34, 2
      %s41 = sadd.s32 %s34, 1
      %s42 = ssub.s32 %s34, %s41
      %p43 = scmp.eq.s32.totalorder %s42, 0
      %s45 = sadd.s32 %s44, 1
      %s46 = scalar_select %p43, %s44, %s45
      %p49 = pneg %p43
      %p50 = scmp.eq.s32.totalorder %s34, 1
      %p51 = por %p49, %p50
      %p52 = scmp.ne.s32.totalorder %s44, %s47
      %p53 = scmp.eq.s32.totalorder %s34, 0
      %p54 = por %p52, %p53
      %p55 = scmp.ne.s32.totalorder %s44, %s47
      %p56 = scmp.eq.s32.totalorder %s39, 1
      %p57 = por %p55, %p56
      %p58 = scmp.ne.s32.totalorder %s47, %s48
      %p59 = scmp.eq.s32.totalorder %s39, 0
      %p60 = por %p58, %p59
      %p61 = scmp.ne.s32.totalorder %s47, %s48
      %p62 = scmp.eq.s32.totalorder %s40, 1
      %p63 = por %p61, %p62
      %p65 = scmp.ne.s32.totalorder %s48, %s64
      %p66 = scmp.eq.s32.totalorder %s40, 0
      %p67 = por %p65, %p66
      %s68 = ssub.s32 %s34, %s41
      %p69 = scmp.eq.s32.totalorder %s68, 0
      %s71 = sadd.s32 %s70, 1
      %s72 = scalar_select %p69, %s70, %s71
      %p75 = pneg %p69
      %p76 = scmp.eq.s32.totalorder %s34, 1
      %p77 = por %p75, %p76
      %p78 = scmp.ne.s32.totalorder %s70, %s73
      %p79 = scmp.eq.s32.totalorder %s34, 0
      %p80 = por %p78, %p79
      %p81 = scmp.ne.s32.totalorder %s70, %s73
      %p82 = scmp.eq.s32.totalorder %s39, 1
      %p83 = por %p81, %p82
      %p84 = scmp.ne.s32.totalorder %s73, %s74
      %p85 = scmp.eq.s32.totalorder %s39, 0
      %p86 = por %p84, %p85
      %p87 = scmp.ne.s32.totalorder %s73, %s74
      %p88 = scmp.eq.s32.totalorder %s40, 1
      %p89 = por %p87, %p88
      %p91 = scmp.ne.s32.totalorder %s74, %s90
      %p92 = scmp.eq.s32.totalorder %s40, 0
      %p93 = por %p91, %p92
      %s95 = sadd.s32 %s94, 1
      %p98 = scmp.eq.s32.totalorder %s34, 1
      %p99 = scmp.ne.s32.totalorder %s94, %s96
      %p100 = scmp.eq.s32.totalorder %s34, 0
      %p101 = por %p99, %p100
      %p102 = scmp.ne.s32.totalorder %s94, %s96
      %p103 = scmp.eq.s32.totalorder %s39, 1
      %p104 = por %p102, %p103
      %p105 = scmp.ne.s32.totalorder %s96, %s97
      %p106 = scmp.eq.s32.totalorder %s39, 0
      %p107 = por %p105, %p106
      %p108 = scmp.ne.s32.totalorder %s96, %s97
      %p109 = scmp.eq.s32.totalorder %s40, 1
      %p110 = por %p108, %p109
      %p112 = scmp.ne.s32.totalorder %s97, %s111
      %p113 = scmp.eq.s32.totalorder %s40, 0
      %p114 = por %p112, %p113
      %s116 = sadd.s32 %s115, 1
      %p119 = scmp.eq.s32.totalorder %s34, 1
      %p120 = scmp.ne.s32.totalorder %s115, %s117
      %p121 = scmp.eq.s32.totalorder %s34, 0
      %p122 = por %p120, %p121
      %p123 = scmp.ne.s32.totalorder %s115, %s117
      %p124 = scmp.eq.s32.totalorder %s39, 1
      %p125 = por %p123, %p124
      %p126 = scmp.ne.s32.totalorder %s117, %s118
      %p127 = scmp.eq.s32.totalorder %s39, 0
      %p128 = por %p126, %p127
      %p129 = scmp.ne.s32.totalorder %s117, %s118
      %p130 = scmp.eq.s32.totalorder %s40, 1
      %p131 = por %p129, %p130
      %p133 = scmp.ne.s32.totalorder %s118, %s132
      %p134 = scmp.eq.s32.totalorder %s40, 0
      %p135 = por %p133, %p134
      %s137 = sadd.s32 %s136, 1
      %p140 = scmp.eq.s32.totalorder %s34, 1
      %p141 = scmp.ne.s32.totalorder %s136, %s138
      %p142 = scmp.eq.s32.totalorder %s34, 0
      %p143 = por %p141, %p142
      %p144 = scmp.ne.s32.totalorder %s136, %s138
      %p145 = scmp.eq.s32.totalorder %s39, 1
      %p146 = por %p144, %p145
      %p147 = scmp.ne.s32.totalorder %s138, %s139
      %p148 = scmp.eq.s32.totalorder %s39, 0
      %p149 = por %p147, %p148
      %p150 = scmp.ne.s32.totalorder %s138, %s139
      %p151 = scmp.eq.s32.totalorder %s40, 1
      %p152 = por %p150, %p151
      %p154 = scmp.ne.s32.totalorder %s139, %s153
      %p155 = scmp.eq.s32.totalorder %s40, 0
      %p156 = por %p154, %p155
      %s158 = sadd.s32 %s157, 1
      %p161 = scmp.eq.s32.totalorder %s34, 1
      %p162 = scmp.ne.s32.totalorder %s157, %s159
      %p163 = scmp.eq.s32.totalorder %s34, 0
      %p164 = por %p162, %p163
      %p165 = scmp.ne.s32.totalorder %s157, %s159
      %p166 = scmp.eq.s32.totalorder %s39, 1
      %p167 = por %p165, %p166
      %p168 = scmp.ne.s32.totalorder %s159, %s160
      %p169 = scmp.eq.s32.totalorder %s39, 0
      %p170 = por %p168, %p169
      %p171 = scmp.ne.s32.totalorder %s159, %s160
      %p172 = scmp.eq.s32.totalorder %s40, 1
      %p173 = por %p171, %p172
      %p175 = scmp.ne.s32.totalorder %s160, %s174
      %p176 = scmp.eq.s32.totalorder %s40, 0
      %p177 = por %p175, %p176
      %s179 = sadd.s32 %s178, 1
      %p182 = scmp.eq.s32.totalorder %s34, 1
      %p183 = scmp.ne.s32.totalorder %s178, %s180
      %p184 = scmp.eq.s32.totalorder %s34, 0
      %p185 = por %p183, %p184
      %p186 = scmp.ne.s32.totalorder %s178, %s180
      %p187 = scmp.eq.s32.totalorder %s39, 1
      %p188 = por %p186, %p187
      %p189 = scmp.ne.s32.totalorder %s180, %s181
      %p190 = scmp.eq.s32.totalorder %s39, 0
      %p191 = por %p189, %p190
      %p192 = scmp.ne.s32.totalorder %s180, %s181
      %p193 = scmp.eq.s32.totalorder %s40, 1
      %p194 = por %p192, %p193
      %p196 = scmp.ne.s32.totalorder %s181, %s195
      %p197 = scmp.eq.s32.totalorder %s40, 0
      %p198 = por %p196, %p197
      %s200 = sadd.s32 %s199, 1
      %p203 = scmp.eq.s32.totalorder %s34, 1
      %p204 = scmp.ne.s32.totalorder %s199, %s201
      %p205 = scmp.eq.s32.totalorder %s34, 0
      %p206 = por %p204, %p205
      %p207 = scmp.ne.s32.totalorder %s199, %s201
      %p208 = scmp.eq.s32.totalorder %s39, 1
      %p209 = por %p207, %p208
      %p210 = scmp.ne.s32.totalorder %s201, %s202
      %p211 = scmp.eq.s32.totalorder %s39, 0
      %p212 = por %p210, %p211
      %p213 = scmp.ne.s32.totalorder %s201, %s202
      %p214 = scmp.eq.s32.totalorder %s40, 1
      %p215 = por %p213, %p214
      %p217 = scmp.ne.s32.totalorder %s202, %s216
      %p218 = scmp.eq.s32.totalorder %s40, 0
      %p219 = por %p217, %p218
      %s221 = sadd.s32 %s220, 1
      %p224 = scmp.eq.s32.totalorder %s34, 1
      %p225 = scmp.ne.s32.totalorder %s220, %s222
      %p226 = scmp.eq.s32.totalorder %s34, 0
      %p227 = por %p225, %p226
      %p228 = scmp.ne.s32.totalorder %s220, %s222
      %p229 = scmp.eq.s32.totalorder %s39, 1
      %p230 = por %p228, %p229
      %p231 = scmp.ne.s32.totalorder %s222, %s223
      %p232 = scmp.eq.s32.totalorder %s39, 0
      %p233 = por %p231, %p232
      %p234 = scmp.ne.s32.totalorder %s222, %s223
      %p235 = scmp.eq.s32.totalorder %s40, 1
      %p236 = por %p234, %p235
      %p238 = scmp.ne.s32.totalorder %s223, %s237
      %p239 = scmp.eq.s32.totalorder %s40, 0
      %p240 = por %p238, %p239
      %s242 = sadd.s32 %s241, 1
      %p245 = scmp.eq.s32.totalorder %s34, 1
      %p246 = scmp.ne.s32.totalorder %s241, %s243
      %p247 = scmp.eq.s32.totalorder %s34, 0
      %p248 = por %p246, %p247
      %p249 = scmp.ne.s32.totalorder %s241, %s243
      %p250 = scmp.eq.s32.totalorder %s39, 1
      %p251 = por %p249, %p250
      %p252 = scmp.ne.s32.totalorder %s243, %s244
      %p253 = scmp.eq.s32.totalorder %s39, 0
      %p254 = por %p252, %p253
      %p255 = scmp.ne.s32.totalorder %s243, %s244
      %p256 = scmp.eq.s32.totalorder %s40, 1
      %p257 = por %p255, %p256
      %p259 = scmp.ne.s32.totalorder %s244, %s258
      %p260 = scmp.eq.s32.totalorder %s40, 0
      %p261 = por %p259, %p260
      %s263 = sadd.s32 %s262, 1
      %p266 = scmp.eq.s32.totalorder %s34, 1
      %p267 = scmp.ne.s32.totalorder %s262, %s264
      %p268 = scmp.eq.s32.totalorder %s34, 0
      %p269 = por %p267, %p268
      %p270 = scmp.ne.s32.totalorder %s262, %s264
      %p271 = scmp.eq.s32.totalorder %s39, 1
      %p272 = por %p270, %p271
      %p273 = scmp.ne.s32.totalorder %s264, %s265
      %p274 = scmp.eq.s32.totalorder %s39, 0
      %p275 = por %p273, %p274
      %p276 = scmp.ne.s32.totalorder %s264, %s265
      %p277 = scmp.eq.s32.totalorder %s40, 1
      %p278 = por %p276, %p277
      %p280 = scmp.ne.s32.totalorder %s265, %s279
      %p281 = scmp.eq.s32.totalorder %s40, 0
      %p282 = por %p280, %p281
      %s284 = sadd.s32 %s283, 1
      %p287 = scmp.eq.s32.totalorder %s34, 1
      %p288 = scmp.ne.s32.totalorder %s283, %s285
      %p289 = scmp.eq.s32.totalorder %s34, 0
      %p290 = por %p288, %p289
      %p291 = scmp.ne.s32.totalorder %s283, %s285
      %p292 = scmp.eq.s32.totalorder %s39, 1
      %p293 = por %p291, %p292
      %p294 = scmp.ne.s32.totalorder %s285, %s286
      %p295 = scmp.eq.s32.totalorder %s39, 0
      %p296 = por %p294, %p295
      %p297 = scmp.ne.s32.totalorder %s285, %s286
      %p298 = scmp.eq.s32.totalorder %s40, 1
      %p299 = por %p297, %p298
      %p301 = scmp.ne.s32.totalorder %s286, %s300
      %p302 = scmp.eq.s32.totalorder %s40, 0
      %p303 = por %p301, %p302
      %s305 = sadd.s32 %s304, 1
      %p308 = scmp.eq.s32.totalorder %s34, 1
      %p309 = scmp.ne.s32.totalorder %s304, %s306
      %p310 = scmp.eq.s32.totalorder %s34, 0
      %p311 = por %p309, %p310
      %p312 = scmp.ne.s32.totalorder %s304, %s306
      %p313 = scmp.eq.s32.totalorder %s39, 1
      %p314 = por %p312, %p313
      %p315 = scmp.ne.s32.totalorder %s306, %s307
      %p316 = scmp.eq.s32.totalorder %s39, 0
      %p317 = por %p315, %p316
      %p318 = scmp.ne.s32.totalorder %s306, %s307
      %p319 = scmp.eq.s32.totalorder %s40, 1
      %p320 = por %p318, %p319
      %p322 = scmp.ne.s32.totalorder %s307, %s321
      %p323 = scmp.eq.s32.totalorder %s40, 0
      %p324 = por %p322, %p323
      %s326 = sadd.s32 %s325, 1
      %p329 = scmp.eq.s32.totalorder %s34, 1
      %p330 = scmp.ne.s32.totalorder %s325, %s327
      %p331 = scmp.eq.s32.totalorder %s34, 0
      %p332 = por %p330, %p331
      %p333 = scmp.ne.s32.totalorder %s325, %s327
      %p334 = scmp.eq.s32.totalorder %s39, 1
      %p335 = por %p333, %p334
      %p336 = scmp.ne.s32.totalorder %s327, %s328
      %p337 = scmp.eq.s32.totalorder %s39, 0
      %p338 = por %p336, %p337
      %p339 = scmp.ne.s32.totalorder %s327, %s328
      %p340 = scmp.eq.s32.totalorder %s40, 1
      %p341 = por %p339, %p340
      %p343 = scmp.ne.s32.totalorder %s328, %s342
      %p344 = scmp.eq.s32.totalorder %s40, 0
      %p345 = por %p343, %p344
      %s347 = sadd.s32 %s346, 1
      %p350 = scmp.eq.s32.totalorder %s34, 1
      %p351 = scmp.ne.s32.totalorder %s346, %s348
      %p352 = scmp.eq.s32.totalorder %s34, 0
      %p353 = por %p351, %p352
      %p354 = scmp.ne.s32.totalorder %s346, %s348
      %p355 = scmp.eq.s32.totalorder %s39, 1
      %p356 = por %p354, %p355
      %p357 = scmp.ne.s32.totalorder %s348, %s349
      %p358 = scmp.eq.s32.totalorder %s39, 0
      %p359 = por %p357, %p358
      %p360 = scmp.ne.s32.totalorder %s348, %s349
      %p361 = scmp.eq.s32.totalorder %s40, 1
      %p362 = por %p360, %p361
      %p364 = scmp.ne.s32.totalorder %s349, %s363
      %p365 = scmp.eq.s32.totalorder %s40, 0
      %p366 = por %p364, %p365
      %s368 = sadd.s32 %s367, 1
      %p371 = scmp.eq.s32.totalorder %s34, 1
      %p372 = scmp.ne.s32.totalorder %s367, %s369
      %p373 = scmp.eq.s32.totalorder %s34, 0
      %p374 = por %p372, %p373
      %p375 = scmp.ne.s32.totalorder %s367, %s369
      %p376 = scmp.eq.s32.totalorder %s39, 1
      %p377 = por %p375, %p376
      %p378 = scmp.ne.s32.totalorder %s369, %s370
      %p379 = scmp.eq.s32.totalorder %s39, 0
      %p380 = por %p378, %p379
      %p381 = scmp.ne.s32.totalorder %s369, %s370
      %p382 = scmp.eq.s32.totalorder %s40, 1
      %p383 = por %p381, %p382
      %p385 = scmp.ne.s32.totalorder %s370, %s384
      %p386 = scmp.eq.s32.totalorder %s40, 0
      %p387 = por %p385, %p386
      %s389 = sadd.s32 %s388, 1
      %p392 = scmp.eq.s32.totalorder %s34, 1
      %p393 = scmp.ne.s32.totalorder %s388, %s390
      %p394 = scmp.eq.s32.totalorder %s34, 0
      %p395 = por %p393, %p394
      %p396 = scmp.ne.s32.totalorder %s388, %s390
      %p397 = scmp.eq.s32.totalorder %s39, 1
      %p398 = por %p396, %p397
      %p399 = scmp.ne.s32.totalorder %s390, %s391
      %p400 = scmp.eq.s32.totalorder %s39, 0
      %p401 = por %p399, %p400
      %p402 = scmp.ne.s32.totalorder %s390, %s391
      %p403 = scmp.eq.s32.totalorder %s40, 1
      %p404 = por %p402, %p403
      %p406 = scmp.ne.s32.totalorder %s391, %s405
      %p407 = scmp.eq.s32.totalorder %s40, 0
      %p408 = por %p406, %p407
      %s410 = sadd.s32 %s409, 1
      %p413 = scmp.eq.s32.totalorder %s34, 1
      %p414 = scmp.ne.s32.totalorder %s409, %s411
      %p415 = scmp.eq.s32.totalorder %s34, 0
      %p416 = por %p414, %p415
      %p417 = scmp.ne.s32.totalorder %s409, %s411
      %p418 = scmp.eq.s32.totalorder %s39, 1
      %p419 = por %p417, %p418
      %p420 = scmp.ne.s32.totalorder %s411, %s412
      %p421 = scmp.eq.s32.totalorder %s39, 0
      %p422 = por %p420, %p421
      %p423 = scmp.ne.s32.totalorder %s411, %s412
      %p424 = scmp.eq.s32.totalorder %s40, 1
      %p425 = por %p423, %p424
      %p427 = scmp.ne.s32.totalorder %s412, %s426
      %p428 = scmp.eq.s32.totalorder %s40, 0
      %p429 = por %p427, %p428
      %s431 = sadd.s32 %s430, 1
      %p434 = scmp.eq.s32.totalorder %s34, 1
      %p435 = scmp.ne.s32.totalorder %s430, %s432
      %p436 = scmp.eq.s32.totalorder %s34, 0
      %p437 = por %p435, %p436
      %p438 = scmp.ne.s32.totalorder %s430, %s432
      %p439 = scmp.eq.s32.totalorder %s39, 1
      %p440 = por %p438, %p439
      %p441 = scmp.ne.s32.totalorder %s432, %s433
      %p442 = scmp.eq.s32.totalorder %s39, 0
      %p443 = por %p441, %p442
      %p444 = scmp.ne.s32.totalorder %s432, %s433
      %p445 = scmp.eq.s32.totalorder %s40, 1
      %p446 = por %p444, %p445
      %p448 = scmp.ne.s32.totalorder %s433, %s447
      %p449 = scmp.eq.s32.totalorder %s40, 0
      %p450 = por %p448, %p449
      %s452 = sadd.s32 %s451, 1
      %p455 = scmp.eq.s32.totalorder %s34, 1
      %p456 = scmp.ne.s32.totalorder %s451, %s453
      %p457 = scmp.eq.s32.totalorder %s34, 0
      %p458 = por %p456, %p457
      %p459 = scmp.ne.s32.totalorder %s451, %s453
      %p460 = scmp.eq.s32.totalorder %s39, 1
      %p461 = por %p459, %p460
      %p462 = scmp.ne.s32.totalorder %s453, %s454
      %p463 = scmp.eq.s32.totalorder %s39, 0
      %p464 = por %p462, %p463
      %p465 = scmp.ne.s32.totalorder %s453, %s454
      %p466 = scmp.eq.s32.totalorder %s40, 1
      %p467 = por %p465, %p466
      %p469 = scmp.ne.s32.totalorder %s454, %s468
      %p470 = scmp.eq.s32.totalorder %s40, 0
      %p471 = por %p469, %p470
      %s473 = sadd.s32 %s472, 1
      %p476 = scmp.eq.s32.totalorder %s34, 1
      %p477 = scmp.ne.s32.totalorder %s472, %s474
      %p478 = scmp.eq.s32.totalorder %s34, 0
      %p479 = por %p477, %p478
      %p480 = scmp.ne.s32.totalorder %s472, %s474
      %p481 = scmp.eq.s32.totalorder %s39, 1
      %p482 = por %p480, %p481
      %p483 = scmp.ne.s32.totalorder %s474, %s475
      %p484 = scmp.eq.s32.totalorder %s39, 0
      %p485 = por %p483, %p484
      %p486 = scmp.ne.s32.totalorder %s474, %s475
      %p487 = scmp.eq.s32.totalorder %s40, 1
      %p488 = por %p486, %p487
      %p490 = scmp.ne.s32.totalorder %s475, %s489
      %p491 = scmp.eq.s32.totalorder %s40, 0
      %p492 = por %p490, %p491
      %s493 = ssub.s32 %s34, %s41
      %p494 = scmp.eq.s32.totalorder %s493, 0
      %s496 = sadd.s32 %s495, 1
      %s497 = scalar_select %p494, %s495, %s496
      %p500 = pneg %p494
      %p501 = scmp.eq.s32.totalorder %s34, 1
      %p502 = por %p500, %p501
      %p503 = scmp.ne.s32.totalorder %s495, %s498
      %p504 = scmp.eq.s32.totalorder %s34, 0
      %p505 = por %p503, %p504
      %p506 = scmp.ne.s32.totalorder %s495, %s498
      %p507 = scmp.eq.s32.totalorder %s39, 1
      %p508 = por %p506, %p507
      %p509 = scmp.ne.s32.totalorder %s498, %s499
      %p510 = scmp.eq.s32.totalorder %s39, 0
      %p511 = por %p509, %p510
      %p512 = scmp.ne.s32.totalorder %s498, %s499
      %p513 = scmp.eq.s32.totalorder %s40, 1
      %p514 = por %p512, %p513
      %p516 = scmp.ne.s32.totalorder %s499, %s515
      %p517 = scmp.eq.s32.totalorder %s40, 0
      %p518 = por %p516, %p517
      %p519 = scmp.le.s32.totalorder 1, %s34
      %p520 = scmp.lt.s32.totalorder %s34, 3
      %p521 = pnand %p519, %p520
      %p522 = pneg %p521
      // Predicated region
      $region9: #{encoder_forward.2} parent=5 // pred_check
        _
      $region10: #{encoder_forward.2} parent=5 // pred_check_branch
        %524 = sbr.rel (%p521) target = $region12
      $region11: #{encoder_forward.2} parent=5 // pred_region
        %s525 = ssub.s32 %s34, 1
        // Predicated region
        $region13: #{encoder_forward.2} parent=11 // pred_check
          %p526 = pneg %p107
        $region14: #{encoder_forward.2} parent=11 // pred_check_branch
          %528 = sbr.rel (%p526) target = $region16
        $region15: #{encoder_forward.2} parent=11 // pred_region
          _
        $region16: #{encoder_forward.2} parent=11 // pred_fallthru
          _
        // Predicated region
        $region17: #{encoder_forward.2} parent=11 // pred_check
          %p529 = pneg %p128
        $region18: #{encoder_forward.2} parent=11 // pred_check_branch
          %531 = sbr.rel (%p529) target = $region20
        $region19: #{encoder_forward.2} parent=11 // pred_region
          %s533 = ssub.s32 1024, 1024
          %534 = vsyncadd [#allocation3], %s533
          %s535 = sshll.u32 [#allocation2], 4
          %s536 = int_to_ptr.vmem [resolvable:$true] %s535
          %541 = dma.hbm_to_vmem [thread:$0]  %s3, 1024, %s536, [#allocation3], 64, 64, 4
        $region20: #{encoder_forward.2} parent=11 // pred_fallthru
          _
        // Predicated region
        $region21: #{encoder_forward.2} parent=11 // pred_check
          %p542 = pneg %p149
        $region22: #{encoder_forward.2} parent=11 // pred_check_branch
          %544 = sbr.rel (%p542) target = $region24
        $region23: #{encoder_forward.2} parent=11 // pred_region
          _
        $region24: #{encoder_forward.2} parent=11 // pred_fallthru
          _
        // Predicated region
        $region25: #{encoder_forward.2} parent=11 // pred_check
          %p545 = pneg %p170
        $region26: #{encoder_forward.2} parent=11 // pred_check_branch
          %547 = sbr.rel (%p545) target = $region28
        $region27: #{encoder_forward.2} parent=11 // pred_region
          %s549 = ssub.s32 1024, 1024
          %550 = vsyncadd [#allocation5], %s549
          %s551 = sshll.u32 [#allocation4], 4
          %s552 = int_to_ptr.vmem [resolvable:$true] %s551
          %557 = dma.hbm_to_vmem [thread:$0]  %s5, 1024, %s552, [#allocation5], 64, 64, 4
        $region28: #{encoder_forward.2} parent=11 // pred_fallthru
          _
        // Predicated region
        $region29: #{encoder_forward.2} parent=11 // pred_check
          %p558 = pneg %p191
        $region30: #{encoder_forward.2} parent=11 // pred_check_branch
          %560 = sbr.rel (%p558) target = $region32
        $region31: #{encoder_forward.2} parent=11 // pred_region
          _
        $region32: #{encoder_forward.2} parent=11 // pred_fallthru
          _
        // Predicated region
        $region33: #{encoder_forward.2} parent=11 // pred_check
          %p561 = pneg %p212
        $region34: #{encoder_forward.2} parent=11 // pred_check_branch
          %563 = sbr.rel (%p561) target = $region36
        $region35: #{encoder_forward.2} parent=11 // pred_region
          %s565 = ssub.s32 1024, 1024
          %566 = vsyncadd [#allocation5], %s565
          %s567 = sshll.u32 [#allocation6], 4
          %s568 = int_to_ptr.vmem [resolvable:$true] %s567
          %573 = dma.hbm_to_vmem [thread:$0]  %s7, 1024, %s568, [#allocation5], 64, 64, 4
        $region36: #{encoder_forward.2} parent=11 // pred_fallthru
          _
        // Predicated region
        $region37: #{encoder_forward.2} parent=11 // pred_check
          %p574 = pneg %p233
        $region38: #{encoder_forward.2} parent=11 // pred_check_branch
          %576 = sbr.rel (%p574) target = $region40
        $region39: #{encoder_forward.2} parent=11 // pred_region
          _
        $region40: #{encoder_forward.2} parent=11 // pred_fallthru
          _
        // Predicated region
        $region41: #{encoder_forward.2} parent=11 // pred_check
          %p577 = pneg %p254
        $region42: #{encoder_forward.2} parent=11 // pred_check_branch
          %579 = sbr.rel (%p577) target = $region44
        $region43: #{encoder_forward.2} parent=11 // pred_region
          %s581 = ssub.s32 1024, 1024
          %582 = vsyncadd [#allocation8], %s581
          %s583 = sshll.u32 [#allocation7], 4
          %s584 = int_to_ptr.vmem [resolvable:$true] %s583
          %589 = dma.hbm_to_vmem [thread:$0]  %s9, 1024, %s584, [#allocation8], 64, 64, 4
        $region44: #{encoder_forward.2} parent=11 // pred_fallthru
          _
        // Predicated region
        $region45: #{encoder_forward.2} parent=11 // pred_check
          %p590 = pneg %p275
        $region46: #{encoder_forward.2} parent=11 // pred_check_branch
          %592 = sbr.rel (%p590) target = $region48
        $region47: #{encoder_forward.2} parent=11 // pred_region
          _
        $region48: #{encoder_forward.2} parent=11 // pred_fallthru
          _
        // Predicated region
        $region49: #{encoder_forward.2} parent=11 // pred_check
          %p593 = pneg %p296
        $region50: #{encoder_forward.2} parent=11 // pred_check_branch
          %595 = sbr.rel (%p593) target = $region52
        $region51: #{encoder_forward.2} parent=11 // pred_region
          %s597 = ssub.s32 16, 16
          %598 = vsyncadd [#allocation8], %s597
          %s600 = sshll.u32 [#allocation9], 4
          %s601 = int_to_ptr.vmem [resolvable:$true] %s600
          %603 = dma.hbm_to_vmem [thread:$0]  %s11, 16, %s601, [#allocation8]
        $region52: #{encoder_forward.2} parent=11 // pred_fallthru
          _
        // Predicated region
        $region53: #{encoder_forward.2} parent=11 // pred_check
          %p604 = pneg %p317
        $region54: #{encoder_forward.2} parent=11 // pred_check_branch
          %606 = sbr.rel (%p604) target = $region56
        $region55: #{encoder_forward.2} parent=11 // pred_region
          %s608 = ssub.s32 16, 16
          %609 = vsyncadd [#allocation11], %s608
          %s611 = sshll.u32 [#allocation10], 4
          %s612 = int_to_ptr.vmem [resolvable:$true] %s611
          %614 = dma.hbm_to_vmem [thread:$0]  %s12, 16, %s612, [#allocation11]
        $region56: #{encoder_forward.2} parent=11 // pred_fallthru
          _
        // Predicated region
        $region57: #{encoder_forward.2} parent=11 // pred_check
          %p615 = pneg %p338
        $region58: #{encoder_forward.2} parent=11 // pred_check_branch
          %617 = sbr.rel (%p615) target = $region60
        $region59: #{encoder_forward.2} parent=11 // pred_region
          %s619 = ssub.s32 16, 16
          %620 = vsyncadd [#allocation11], %s619
          %s622 = sshll.u32 [#allocation12], 4
          %s623 = int_to_ptr.vmem [resolvable:$true] %s622
          %625 = dma.hbm_to_vmem [thread:$0]  %s13, 16, %s623, [#allocation11]
        $region60: #{encoder_forward.2} parent=11 // pred_fallthru
          _
        // Predicated region
        $region61: #{encoder_forward.2} parent=11 // pred_check
          %p626 = pneg %p359
        $region62: #{encoder_forward.2} parent=11 // pred_check_branch
          %628 = sbr.rel (%p626) target = $region64
        $region63: #{encoder_forward.2} parent=11 // pred_region
          %s630 = ssub.s32 16, 16
          %631 = vsyncadd [#allocation14], %s630
          %s633 = sshll.u32 [#allocation13], 4
          %s634 = int_to_ptr.vmem [resolvable:$true] %s633
          %636 = dma.hbm_to_vmem [thread:$0]  %s14, 16, %s634, [#allocation14]
        $region64: #{encoder_forward.2} parent=11 // pred_fallthru
          _
        // Predicated region
        $region65: #{encoder_forward.2} parent=11 // pred_check
          %p637 = pneg %p380
        $region66: #{encoder_forward.2} parent=11 // pred_check_branch
          %639 = sbr.rel (%p637) target = $region68
        $region67: #{encoder_forward.2} parent=11 // pred_region
          _
        $region68: #{encoder_forward.2} parent=11 // pred_fallthru
          _
        // Predicated region
        $region69: #{encoder_forward.2} parent=11 // pred_check
          %p640 = pneg %p401
        $region70: #{encoder_forward.2} parent=11 // pred_check_branch
          %642 = sbr.rel (%p640) target = $region72
        $region71: #{encoder_forward.2} parent=11 // pred_region
          %s644 = ssub.s32 32, 32
          %645 = vsyncadd [#allocation14], %s644
          %s647 = sshll.u32 [#allocation15], 4
          %s648 = int_to_ptr.vmem [resolvable:$true] %s647
          %650 = dma.hbm_to_vmem [thread:$0]  %s16, 32, %s648, [#allocation14]
        $region72: #{encoder_forward.2} parent=11 // pred_fallthru
          _
        // Predicated region
        $region73: #{encoder_forward.2} parent=11 // pred_check
          %p651 = pneg %p422
        $region74: #{encoder_forward.2} parent=11 // pred_check_branch
          %653 = sbr.rel (%p651) target = $region76
        $region75: #{encoder_forward.2} parent=11 // pred_region
          _
        $region76: #{encoder_forward.2} parent=11 // pred_fallthru
          _
        // Predicated region
        $region77: #{encoder_forward.2} parent=11 // pred_check
          %p654 = pneg %p443
        $region78: #{encoder_forward.2} parent=11 // pred_check_branch
          %656 = sbr.rel (%p654) target = $region80
        $region79: #{encoder_forward.2} parent=11 // pred_region
          %s658 = ssub.s32 16, 16
          %659 = vsyncadd [#allocation17], %s658
          %s661 = sshll.u32 [#allocation16], 4
          %s662 = int_to_ptr.vmem [resolvable:$true] %s661
          %664 = dma.hbm_to_vmem [thread:$0]  %s18, 16, %s662, [#allocation17]
        $region80: #{encoder_forward.2} parent=11 // pred_fallthru
          _
        // Predicated region
        $region81: #{encoder_forward.2} parent=11 // pred_check
          %p665 = pneg %p464
        $region82: #{encoder_forward.2} parent=11 // pred_check_branch
          %667 = sbr.rel (%p665) target = $region84
        $region83: #{encoder_forward.2} parent=11 // pred_region
          %s669 = ssub.s32 16, 16
          %670 = vsyncadd [#allocation17], %s669
          %s672 = sshll.u32 [#allocation18], 4
          %s673 = int_to_ptr.vmem [resolvable:$true] %s672
          %675 = dma.hbm_to_vmem [thread:$0]  %s19, 16, %s673, [#allocation17]
        $region84: #{encoder_forward.2} parent=11 // pred_fallthru
          _
        // Predicated region
        $region85: #{encoder_forward.2} parent=11 // pred_check
          %p676 = pneg %p485
        $region86: #{encoder_forward.2} parent=11 // pred_check_branch
          %678 = sbr.rel (%p676) target = $region88
        $region87: #{encoder_forward.2} parent=11 // pred_region
          %s680 = ssub.s32 16, 16
          %681 = vsyncadd [#allocation20], %s680
          %s683 = sshll.u32 [#allocation19], 4
          %s684 = int_to_ptr.vmem [resolvable:$true] %s683
          %686 = dma.hbm_to_vmem [thread:$0]  %s20, 16, %s684, [#allocation20]
        $region88: #{encoder_forward.2} parent=11 // pred_fallthru
          _
      $region12: #{encoder_forward.2} parent=5 // pred_fallthru
        _
      %p687 = scmp.lt.s32.totalorder %s34, 2
      // Predicated region
      $region89: #{encoder_forward.2} parent=5 // pred_check
        %p688 = pneg %p687
      $region90: #{encoder_forward.2} parent=5 // pred_check_branch
        %690 = sbr.rel (%p688) target = $region92
      $region91: #{encoder_forward.2} parent=5 // pred_region
        // Predicated region
        $region93: #{encoder_forward.2} parent=91 // pred_check
          %p691 = pneg %p54
        $region94: #{encoder_forward.2} parent=91 // pred_check_branch
          %693 = sbr.rel (%p691) target = $region96
        $region95: #{encoder_forward.2} parent=91 // pred_region
          %p694 = scmp.lt.s32.totalorder %s34, 1
          %s695 = scalar_select %p694, %s34, 1
          %s696 = smul.addr %s695, 8
          %s697 = scalar_lea.vmem %s0, %s696
        $region96: #{encoder_forward.2} parent=91 // pred_fallthru
          _
        // Predicated region
        $region97: #{encoder_forward.2} parent=91 // pred_check
          %p698 = pneg %p80
        $region98: #{encoder_forward.2} parent=91 // pred_check_branch
          %700 = sbr.rel (%p698) target = $region100
        $region99: #{encoder_forward.2} parent=91 // pred_region
          %p701 = scmp.lt.s32.totalorder %s34, 1
          %s702 = scalar_select %p701, %s34, 1
          %s703 = scalar_lea.vmem %s1, %s702
        $region100: #{encoder_forward.2} parent=91 // pred_fallthru
          _
      $region92: #{encoder_forward.2} parent=5 // pred_fallthru
        _
      %p704 = scmp.le.s32.totalorder 1, %s34
      %p705 = scmp.lt.s32.totalorder %s34, 3
      %p706 = pnand %p704, %p705
      %p707 = pneg %p706
      // Predicated region
      $region101: #{encoder_forward.2} parent=5 // pred_check
        _
      $region102: #{encoder_forward.2} parent=5 // pred_check_branch
        %709 = sbr.rel (%p706) target = $region104
      $region103: #{encoder_forward.2} parent=5 // pred_region
        %s710 = ssub.s32 %s34, 1
        // Predicated region
        $region105: #{encoder_forward.2} parent=103 // pred_check
          %p711 = pneg %p128
        $region106: #{encoder_forward.2} parent=103 // pred_check_branch
          %713 = sbr.rel (%p711) target = $region108
        $region107: #{encoder_forward.2} parent=103 // pred_region
          %714 = dma.done [#allocation3], 1024
        $region108: #{encoder_forward.2} parent=103 // pred_fallthru
          _
        // Predicated region
        $region109: #{encoder_forward.2} parent=103 // pred_check
          %p715 = pneg %p170
        $region110: #{encoder_forward.2} parent=103 // pred_check_branch
          %717 = sbr.rel (%p715) target = $region112
        $region111: #{encoder_forward.2} parent=103 // pred_region
          %718 = dma.done [#allocation5], 1024
        $region112: #{encoder_forward.2} parent=103 // pred_fallthru
          _
        // Predicated region
        $region113: #{encoder_forward.2} parent=103 // pred_check
          %p719 = pneg %p212
        $region114: #{encoder_forward.2} parent=103 // pred_check_branch
          %721 = sbr.rel (%p719) target = $region116
        $region115: #{encoder_forward.2} parent=103 // pred_region
          %722 = dma.done [#allocation5], 1024
        $region116: #{encoder_forward.2} parent=103 // pred_fallthru
          _
        // Predicated region
        $region117: #{encoder_forward.2} parent=103 // pred_check
          %p723 = pneg %p254
        $region118: #{encoder_forward.2} parent=103 // pred_check_branch
          %725 = sbr.rel (%p723) target = $region120
        $region119: #{encoder_forward.2} parent=103 // pred_region
          %726 = dma.done [#allocation8], 1024
        $region120: #{encoder_forward.2} parent=103 // pred_fallthru
          _
        // Predicated region
        $region121: #{encoder_forward.2} parent=103 // pred_check
          %p727 = pneg %p296
        $region122: #{encoder_forward.2} parent=103 // pred_check_branch
          %729 = sbr.rel (%p727) target = $region124
        $region123: #{encoder_forward.2} parent=103 // pred_region
          %730 = dma.done [#allocation8], 16
        $region124: #{encoder_forward.2} parent=103 // pred_fallthru
          _
        // Predicated region
        $region125: #{encoder_forward.2} parent=103 // pred_check
          %p731 = pneg %p317
        $region126: #{encoder_forward.2} parent=103 // pred_check_branch
          %733 = sbr.rel (%p731) target = $region128
        $region127: #{encoder_forward.2} parent=103 // pred_region
          %734 = dma.done [#allocation11], 16
        $region128: #{encoder_forward.2} parent=103 // pred_fallthru
          _
        // Predicated region
        $region129: #{encoder_forward.2} parent=103 // pred_check
          %p735 = pneg %p338
        $region130: #{encoder_forward.2} parent=103 // pred_check_branch
          %737 = sbr.rel (%p735) target = $region132
        $region131: #{encoder_forward.2} parent=103 // pred_region
          %738 = dma.done [#allocation11], 16
        $region132: #{encoder_forward.2} parent=103 // pred_fallthru
          _
        // Predicated region
        $region133: #{encoder_forward.2} parent=103 // pred_check
          %p739 = pneg %p359
        $region134: #{encoder_forward.2} parent=103 // pred_check_branch
          %741 = sbr.rel (%p739) target = $region136
        $region135: #{encoder_forward.2} parent=103 // pred_region
          %742 = dma.done [#allocation14], 16
        $region136: #{encoder_forward.2} parent=103 // pred_fallthru
          _
        // Predicated region
        $region137: #{encoder_forward.2} parent=103 // pred_check
          %p743 = pneg %p401
        $region138: #{encoder_forward.2} parent=103 // pred_check_branch
          %745 = sbr.rel (%p743) target = $region140
        $region139: #{encoder_forward.2} parent=103 // pred_region
          %746 = dma.done [#allocation14], 32
        $region140: #{encoder_forward.2} parent=103 // pred_fallthru
          _
        // Predicated region
        $region141: #{encoder_forward.2} parent=103 // pred_check
          %p747 = pneg %p443
        $region142: #{encoder_forward.2} parent=103 // pred_check_branch
          %749 = sbr.rel (%p747) target = $region144
        $region143: #{encoder_forward.2} parent=103 // pred_region
          %750 = dma.done [#allocation17], 16
        $region144: #{encoder_forward.2} parent=103 // pred_fallthru
          _
        // Predicated region
        $region145: #{encoder_forward.2} parent=103 // pred_check
          %p751 = pneg %p464
        $region146: #{encoder_forward.2} parent=103 // pred_check_branch
          %753 = sbr.rel (%p751) target = $region148
        $region147: #{encoder_forward.2} parent=103 // pred_region
          %754 = dma.done [#allocation17], 16
        $region148: #{encoder_forward.2} parent=103 // pred_fallthru
          _
        // Predicated region
        $region149: #{encoder_forward.2} parent=103 // pred_check
          %p755 = pneg %p485
        $region150: #{encoder_forward.2} parent=103 // pred_check_branch
          %757 = sbr.rel (%p755) target = $region152
        $region151: #{encoder_forward.2} parent=103 // pred_region
          %758 = dma.done [#allocation20], 16
        $region152: #{encoder_forward.2} parent=103 // pred_fallthru
          _
        %p759 = scmp.lt.s32.totalorder %s39, 1
        %s760 = scalar_select %p759, %s39, 1
        %s761 = smul.addr %s760, 8
        %s762 = scalar_lea.vmem %s0, %s761
        %p763 = pneg %p60
        %p764 = pneg %p57
        %p765 = scmp.lt.s32.totalorder %s39, 1
        %s766 = scalar_select %p765, %s39, 1
        %s767 = scalar_lea.vmem %s1, %s766
        %p768 = pneg %p86
        %p769 = pneg %p83
        %p770 = pneg %p107
        %p771 = pneg %p104
        %p772 = pneg %p128
        %p773 = pneg %p125
        %p774 = pneg %p149
        %p775 = pneg %p146
        %p776 = pneg %p170
        %p777 = pneg %p167
        %p778 = pneg %p191
        %p779 = pneg %p188
        %p780 = pneg %p212
        %p781 = pneg %p209
        %p782 = pneg %p233
        %p783 = pneg %p230
        %p784 = pneg %p254
        %p785 = pneg %p251
        %p786 = pneg %p275
        %p787 = pneg %p272
        %p788 = pneg %p296
        %p789 = pneg %p293
        %p790 = pneg %p317
        %p791 = pneg %p314
        %p792 = pneg %p338
        %p793 = pneg %p335
        %p794 = pneg %p359
        %p795 = pneg %p356
        %p796 = pneg %p380
        %p797 = pneg %p377
        %p798 = pneg %p401
        %p799 = pneg %p398
        %p800 = pneg %p422
        %p801 = pneg %p419
        %p802 = pneg %p443
        %p803 = pneg %p440
        %p804 = pneg %p464
        %p805 = pneg %p461
        %p806 = pneg %p485
        %p807 = pneg %p482
        %p808 = pneg %p511
        %p809 = pneg %p508
        %p810 = scmp.lt.s32.totalorder %s39, 1
        %s811 = scalar_select %p810, %s39, 1
        %s812 = smul.addr %s811, 8
        %s813 = scalar_lea.vmem %s21, %s812
        %p814 = scmp.lt.s32.totalorder %s39, 1
        %s815 = scalar_select %p814, %s39, 1
        %s816 = smul.addr %s815, 8
        %s817 = scalar_lea.vmem %s0, %s816
        %p818 = scmp.lt.s32.totalorder %s39, 1
        %s819 = scalar_select %p818, %s39, 1
        %s820 = scalar_lea.vmem %s1, %s819
        %p821 = scmp.lt.s32.totalorder %s39, 1
        %s822 = scalar_select %p821, %s39, 1
        %s823 = smul.addr %s822, 8
        %s824 = scalar_lea.vmem %s21, %s823
        %v826 = vld [vmem:[%s817] sm:$0xff]
        %v827 = vmul.f32 %v826, 11.313708
        %v828 = vld [vmem:[%s2] sm:$0xff]
        %v829 = vadd.f32 %v827, %v828
        %v830 = vld [vmem:[#allocation9] sm:$0x1]
        %v831 = vld [vmem:[#allocation10] sm:$0x1]
        %832 = vadd.xlane.f32.xlu0 %v829
        %v833 = vpop.xlane.xlu0 %832
        %v834 = vrcp.pop 128.0
        %v835 = vmul.f32 %v833, %v834
        %v836 = vsub.f32 %v829, %v835
        %v837 = vmul.f32 %v836, %v836
        %838 = vadd.xlane.f32.xlu0 %v837
        %v839 = vpop.xlane.xlu0 %838
        %v840 = vmul.f32 %v839, 0.007874016
        %v841 = vrsqrt.pop %v840
        %v842 = vmul.f32 %v840, %v841
        %vm843 = vcmp.eq.f32.partialorder %v840, inf
        %v844 = vsel %vm843, %v840, %v842
        %vm845 = vcmp.eq.f32.partialorder %v840, 0.0
        %v846 = vand.u32 %v840, 2147483648
        %v847 = vsel %vm845, %v846, %v844
        %v848 = vadd.f32 %v847, 1e-06
        %v849 = vrcp.pop %v848
        %v851 = vlaneseq
        %v852 = vshrl.u32 %v851, 7
        %v853 = vsub.s32 0, %v852
        %v854 = vrot.slane %v830, %v853
        %v856 = vmul.f32 %v854, %v836
        %v857 = vmul.f32 %v856, %v849
        %v859 = vlaneseq
        %v860 = vshrl.u32 %v859, 7
        %v861 = vsub.s32 0, %v860
        %v862 = vrot.slane %v831, %v861
        %v864 = vadd.f32 %v857, %v862
        %v865 = vpack.c.bf16 %v864, %v864
        %v866 = vld [vmem:[#allocation2] sm:$0xf]
        %v867 = vld [vmem:[#allocation2 + $0x4] sm:$0xf]
        %v868 = vld [vmem:[#allocation2 + $0x8] sm:$0xf]
        %v869 = vld [vmem:[#allocation2 + $0xc] sm:$0xf]
        %v870 = vld [vmem:[#allocation2 + $0x10] sm:$0xf]
        %v871 = vld [vmem:[#allocation2 + $0x14] sm:$0xf]
        %v872 = vld [vmem:[#allocation2 + $0x18] sm:$0xf]
        %v873 = vld [vmem:[#allocation2 + $0x1c] sm:$0xf]
        %v874 = vld [vmem:[#allocation2 + $0x20] sm:$0xf]
        %v875 = vld [vmem:[#allocation2 + $0x24] sm:$0xf]
        %v876 = vld [vmem:[#allocation2 + $0x28] sm:$0xf]
        %v877 = vld [vmem:[#allocation2 + $0x2c] sm:$0xf]
        %v878 = vld [vmem:[#allocation2 + $0x30] sm:$0xf]
        %v879 = vld [vmem:[#allocation2 + $0x34] sm:$0xf]
        %v880 = vld [vmem:[#allocation2 + $0x38] sm:$0xf]
        %v881 = vld [vmem:[#allocation2 + $0x3c] sm:$0xf]
        %v882 = vld [vmem:[%s4] sm:$0x1]
        %v884 = vlaneseq
        %v885 = vshrl.u32 %v884, 7
        %v886 = vsub.s32 0, %v885
        %v887 = vrot.slane %v882, %v886
        %v905 = vunpack.c.l.b16 %v866
        %v906 = vunpack.c.l.b16 %v867
        %v907 = vunpack.c.l.b16 %v868
        %v908 = vunpack.c.l.b16 %v869
        %v909 = vunpack.c.l.b16 %v870
        %v910 = vunpack.c.l.b16 %v871
        %v911 = vunpack.c.l.b16 %v872
        %v912 = vunpack.c.l.b16 %v873
        %v913 = vunpack.c.l.b16 %v874
        %v914 = vunpack.c.l.b16 %v875
        %v915 = vunpack.c.l.b16 %v876
        %v916 = vunpack.c.l.b16 %v877
        %v917 = vunpack.c.l.b16 %v878
        %v918 = vunpack.c.l.b16 %v879
        %v919 = vunpack.c.l.b16 %v880
        %v920 = vunpack.c.l.b16 %v881
        %v921 = vpack.c.b16 %v906, %v905
        %v922 = vpack.c.b16 %v908, %v907
        %v923 = vpack.c.b16 %v910, %v909
        %v924 = vpack.c.b16 %v912, %v911
        %v925 = vpack.c.b16 %v914, %v913
        %v926 = vpack.c.b16 %v916, %v915
        %v927 = vpack.c.b16 %v918, %v917
        %v928 = vpack.c.b16 %v920, %v919
        %937 = vmatprep.subr.bf16.mxu0 0
        %938 = vmatpush1.bf16.msra.mxu0 %v928
        %939 = vmatprep.subr.bf16.mxu0 0
        %940 = vmatpush1.bf16.msra.mxu0 %v927
        %941 = vmatprep.subr.bf16.mxu0 0
        %942 = vmatpush1.bf16.msra.mxu0 %v926
        %943 = vmatprep.subr.bf16.mxu0 0
        %944 = vmatpush1.bf16.msra.mxu0 %v925
        %945 = vmatprep.subr.bf16.mxu0 0
        %946 = vmatpush1.bf16.msra.mxu0 %v924
        %947 = vmatprep.subr.bf16.mxu0 0
        %948 = vmatpush1.bf16.msra.mxu0 %v923
        %949 = vmatprep.subr.bf16.mxu0 0
        %950 = vmatpush1.bf16.msra.mxu0 %v922
        %951 = vmatprep.subr.bf16.mxu0 0
        %952 = vmatpush1.bf16.msra.mxu0 %v921
        %953 = vmatprep.subr.bf16.mxu0 0
        %954 = vmatpush2.bf16.msra.mxu0 0
        %955 = vmatprep.subr.bf16.mxu0 0
        %956 = vmatpush2.bf16.msra.mxu0 0
        %957 = vmatprep.subr.bf16.mxu0 0
        %958 = vmatpush2.bf16.msra.mxu0 0
        %959 = vmatprep.subr.bf16.mxu0 0
        %960 = vmatpush2.bf16.msra.mxu0 0
        %961 = vmatprep.subr.bf16.mxu0 0
        %962 = vmatpush2.bf16.msra.mxu0 0
        %963 = vmatprep.subr.bf16.mxu0 0
        %964 = vmatpush2.bf16.msra.mxu0 0
        %965 = vmatprep.subr.bf16.mxu0 0
        %966 = vmatpush2.bf16.msra.mxu0 0
        %967 = vmatprep.subr.bf16.mxu0 0
        %968 = vmatpush2.bf16.msra.mxu0 0
        %969 = vmatprep.mubr.bf16.mxu0 0
        %970 = vmatmul.mubr.bf16.gmra.mxu0 %v865
        %v971 = vpop.f32.mrf.mxu0
        %v972 = vadd.f32 %v887, %v971
        %v973 = vpop.f32.mrf.mxu0
        %v974 = vpop.f32.mrf.mxu0
        %v975 = vpop.f32.mrf.mxu0
        %976 = vdwg.mxu0
        %v977 = vld [vmem:[#allocation4] sm:$0xf]
        %v978 = vld [vmem:[#allocation4 + $0x4] sm:$0xf]
        %v979 = vld [vmem:[#allocation4 + $0x8] sm:$0xf]
        %v980 = vld [vmem:[#allocation4 + $0xc] sm:$0xf]
        %v981 = vld [vmem:[#allocation4 + $0x10] sm:$0xf]
        %v982 = vld [vmem:[#allocation4 + $0x14] sm:$0xf]
        %v983 = vld [vmem:[#allocation4 + $0x18] sm:$0xf]
        %v984 = vld [vmem:[#allocation4 + $0x1c] sm:$0xf]
        %v985 = vld [vmem:[#allocation4 + $0x20] sm:$0xf]
        %v986 = vld [vmem:[#allocation4 + $0x24] sm:$0xf]
        %v987 = vld [vmem:[#allocation4 + $0x28] sm:$0xf]
        %v988 = vld [vmem:[#allocation4 + $0x2c] sm:$0xf]
        %v989 = vld [vmem:[#allocation4 + $0x30] sm:$0xf]
        %v990 = vld [vmem:[#allocation4 + $0x34] sm:$0xf]
        %v991 = vld [vmem:[#allocation4 + $0x38] sm:$0xf]
        %v992 = vld [vmem:[#allocation4 + $0x3c] sm:$0xf]
        %v993 = vld [vmem:[%s6] sm:$0x1]
        %v995 = vlaneseq
        %v996 = vshrl.u32 %v995, 7
        %v997 = vsub.s32 0, %v996
        %v998 = vrot.slane %v993, %v997
        %v1016 = vunpack.c.l.b16 %v977
        %v1017 = vunpack.c.l.b16 %v978
        %v1018 = vunpack.c.l.b16 %v979
        %v1019 = vunpack.c.l.b16 %v980
        %v1020 = vunpack.c.l.b16 %v981
        %v1021 = vunpack.c.l.b16 %v982
        %v1022 = vunpack.c.l.b16 %v983
        %v1023 = vunpack.c.l.b16 %v984
        %v1024 = vunpack.c.l.b16 %v985
        %v1025 = vunpack.c.l.b16 %v986
        %v1026 = vunpack.c.l.b16 %v987
        %v1027 = vunpack.c.l.b16 %v988
        %v1028 = vunpack.c.l.b16 %v989
        %v1029 = vunpack.c.l.b16 %v990
        %v1030 = vunpack.c.l.b16 %v991
        %v1031 = vunpack.c.l.b16 %v992
        %v1032 = vpack.c.b16 %v1017, %v1016
        %v1033 = vpack.c.b16 %v1019, %v1018
        %v1034 = vpack.c.b16 %v1021, %v1020
        %v1035 = vpack.c.b16 %v1023, %v1022
        %v1036 = vpack.c.b16 %v1025, %v1024
        %v1037 = vpack.c.b16 %v1027, %v1026
        %v1038 = vpack.c.b16 %v1029, %v1028
        %v1039 = vpack.c.b16 %v1031, %v1030
        %1048 = vmatprep.subr.bf16.mxu0 0
        %1049 = vmatpush1.bf16.msra.mxu0 %v1039
        %1050 = vmatprep.subr.bf16.mxu0 0
        %1051 = vmatpush1.bf16.msra.mxu0 %v1038
        %1052 = vmatprep.subr.bf16.mxu0 0
        %1053 = vmatpush1.bf16.msra.mxu0 %v1037
        %1054 = vmatprep.subr.bf16.mxu0 0
        %1055 = vmatpush1.bf16.msra.mxu0 %v1036
        %1056 = vmatprep.subr.bf16.mxu0 0
        %1057 = vmatpush1.bf16.msra.mxu0 %v1035
        %1058 = vmatprep.subr.bf16.mxu0 0
        %1059 = vmatpush1.bf16.msra.mxu0 %v1034
        %1060 = vmatprep.subr.bf16.mxu0 0
        %1061 = vmatpush1.bf16.msra.mxu0 %v1033
        %1062 = vmatprep.subr.bf16.mxu0 0
        %1063 = vmatpush1.bf16.msra.mxu0 %v1032
        %1064 = vmatprep.subr.bf16.mxu0 0
        %1065 = vmatpush2.bf16.msra.mxu0 0
        %1066 = vmatprep.subr.bf16.mxu0 0
        %1067 = vmatpush2.bf16.msra.mxu0 0
        %1068 = vmatprep.subr.bf16.mxu0 0
        %1069 = vmatpush2.bf16.msra.mxu0 0
        %1070 = vmatprep.subr.bf16.mxu0 0
        %1071 = vmatpush2.bf16.msra.mxu0 0
        %1072 = vmatprep.subr.bf16.mxu0 0
        %1073 = vmatpush2.bf16.msra.mxu0 0
        %1074 = vmatprep.subr.bf16.mxu0 0
        %1075 = vmatpush2.bf16.msra.mxu0 0
        %1076 = vmatprep.subr.bf16.mxu0 0
        %1077 = vmatpush2.bf16.msra.mxu0 0
        %1078 = vmatprep.subr.bf16.mxu0 0
        %1079 = vmatpush2.bf16.msra.mxu0 0
        %1080 = vmatprep.mubr.bf16.mxu0 0
        %1081 = vmatmul.mubr.bf16.gmra.mxu0 %v865
        %v1082 = vpop.f32.mrf.mxu0
        %v1083 = vadd.f32 %v998, %v1082
        %v1084 = vpop.f32.mrf.mxu0
        %v1085 = vpop.f32.mrf.mxu0
        %v1086 = vpop.f32.mrf.mxu0
        %1087 = vdwg.mxu0
        %v1088 = vld [vmem:[#allocation6] sm:$0xf]
        %v1089 = vld [vmem:[#allocation6 + $0x4] sm:$0xf]
        %v1090 = vld [vmem:[#allocation6 + $0x8] sm:$0xf]
        %v1091 = vld [vmem:[#allocation6 + $0xc] sm:$0xf]
        %v1092 = vld [vmem:[#allocation6 + $0x10] sm:$0xf]
        %v1093 = vld [vmem:[#allocation6 + $0x14] sm:$0xf]
        %v1094 = vld [vmem:[#allocation6 + $0x18] sm:$0xf]
        %v1095 = vld [vmem:[#allocation6 + $0x1c] sm:$0xf]
        %v1096 = vld [vmem:[#allocation6 + $0x20] sm:$0xf]
        %v1097 = vld [vmem:[#allocation6 + $0x24] sm:$0xf]
        %v1098 = vld [vmem:[#allocation6 + $0x28] sm:$0xf]
        %v1099 = vld [vmem:[#allocation6 + $0x2c] sm:$0xf]
        %v1100 = vld [vmem:[#allocation6 + $0x30] sm:$0xf]
        %v1101 = vld [vmem:[#allocation6 + $0x34] sm:$0xf]
        %v1102 = vld [vmem:[#allocation6 + $0x38] sm:$0xf]
        %v1103 = vld [vmem:[#allocation6 + $0x3c] sm:$0xf]
        %v1104 = vld [vmem:[%s8] sm:$0x1]
        %v1106 = vlaneseq
        %v1107 = vshrl.u32 %v1106, 7
        %v1108 = vsub.s32 0, %v1107
        %v1109 = vrot.slane %v1104, %v1108
        %v1127 = vunpack.c.l.b16 %v1088
        %v1128 = vunpack.c.l.b16 %v1089
        %v1129 = vunpack.c.l.b16 %v1090
        %v1130 = vunpack.c.l.b16 %v1091
        %v1131 = vunpack.c.l.b16 %v1092
        %v1132 = vunpack.c.l.b16 %v1093
        %v1133 = vunpack.c.l.b16 %v1094
        %v1134 = vunpack.c.l.b16 %v1095
        %v1135 = vunpack.c.l.b16 %v1096
        %v1136 = vunpack.c.l.b16 %v1097
        %v1137 = vunpack.c.l.b16 %v1098
        %v1138 = vunpack.c.l.b16 %v1099
        %v1139 = vunpack.c.l.b16 %v1100
        %v1140 = vunpack.c.l.b16 %v1101
        %v1141 = vunpack.c.l.b16 %v1102
        %v1142 = vunpack.c.l.b16 %v1103
        %v1143 = vpack.c.b16 %v1128, %v1127
        %v1144 = vpack.c.b16 %v1130, %v1129
        %v1145 = vpack.c.b16 %v1132, %v1131
        %v1146 = vpack.c.b16 %v1134, %v1133
        %v1147 = vpack.c.b16 %v1136, %v1135
        %v1148 = vpack.c.b16 %v1138, %v1137
        %v1149 = vpack.c.b16 %v1140, %v1139
        %v1150 = vpack.c.b16 %v1142, %v1141
        %1159 = vmatprep.subr.bf16.mxu0 0
        %1160 = vmatpush1.bf16.msra.mxu0 %v1150
        %1161 = vmatprep.subr.bf16.mxu0 0
        %1162 = vmatpush1.bf16.msra.mxu0 %v1149
        %1163 = vmatprep.subr.bf16.mxu0 0
        %1164 = vmatpush1.bf16.msra.mxu0 %v1148
        %1165 = vmatprep.subr.bf16.mxu0 0
        %1166 = vmatpush1.bf16.msra.mxu0 %v1147
        %1167 = vmatprep.subr.bf16.mxu0 0
        %1168 = vmatpush1.bf16.msra.mxu0 %v1146
        %1169 = vmatprep.subr.bf16.mxu0 0
        %1170 = vmatpush1.bf16.msra.mxu0 %v1145
        %1171 = vmatprep.subr.bf16.mxu0 0
        %1172 = vmatpush1.bf16.msra.mxu0 %v1144
        %1173 = vmatprep.subr.bf16.mxu0 0
        %1174 = vmatpush1.bf16.msra.mxu0 %v1143
        %1175 = vmatprep.subr.bf16.mxu0 0
        %1176 = vmatpush2.bf16.msra.mxu0 0
        %1177 = vmatprep.subr.bf16.mxu0 0
        %1178 = vmatpush2.bf16.msra.mxu0 0
        %1179 = vmatprep.subr.bf16.mxu0 0
        %1180 = vmatpush2.bf16.msra.mxu0 0
        %1181 = vmatprep.subr.bf16.mxu0 0
        %1182 = vmatpush2.bf16.msra.mxu0 0
        %1183 = vmatprep.subr.bf16.mxu0 0
        %1184 = vmatpush2.bf16.msra.mxu0 0
        %1185 = vmatprep.subr.bf16.mxu0 0
        %1186 = vmatpush2.bf16.msra.mxu0 0
        %1187 = vmatprep.subr.bf16.mxu0 0
        %1188 = vmatpush2.bf16.msra.mxu0 0
        %1189 = vmatprep.subr.bf16.mxu0 0
        %1190 = vmatpush2.bf16.msra.mxu0 0
        %1191 = vmatprep.mubr.bf16.mxu0 0
        %1192 = vmatmul.mubr.bf16.gmra.mxu0 %v865
        %v1193 = vpop.f32.mrf.mxu0
        %v1194 = vadd.f32 %v1109, %v1193
        %v1195 = vpop.f32.mrf.mxu0
        %v1196 = vpop.f32.mrf.mxu0
        %v1197 = vpop.f32.mrf.mxu0
        %1198 = vdwg.mxu0
        %1200 = vrot.lane.b32.xlu0 %v972, 96
        %v1201 = vpop.permute.xlu0 %1200
        %1203 = vrot.lane.b32.xlu0 %v972, 64
        %v1204 = vpop.permute.xlu0 %1203
        %1206 = vrot.lane.b32.xlu0 %v972, 32
        %v1207 = vpop.permute.xlu0 %1206
        %v1209 = vcombine.low %v972, %v1204
        %v1210 = vcombine.high %v972, %v1204
        %v1212 = vunpack.c.l.s4 1983009808
        %v1213 = vunpack.c.0.s8 %v1212
        %v1214 = vlaneseq
        %v1215 = vshrl.u32 %v1214, 7
        %v1216 = vsub.s32 %v1213, %v1215
        %v1217 = vrot.slane %v1209, %v1216
        %v1219 = vunpack.c.l.s4 1983009808
        %v1220 = vunpack.c.0.s8 %v1219
        %v1221 = vlaneseq
        %v1222 = vshrl.u32 %v1221, 7
        %v1223 = vsub.s32 %v1220, %v1222
        %v1224 = vrot.slane %v1210, %v1223
        %v1225 = vcombine.low %v1201, %v1207
        %v1226 = vcombine.high %v1201, %v1207
        %v1228 = vunpack.c.l.s4 1983009808
        %v1229 = vunpack.c.0.s8 %v1228
        %v1230 = vlaneseq
        %v1231 = vshrl.u32 %v1230, 7
        %v1232 = vsub.s32 %v1229, %v1231
        %v1233 = vrot.slane %v1225, %v1232
        %v1235 = vunpack.c.l.s4 1983009808
        %v1236 = vunpack.c.0.s8 %v1235
        %v1237 = vlaneseq
        %v1238 = vshrl.u32 %v1237, 7
        %v1239 = vsub.s32 %v1236, %v1238
        %v1240 = vrot.slane %v1226, %v1239
        %v1241 = vcombine.low %v1217, %v1233
        %v1242 = vcombine.high %v1217, %v1233
        %v1244 = vunpack.c.l.s4 1934713408
        %v1245 = vunpack.c.0.s8 %v1244
        %v1246 = vlaneseq
        %v1247 = vshrl.u32 %v1246, 7
        %v1248 = vsub.s32 %v1245, %v1247
        %v1249 = vrot.slane %v1241, %v1248
        %v1251 = vunpack.c.l.s4 1934713408
        %v1252 = vunpack.c.0.s8 %v1251
        %v1253 = vlaneseq
        %v1254 = vshrl.u32 %v1253, 7
        %v1255 = vsub.s32 %v1252, %v1254
        %v1256 = vrot.slane %v1242, %v1255
        %v1257 = vcombine.low %v1224, %v1240
        %v1258 = vcombine.high %v1224, %v1240
        %v1260 = vunpack.c.l.s4 1934713408
        %v1261 = vunpack.c.0.s8 %v1260
        %v1262 = vlaneseq
        %v1263 = vshrl.u32 %v1262, 7
        %v1264 = vsub.s32 %v1261, %v1263
        %v1265 = vrot.slane %v1257, %v1264
        %v1267 = vunpack.c.l.s4 1934713408
        %v1268 = vunpack.c.0.s8 %v1267
        %v1269 = vlaneseq
        %v1270 = vshrl.u32 %v1269, 7
        %v1271 = vsub.s32 %v1268, %v1270
        %v1272 = vrot.slane %v1258, %v1271
        %v1273 = vcombine.high %v1249, 0.0
        %v1274 = vcombine.high %v1256, 0.0
        %v1275 = vcombine.high %v1265, 0.0
        %v1276 = vcombine.high %v1272, 0.0
        %v1277 = vcombine.low %v1249, %v1256
        %v1279 = vunpack.c.l.s4 1983009808
        %v1280 = vunpack.c.0.s8 %v1279
        %v1281 = vlaneseq
        %v1282 = vshrl.u32 %v1281, 7
        %v1283 = vsub.s32 %v1280, %v1282
        %v1284 = vrot.slane %v1277, %v1283
        %v1285 = vcombine.low %v1273, %v1274
        %v1287 = vunpack.c.l.s4 1983009808
        %v1288 = vunpack.c.0.s8 %v1287
        %v1289 = vlaneseq
        %v1290 = vshrl.u32 %v1289, 7
        %v1291 = vsub.s32 %v1288, %v1290
        %v1292 = vrot.slane %v1285, %v1291
        %v1293 = vcombine.low %v1265, %v1272
        %v1295 = vunpack.c.l.s4 1983009808
        %v1296 = vunpack.c.0.s8 %v1295
        %v1297 = vlaneseq
        %v1298 = vshrl.u32 %v1297, 7
        %v1299 = vsub.s32 %v1296, %v1298
        %v1300 = vrot.slane %v1293, %v1299
        %v1301 = vcombine.low %v1275, %v1276
        %v1303 = vunpack.c.l.s4 1983009808
        %v1304 = vunpack.c.0.s8 %v1303
        %v1305 = vlaneseq
        %v1306 = vshrl.u32 %v1305, 7
        %v1307 = vsub.s32 %v1304, %v1306
        %v1308 = vrot.slane %v1301, %v1307
        %v1309 = vcombine.low %v1284, %v1292
        %v1310 = vcombine.high %v1284, %v1292
        %v1312 = vunpack.c.l.s4 1934713408
        %v1313 = vunpack.c.0.s8 %v1312
        %v1314 = vlaneseq
        %v1315 = vshrl.u32 %v1314, 7
        %v1316 = vsub.s32 %v1313, %v1315
        %v1317 = vrot.slane %v1309, %v1316
        %v1319 = vunpack.c.l.s4 1934713408
        %v1320 = vunpack.c.0.s8 %v1319
        %v1321 = vlaneseq
        %v1322 = vshrl.u32 %v1321, 7
        %v1323 = vsub.s32 %v1320, %v1322
        %v1324 = vrot.slane %v1310, %v1323
        %v1325 = vcombine.low %v1300, %v1308
        %v1326 = vcombine.high %v1300, %v1308
        %v1328 = vunpack.c.l.s4 1934713408
        %v1329 = vunpack.c.0.s8 %v1328
        %v1330 = vlaneseq
        %v1331 = vshrl.u32 %v1330, 7
        %v1332 = vsub.s32 %v1329, %v1331
        %v1333 = vrot.slane %v1325, %v1332
        %v1335 = vunpack.c.l.s4 1934713408
        %v1336 = vunpack.c.0.s8 %v1335
        %v1337 = vlaneseq
        %v1338 = vshrl.u32 %v1337, 7
        %v1339 = vsub.s32 %v1336, %v1338
        %v1340 = vrot.slane %v1326, %v1339
        %v1341 = vcombine.low %v1317, %v1333
        %v1342 = vcombine.high %v1317, %v1333
        %v1343 = vcombine.low %v1324, %v1340
        %v1344 = vcombine.high %v1324, %v1340
        %1346 = vrot.lane.b32.xlu0 %v1083, 96
        %v1347 = vpop.permute.xlu0 %1346
        %1349 = vrot.lane.b32.xlu0 %v1083, 64
        %v1350 = vpop.permute.xlu0 %1349
        %1352 = vrot.lane.b32.xlu0 %v1083, 32
        %v1353 = vpop.permute.xlu0 %1352
        %v1355 = vcombine.low %v1083, %v1350
        %v1356 = vcombine.high %v1083, %v1350
        %v1358 = vunpack.c.l.s4 1983009808
        %v1359 = vunpack.c.0.s8 %v1358
        %v1360 = vlaneseq
        %v1361 = vshrl.u32 %v1360, 7
        %v1362 = vsub.s32 %v1359, %v1361
        %v1363 = vrot.slane %v1355, %v1362
        %v1365 = vunpack.c.l.s4 1983009808
        %v1366 = vunpack.c.0.s8 %v1365
        %v1367 = vlaneseq
        %v1368 = vshrl.u32 %v1367, 7
        %v1369 = vsub.s32 %v1366, %v1368
        %v1370 = vrot.slane %v1356, %v1369
        %v1371 = vcombine.low %v1347, %v1353
        %v1372 = vcombine.high %v1347, %v1353
        %v1374 = vunpack.c.l.s4 1983009808
        %v1375 = vunpack.c.0.s8 %v1374
        %v1376 = vlaneseq
        %v1377 = vshrl.u32 %v1376, 7
        %v1378 = vsub.s32 %v1375, %v1377
        %v1379 = vrot.slane %v1371, %v1378
        %v1381 = vunpack.c.l.s4 1983009808
        %v1382 = vunpack.c.0.s8 %v1381
        %v1383 = vlaneseq
        %v1384 = vshrl.u32 %v1383, 7
        %v1385 = vsub.s32 %v1382, %v1384
        %v1386 = vrot.slane %v1372, %v1385
        %v1387 = vcombine.low %v1363, %v1379
        %v1388 = vcombine.high %v1363, %v1379
        %v1390 = vunpack.c.l.s4 1934713408
        %v1391 = vunpack.c.0.s8 %v1390
        %v1392 = vlaneseq
        %v1393 = vshrl.u32 %v1392, 7
        %v1394 = vsub.s32 %v1391, %v1393
        %v1395 = vrot.slane %v1387, %v1394
        %v1397 = vunpack.c.l.s4 1934713408
        %v1398 = vunpack.c.0.s8 %v1397
        %v1399 = vlaneseq
        %v1400 = vshrl.u32 %v1399, 7
        %v1401 = vsub.s32 %v1398, %v1400
        %v1402 = vrot.slane %v1388, %v1401
        %v1403 = vcombine.low %v1370, %v1386
        %v1404 = vcombine.high %v1370, %v1386
        %v1406 = vunpack.c.l.s4 1934713408
        %v1407 = vunpack.c.0.s8 %v1406
        %v1408 = vlaneseq
        %v1409 = vshrl.u32 %v1408, 7
        %v1410 = vsub.s32 %v1407, %v1409
        %v1411 = vrot.slane %v1403, %v1410
        %v1413 = vunpack.c.l.s4 1934713408
        %v1414 = vunpack.c.0.s8 %v1413
        %v1415 = vlaneseq
        %v1416 = vshrl.u32 %v1415, 7
        %v1417 = vsub.s32 %v1414, %v1416
        %v1418 = vrot.slane %v1404, %v1417
        %v1419 = vcombine.high %v1395, 0.0
        %v1420 = vcombine.high %v1402, 0.0
        %v1421 = vcombine.high %v1411, 0.0
        %v1422 = vcombine.high %v1418, 0.0
        %v1423 = vcombine.low %v1395, %v1402
        %v1425 = vunpack.c.l.s4 1983009808
        %v1426 = vunpack.c.0.s8 %v1425
        %v1427 = vlaneseq
        %v1428 = vshrl.u32 %v1427, 7
        %v1429 = vsub.s32 %v1426, %v1428
        %v1430 = vrot.slane %v1423, %v1429
        %v1431 = vcombine.low %v1419, %v1420
        %v1433 = vunpack.c.l.s4 1983009808
        %v1434 = vunpack.c.0.s8 %v1433
        %v1435 = vlaneseq
        %v1436 = vshrl.u32 %v1435, 7
        %v1437 = vsub.s32 %v1434, %v1436
        %v1438 = vrot.slane %v1431, %v1437
        %v1439 = vcombine.low %v1411, %v1418
        %v1441 = vunpack.c.l.s4 1983009808
        %v1442 = vunpack.c.0.s8 %v1441
        %v1443 = vlaneseq
        %v1444 = vshrl.u32 %v1443, 7
        %v1445 = vsub.s32 %v1442, %v1444
        %v1446 = vrot.slane %v1439, %v1445
        %v1447 = vcombine.low %v1421, %v1422
        %v1449 = vunpack.c.l.s4 1983009808
        %v1450 = vunpack.c.0.s8 %v1449
        %v1451 = vlaneseq
        %v1452 = vshrl.u32 %v1451, 7
        %v1453 = vsub.s32 %v1450, %v1452
        %v1454 = vrot.slane %v1447, %v1453
        %v1455 = vcombine.low %v1430, %v1438
        %v1456 = vcombine.high %v1430, %v1438
        %v1458 = vunpack.c.l.s4 1934713408
        %v1459 = vunpack.c.0.s8 %v1458
        %v1460 = vlaneseq
        %v1461 = vshrl.u32 %v1460, 7
        %v1462 = vsub.s32 %v1459, %v1461
        %v1463 = vrot.slane %v1455, %v1462
        %v1465 = vunpack.c.l.s4 1934713408
        %v1466 = vunpack.c.0.s8 %v1465
        %v1467 = vlaneseq
        %v1468 = vshrl.u32 %v1467, 7
        %v1469 = vsub.s32 %v1466, %v1468
        %v1470 = vrot.slane %v1456, %v1469
        %v1471 = vcombine.low %v1446, %v1454
        %v1472 = vcombine.high %v1446, %v1454
        %v1474 = vunpack.c.l.s4 1934713408
        %v1475 = vunpack.c.0.s8 %v1474
        %v1476 = vlaneseq
        %v1477 = vshrl.u32 %v1476, 7
        %v1478 = vsub.s32 %v1475, %v1477
        %v1479 = vrot.slane %v1471, %v1478
        %v1481 = vunpack.c.l.s4 1934713408
        %v1482 = vunpack.c.0.s8 %v1481
        %v1483 = vlaneseq
        %v1484 = vshrl.u32 %v1483, 7
        %v1485 = vsub.s32 %v1482, %v1484
        %v1486 = vrot.slane %v1472, %v1485
        %v1487 = vcombine.low %v1463, %v1479
        %v1488 = vcombine.high %v1463, %v1479
        %v1489 = vcombine.low %v1470, %v1486
        %v1490 = vcombine.high %v1470, %v1486
        %1492 = vrot.lane.b32.xlu0 %v1194, 96
        %v1493 = vpop.permute.xlu0 %1492
        %1495 = vrot.lane.b32.xlu0 %v1194, 64
        %v1496 = vpop.permute.xlu0 %1495
        %1498 = vrot.lane.b32.xlu0 %v1194, 32
        %v1499 = vpop.permute.xlu0 %1498
        %v1501 = vcombine.low %v1194, %v1496
        %v1502 = vcombine.high %v1194, %v1496
        %v1504 = vunpack.c.l.s4 1983009808
        %v1505 = vunpack.c.0.s8 %v1504
        %v1506 = vlaneseq
        %v1507 = vshrl.u32 %v1506, 7
        %v1508 = vsub.s32 %v1505, %v1507
        %v1509 = vrot.slane %v1501, %v1508
        %v1511 = vunpack.c.l.s4 1983009808
        %v1512 = vunpack.c.0.s8 %v1511
        %v1513 = vlaneseq
        %v1514 = vshrl.u32 %v1513, 7
        %v1515 = vsub.s32 %v1512, %v1514
        %v1516 = vrot.slane %v1502, %v1515
        %v1517 = vcombine.low %v1493, %v1499
        %v1518 = vcombine.high %v1493, %v1499
        %v1520 = vunpack.c.l.s4 1983009808
        %v1521 = vunpack.c.0.s8 %v1520
        %v1522 = vlaneseq
        %v1523 = vshrl.u32 %v1522, 7
        %v1524 = vsub.s32 %v1521, %v1523
        %v1525 = vrot.slane %v1517, %v1524
        %v1527 = vunpack.c.l.s4 1983009808
        %v1528 = vunpack.c.0.s8 %v1527
        %v1529 = vlaneseq
        %v1530 = vshrl.u32 %v1529, 7
        %v1531 = vsub.s32 %v1528, %v1530
        %v1532 = vrot.slane %v1518, %v1531
        %v1533 = vcombine.low %v1509, %v1525
        %v1534 = vcombine.high %v1509, %v1525
        %v1536 = vunpack.c.l.s4 1934713408
        %v1537 = vunpack.c.0.s8 %v1536
        %v1538 = vlaneseq
        %v1539 = vshrl.u32 %v1538, 7
        %v1540 = vsub.s32 %v1537, %v1539
        %v1541 = vrot.slane %v1533, %v1540
        %v1543 = vunpack.c.l.s4 1934713408
        %v1544 = vunpack.c.0.s8 %v1543
        %v1545 = vlaneseq
        %v1546 = vshrl.u32 %v1545, 7
        %v1547 = vsub.s32 %v1544, %v1546
        %v1548 = vrot.slane %v1534, %v1547
        %v1549 = vcombine.low %v1516, %v1532
        %v1550 = vcombine.high %v1516, %v1532
        %v1552 = vunpack.c.l.s4 1934713408
        %v1553 = vunpack.c.0.s8 %v1552
        %v1554 = vlaneseq
        %v1555 = vshrl.u32 %v1554, 7
        %v1556 = vsub.s32 %v1553, %v1555
        %v1557 = vrot.slane %v1549, %v1556
        %v1559 = vunpack.c.l.s4 1934713408
        %v1560 = vunpack.c.0.s8 %v1559
        %v1561 = vlaneseq
        %v1562 = vshrl.u32 %v1561, 7
        %v1563 = vsub.s32 %v1560, %v1562
        %v1564 = vrot.slane %v1550, %v1563
        %v1565 = vcombine.high %v1541, 0.0
        %v1566 = vcombine.high %v1548, 0.0
        %v1567 = vcombine.high %v1557, 0.0
        %v1568 = vcombine.high %v1564, 0.0
        %v1569 = vcombine.low %v1541, %v1548
        %v1571 = vunpack.c.l.s4 1983009808
        %v1572 = vunpack.c.0.s8 %v1571
        %v1573 = vlaneseq
        %v1574 = vshrl.u32 %v1573, 7
        %v1575 = vsub.s32 %v1572, %v1574
        %v1576 = vrot.slane %v1569, %v1575
        %v1577 = vcombine.low %v1565, %v1566
        %v1579 = vunpack.c.l.s4 1983009808
        %v1580 = vunpack.c.0.s8 %v1579
        %v1581 = vlaneseq
        %v1582 = vshrl.u32 %v1581, 7
        %v1583 = vsub.s32 %v1580, %v1582
        %v1584 = vrot.slane %v1577, %v1583
        %v1585 = vcombine.low %v1557, %v1564
        %v1587 = vunpack.c.l.s4 1983009808
        %v1588 = vunpack.c.0.s8 %v1587
        %v1589 = vlaneseq
        %v1590 = vshrl.u32 %v1589, 7
        %v1591 = vsub.s32 %v1588, %v1590
        %v1592 = vrot.slane %v1585, %v1591
        %v1593 = vcombine.low %v1567, %v1568
        %v1595 = vunpack.c.l.s4 1983009808
        %v1596 = vunpack.c.0.s8 %v1595
        %v1597 = vlaneseq
        %v1598 = vshrl.u32 %v1597, 7
        %v1599 = vsub.s32 %v1596, %v1598
        %v1600 = vrot.slane %v1593, %v1599
        %v1601 = vcombine.low %v1576, %v1584
        %v1602 = vcombine.high %v1576, %v1584
        %v1604 = vunpack.c.l.s4 1934713408
        %v1605 = vunpack.c.0.s8 %v1604
        %v1606 = vlaneseq
        %v1607 = vshrl.u32 %v1606, 7
        %v1608 = vsub.s32 %v1605, %v1607
        %v1609 = vrot.slane %v1601, %v1608
        %v1611 = vunpack.c.l.s4 1934713408
        %v1612 = vunpack.c.0.s8 %v1611
        %v1613 = vlaneseq
        %v1614 = vshrl.u32 %v1613, 7
        %v1615 = vsub.s32 %v1612, %v1614
        %v1616 = vrot.slane %v1602, %v1615
        %v1617 = vcombine.low %v1592, %v1600
        %v1618 = vcombine.high %v1592, %v1600
        %v1620 = vunpack.c.l.s4 1934713408
        %v1621 = vunpack.c.0.s8 %v1620
        %v1622 = vlaneseq
        %v1623 = vshrl.u32 %v1622, 7
        %v1624 = vsub.s32 %v1621, %v1623
        %v1625 = vrot.slane %v1617, %v1624
        %v1627 = vunpack.c.l.s4 1934713408
        %v1628 = vunpack.c.0.s8 %v1627
        %v1629 = vlaneseq
        %v1630 = vshrl.u32 %v1629, 7
        %v1631 = vsub.s32 %v1628, %v1630
        %v1632 = vrot.slane %v1618, %v1631
        %v1633 = vcombine.low %v1609, %v1625
        %v1634 = vcombine.high %v1609, %v1625
        %v1635 = vcombine.low %v1616, %v1632
        %v1636 = vcombine.high %v1616, %v1632
        %v1637 = vpack.c.bf16 %v1341, %v1341
        %v1638 = vpack.c.bf16 %v1342, %v1342
        %v1639 = vpack.c.bf16 %v1343, %v1343
        %v1640 = vpack.c.bf16 %v1344, %v1344
        %v1641 = vpack.c.bf16 %v1487, %v1487
        %v1642 = vpack.c.bf16 %v1488, %v1488
        %v1643 = vpack.c.bf16 %v1489, %v1489
        %v1644 = vpack.c.bf16 %v1490, %v1490
        %vm1645 = vcmask 261120
        %v1647 = vsel %vm1645, %v1637, 0
        %v1650 = vsel %vm1645, %v1641, 0
        %1652 = vmatprep.subr.bf16.mxu0 0
        %1653 = vmatpush1.bf16.xpose.msra.mxu0 0
        %1654 = vmatprep.subr.bf16.mxu0 0
        %1655 = vmatpush1.bf16.xpose.msra.mxu0 0
        %1656 = vmatprep.subr.bf16.mxu0 0
        %1657 = vmatpush1.bf16.xpose.msra.mxu0 0
        %1658 = vmatprep.subr.bf16.mxu0 0
        %1659 = vmatpush1.bf16.xpose.msra.mxu0 0
        %1660 = vmatprep.subr.bf16.mxu0 0
        %1661 = vmatpush1.bf16.xpose.msra.mxu0 0
        %1662 = vmatprep.subr.bf16.mxu0 0
        %1663 = vmatpush1.bf16.xpose.msra.mxu0 0
        %1664 = vmatprep.subr.bf16.mxu0 0
        %1665 = vmatpush1.bf16.xpose.msra.mxu0 0
        %1666 = vmatprep.subr.bf16.mxu0 0
        %1667 = vmatpush1.bf16.xpose.msra.mxu0 %v1650
        %1668 = vmatprep.subr.bf16.mxu0 0
        %1669 = vmatpush2.bf16.xpose.msra.mxu0 0
        %1670 = vmatprep.subr.bf16.mxu0 0
        %1671 = vmatpush2.bf16.xpose.msra.mxu0 0
        %1672 = vmatprep.subr.bf16.mxu0 0
        %1673 = vmatpush2.bf16.xpose.msra.mxu0 0
        %1674 = vmatprep.subr.bf16.mxu0 0
        %1675 = vmatpush2.bf16.xpose.msra.mxu0 0
        %1676 = vmatprep.subr.bf16.mxu0 0
        %1677 = vmatpush2.bf16.xpose.msra.mxu0 0
        %1678 = vmatprep.subr.bf16.mxu0 0
        %1679 = vmatpush2.bf16.xpose.msra.mxu0 0
        %1680 = vmatprep.subr.bf16.mxu0 0
        %1681 = vmatpush2.bf16.xpose.msra.mxu0 0
        %1682 = vmatprep.subr.bf16.mxu0 0
        %1683 = vmatpush2.bf16.xpose.msra.mxu0 0
        %1684 = vmatprep.mubr.bf16.mxu0 0
        %1685 = vmatmul.mubr.bf16.gmra.mxu0 %v1647
        %v1686 = vpop.f32.mrf.mxu0
        %v1687 = vadd.f32 0.0, %v1686
        %v1688 = vpop.f32.mrf.mxu0
        %v1689 = vpop.f32.mrf.mxu0
        %v1690 = vpop.f32.mrf.mxu0
        %1691 = vdwg.mxu0
        %v1693 = vsel %vm1645, %v1638, 0
        %v1696 = vsel %vm1645, %v1642, 0
        %1698 = vmatprep.subr.bf16.mxu0 0
        %1699 = vmatpush1.bf16.xpose.msra.mxu0 0
        %1700 = vmatprep.subr.bf16.mxu0 0
        %1701 = vmatpush1.bf16.xpose.msra.mxu0 0
        %1702 = vmatprep.subr.bf16.mxu0 0
        %1703 = vmatpush1.bf16.xpose.msra.mxu0 0
        %1704 = vmatprep.subr.bf16.mxu0 0
        %1705 = vmatpush1.bf16.xpose.msra.mxu0 0
        %1706 = vmatprep.subr.bf16.mxu0 0
        %1707 = vmatpush1.bf16.xpose.msra.mxu0 0
        %1708 = vmatprep.subr.bf16.mxu0 0
        %1709 = vmatpush1.bf16.xpose.msra.mxu0 0
        %1710 = vmatprep.subr.bf16.mxu0 0
        %1711 = vmatpush1.bf16.xpose.msra.mxu0 0
        %1712 = vmatprep.subr.bf16.mxu0 0
        %1713 = vmatpush1.bf16.xpose.msra.mxu0 %v1696
        %1714 = vmatprep.subr.bf16.mxu0 0
        %1715 = vmatpush2.bf16.xpose.msra.mxu0 0
        %1716 = vmatprep.subr.bf16.mxu0 0
        %1717 = vmatpush2.bf16.xpose.msra.mxu0 0
        %1718 = vmatprep.subr.bf16.mxu0 0
        %1719 = vmatpush2.bf16.xpose.msra.mxu0 0
        %1720 = vmatprep.subr.bf16.mxu0 0
        %1721 = vmatpush2.bf16.xpose.msra.mxu0 0
        %1722 = vmatprep.subr.bf16.mxu0 0
        %1723 = vmatpush2.bf16.xpose.msra.mxu0 0
        %1724 = vmatprep.subr.bf16.mxu0 0
        %1725 = vmatpush2.bf16.xpose.msra.mxu0 0
        %1726 = vmatprep.subr.bf16.mxu0 0
        %1727 = vmatpush2.bf16.xpose.msra.mxu0 0
        %1728 = vmatprep.subr.bf16.mxu0 0
        %1729 = vmatpush2.bf16.xpose.msra.mxu0 0
        %1730 = vmatprep.mubr.bf16.mxu0 0
        %1731 = vmatmul.mubr.bf16.gmra.mxu0 %v1693
        %v1732 = vpop.f32.mrf.mxu0
        %v1733 = vadd.f32 0.0, %v1732
        %v1734 = vpop.f32.mrf.mxu0
        %v1735 = vpop.f32.mrf.mxu0
        %v1736 = vpop.f32.mrf.mxu0
        %1737 = vdwg.mxu0
        %v1739 = vsel %vm1645, %v1639, 0
        %v1742 = vsel %vm1645, %v1643, 0
        %1744 = vmatprep.subr.bf16.mxu0 0
        %1745 = vmatpush1.bf16.xpose.msra.mxu0 0
        %1746 = vmatprep.subr.bf16.mxu0 0
        %1747 = vmatpush1.bf16.xpose.msra.mxu0 0
        %1748 = vmatprep.subr.bf16.mxu0 0
        %1749 = vmatpush1.bf16.xpose.msra.mxu0 0
        %1750 = vmatprep.subr.bf16.mxu0 0
        %1751 = vmatpush1.bf16.xpose.msra.mxu0 0
        %1752 = vmatprep.subr.bf16.mxu0 0
        %1753 = vmatpush1.bf16.xpose.msra.mxu0 0
        %1754 = vmatprep.subr.bf16.mxu0 0
        %1755 = vmatpush1.bf16.xpose.msra.mxu0 0
        %1756 = vmatprep.subr.bf16.mxu0 0
        %1757 = vmatpush1.bf16.xpose.msra.mxu0 0
        %1758 = vmatprep.subr.bf16.mxu0 0
        %1759 = vmatpush1.bf16.xpose.msra.mxu0 %v1742
        %1760 = vmatprep.subr.bf16.mxu0 0
        %1761 = vmatpush2.bf16.xpose.msra.mxu0 0
        %1762 = vmatprep.subr.bf16.mxu0 0
        %1763 = vmatpush2.bf16.xpose.msra.mxu0 0
        %1764 = vmatprep.subr.bf16.mxu0 0
        %1765 = vmatpush2.bf16.xpose.msra.mxu0 0
        %1766 = vmatprep.subr.bf16.mxu0 0
        %1767 = vmatpush2.bf16.xpose.msra.mxu0 0
        %1768 = vmatprep.subr.bf16.mxu0 0
        %1769 = vmatpush2.bf16.xpose.msra.mxu0 0
        %1770 = vmatprep.subr.bf16.mxu0 0
        %1771 = vmatpush2.bf16.xpose.msra.mxu0 0
        %1772 = vmatprep.subr.bf16.mxu0 0
        %1773 = vmatpush2.bf16.xpose.msra.mxu0 0
        %1774 = vmatprep.subr.bf16.mxu0 0
        %1775 = vmatpush2.bf16.xpose.msra.mxu0 0
        %1776 = vmatprep.mubr.bf16.mxu0 0
        %1777 = vmatmul.mubr.bf16.gmra.mxu0 %v1739
        %v1778 = vpop.f32.mrf.mxu0
        %v1779 = vadd.f32 0.0, %v1778
        %v1780 = vpop.f32.mrf.mxu0
        %v1781 = vpop.f32.mrf.mxu0
        %v1782 = vpop.f32.mrf.mxu0
        %1783 = vdwg.mxu0
        %v1785 = vsel %vm1645, %v1640, 0
        %v1788 = vsel %vm1645, %v1644, 0
        %1790 = vmatprep.subr.bf16.mxu0 0
        %1791 = vmatpush1.bf16.xpose.msra.mxu0 0
        %1792 = vmatprep.subr.bf16.mxu0 0
        %1793 = vmatpush1.bf16.xpose.msra.mxu0 0
        %1794 = vmatprep.subr.bf16.mxu0 0
        %1795 = vmatpush1.bf16.xpose.msra.mxu0 0
        %1796 = vmatprep.subr.bf16.mxu0 0
        %1797 = vmatpush1.bf16.xpose.msra.mxu0 0
        %1798 = vmatprep.subr.bf16.mxu0 0
        %1799 = vmatpush1.bf16.xpose.msra.mxu0 0
        %1800 = vmatprep.subr.bf16.mxu0 0
        %1801 = vmatpush1.bf16.xpose.msra.mxu0 0
        %1802 = vmatprep.subr.bf16.mxu0 0
        %1803 = vmatpush1.bf16.xpose.msra.mxu0 0
        %1804 = vmatprep.subr.bf16.mxu0 0
        %1805 = vmatpush1.bf16.xpose.msra.mxu0 %v1788
        %1806 = vmatprep.subr.bf16.mxu0 0
        %1807 = vmatpush2.bf16.xpose.msra.mxu0 0
        %1808 = vmatprep.subr.bf16.mxu0 0
        %1809 = vmatpush2.bf16.xpose.msra.mxu0 0
        %1810 = vmatprep.subr.bf16.mxu0 0
        %1811 = vmatpush2.bf16.xpose.msra.mxu0 0
        %1812 = vmatprep.subr.bf16.mxu0 0
        %1813 = vmatpush2.bf16.xpose.msra.mxu0 0
        %1814 = vmatprep.subr.bf16.mxu0 0
        %1815 = vmatpush2.bf16.xpose.msra.mxu0 0
        %1816 = vmatprep.subr.bf16.mxu0 0
        %1817 = vmatpush2.bf16.xpose.msra.mxu0 0
        %1818 = vmatprep.subr.bf16.mxu0 0
        %1819 = vmatpush2.bf16.xpose.msra.mxu0 0
        %1820 = vmatprep.subr.bf16.mxu0 0
        %1821 = vmatpush2.bf16.xpose.msra.mxu0 0
        %1822 = vmatprep.mubr.bf16.mxu0 0
        %1823 = vmatmul.mubr.bf16.gmra.mxu0 %v1785
        %v1824 = vpop.f32.mrf.mxu0
        %v1825 = vadd.f32 0.0, %v1824
        %v1826 = vpop.f32.mrf.mxu0
        %v1827 = vpop.f32.mrf.mxu0
        %v1828 = vpop.f32.mrf.mxu0
        %1829 = vdwg.mxu0
        %v1830 = vmul.f32 %v1687, 0.17677669
        %v1831 = vmul.f32 %v1733, 0.17677669
        %v1832 = vmul.f32 %v1779, 0.17677669
        %v1833 = vmul.f32 %v1825, 0.17677669
        %v1834 = vld [vmem:[%s820] sm:$0x1]
        %v1836 = vlaneseq
        %v1837 = vshrl.u32 %v1836, 7
        %v1838 = vsub.s32 0, %v1837
        %v1839 = vrot.slane %v1834, %v1838
        %v1841 = vadd.f32 %v1830, %v1839
        %v1842 = vadd.f32 %v1831, %v1839
        %v1843 = vadd.f32 %v1832, %v1839
        %v1844 = vadd.f32 %v1833, %v1839
        %vm1845 = vcmask 64512
        %v1846 = vsel %vm1845, %v1841, -inf
        %1847 = vmax.xlane.f32.xlu0 %v1846
        %v1848 = vpop.xlane.xlu0 %1847
        %v1849 = vsel %vm1845, %v1842, -inf
        %1850 = vmax.xlane.f32.xlu0 %v1849
        %v1851 = vpop.xlane.xlu0 %1850
        %v1852 = vsel %vm1845, %v1843, -inf
        %1853 = vmax.xlane.f32.xlu0 %v1852
        %v1854 = vpop.xlane.xlu0 %1853
        %v1855 = vsel %vm1845, %v1844, -inf
        %1856 = vmax.xlane.f32.xlu0 %v1855
        %v1857 = vpop.xlane.xlu0 %1856
        %v1858 = vsub.f32 %v1841, %v1848
        %v1859 = vsub.f32 %v1842, %v1851
        %v1860 = vsub.f32 %v1843, %v1854
        %v1861 = vsub.f32 %v1844, %v1857
        %v1862 = vmul.f32 %v1858, 1.442695
        %v1863 = vpow.pop %v1862
        %v1864 = vmul.f32 %v1859, 1.442695
        %v1865 = vpow.pop %v1864
        %v1866 = vmul.f32 %v1860, 1.442695
        %v1867 = vpow.pop %v1866
        %v1868 = vmul.f32 %v1861, 1.442695
        %v1869 = vpow.pop %v1868
        %v1870 = vsel %vm1845, %v1863, 0.0
        %1871 = vadd.xlane.f32.xlu0 %v1870
        %v1872 = vpop.xlane.xlu0 %1871
        %v1873 = vsel %vm1845, %v1865, 0.0
        %1874 = vadd.xlane.f32.xlu0 %v1873
        %v1875 = vpop.xlane.xlu0 %1874
        %v1876 = vsel %vm1845, %v1867, 0.0
        %1877 = vadd.xlane.f32.xlu0 %v1876
        %v1878 = vpop.xlane.xlu0 %1877
        %v1879 = vsel %vm1845, %v1869, 0.0
        %1880 = vadd.xlane.f32.xlu0 %v1879
        %v1881 = vpop.xlane.xlu0 %1880
        %v1882 = vrcp.pop %v1872
        %v1883 = vrcp.pop %v1875
        %v1884 = vrcp.pop %v1878
        %v1885 = vrcp.pop %v1881
        %v1886 = vmul.f32 %v1863, %v1882
        %v1887 = vmul.f32 %v1865, %v1883
        %v1888 = vmul.f32 %v1867, %v1884
        %v1889 = vmul.f32 %v1869, %v1885
        %v1890 = vpack.c.bf16 %v1886, %v1886
        %v1891 = vpack.c.bf16 %v1887, %v1887
        %v1892 = vpack.c.bf16 %v1888, %v1888
        %v1893 = vpack.c.bf16 %v1889, %v1889
        %v1894 = vpack.c.bf16 %v1633, %v1633
        %v1895 = vpack.c.bf16 %v1634, %v1634
        %v1896 = vpack.c.bf16 %v1635, %v1635
        %v1897 = vpack.c.bf16 %v1636, %v1636
        %v1899 = vsel %vm1845, %v1890, 0
        %vm1901 = vcmask 1043456
        %v1903 = vsel %vm1901, %v1894, 0
        %1905 = vmatprep.subr.bf16.mxu0 0
        %1906 = vmatpush1.bf16.msra.mxu0 0
        %1907 = vmatprep.subr.bf16.mxu0 0
        %1908 = vmatpush1.bf16.msra.mxu0 0
        %1909 = vmatprep.subr.bf16.mxu0 0
        %1910 = vmatpush1.bf16.msra.mxu0 0
        %1911 = vmatprep.subr.bf16.mxu0 0
        %1912 = vmatpush1.bf16.msra.mxu0 0
        %1913 = vmatprep.subr.bf16.mxu0 0
        %1914 = vmatpush1.bf16.msra.mxu0 0
        %1915 = vmatprep.subr.bf16.mxu0 0
        %1916 = vmatpush1.bf16.msra.mxu0 0
        %1917 = vmatprep.subr.bf16.mxu0 0
        %1918 = vmatpush1.bf16.msra.mxu0 0
        %1919 = vmatprep.subr.bf16.mxu0 0
        %1920 = vmatpush1.bf16.msra.mxu0 %v1903
        %1921 = vmatprep.subr.bf16.mxu0 0
        %1922 = vmatpush2.bf16.msra.mxu0 0
        %1923 = vmatprep.subr.bf16.mxu0 0
        %1924 = vmatpush2.bf16.msra.mxu0 0
        %1925 = vmatprep.subr.bf16.mxu0 0
        %1926 = vmatpush2.bf16.msra.mxu0 0
        %1927 = vmatprep.subr.bf16.mxu0 0
        %1928 = vmatpush2.bf16.msra.mxu0 0
        %1929 = vmatprep.subr.bf16.mxu0 0
        %1930 = vmatpush2.bf16.msra.mxu0 0
        %1931 = vmatprep.subr.bf16.mxu0 0
        %1932 = vmatpush2.bf16.msra.mxu0 0
        %1933 = vmatprep.subr.bf16.mxu0 0
        %1934 = vmatpush2.bf16.msra.mxu0 0
        %1935 = vmatprep.subr.bf16.mxu0 0
        %1936 = vmatpush2.bf16.msra.mxu0 0
        %1937 = vmatprep.mubr.bf16.mxu0 0
        %1938 = vmatmul.mubr.bf16.gmra.mxu0 %v1899
        %v1939 = vpop.f32.mrf.mxu0
        %v1940 = vadd.f32 0.0, %v1939
        %v1941 = vpop.f32.mrf.mxu0
        %v1942 = vpop.f32.mrf.mxu0
        %v1943 = vpop.f32.mrf.mxu0
        %1944 = vdwg.mxu0
        %v1946 = vsel %vm1845, %v1891, 0
        %v1949 = vsel %vm1901, %v1895, 0
        %1951 = vmatprep.subr.bf16.mxu0 0
        %1952 = vmatpush1.bf16.msra.mxu0 0
        %1953 = vmatprep.subr.bf16.mxu0 0
        %1954 = vmatpush1.bf16.msra.mxu0 0
        %1955 = vmatprep.subr.bf16.mxu0 0
        %1956 = vmatpush1.bf16.msra.mxu0 0
        %1957 = vmatprep.subr.bf16.mxu0 0
        %1958 = vmatpush1.bf16.msra.mxu0 0
        %1959 = vmatprep.subr.bf16.mxu0 0
        %1960 = vmatpush1.bf16.msra.mxu0 0
        %1961 = vmatprep.subr.bf16.mxu0 0
        %1962 = vmatpush1.bf16.msra.mxu0 0
        %1963 = vmatprep.subr.bf16.mxu0 0
        %1964 = vmatpush1.bf16.msra.mxu0 0
        %1965 = vmatprep.subr.bf16.mxu0 0
        %1966 = vmatpush1.bf16.msra.mxu0 %v1949
        %1967 = vmatprep.subr.bf16.mxu0 0
        %1968 = vmatpush2.bf16.msra.mxu0 0
        %1969 = vmatprep.subr.bf16.mxu0 0
        %1970 = vmatpush2.bf16.msra.mxu0 0
        %1971 = vmatprep.subr.bf16.mxu0 0
        %1972 = vmatpush2.bf16.msra.mxu0 0
        %1973 = vmatprep.subr.bf16.mxu0 0
        %1974 = vmatpush2.bf16.msra.mxu0 0
        %1975 = vmatprep.subr.bf16.mxu0 0
        %1976 = vmatpush2.bf16.msra.mxu0 0
        %1977 = vmatprep.subr.bf16.mxu0 0
        %1978 = vmatpush2.bf16.msra.mxu0 0
        %1979 = vmatprep.subr.bf16.mxu0 0
        %1980 = vmatpush2.bf16.msra.mxu0 0
        %1981 = vmatprep.subr.bf16.mxu0 0
        %1982 = vmatpush2.bf16.msra.mxu0 0
        %1983 = vmatprep.mubr.bf16.mxu0 0
        %1984 = vmatmul.mubr.bf16.gmra.mxu0 %v1946
        %v1985 = vpop.f32.mrf.mxu0
        %v1986 = vadd.f32 0.0, %v1985
        %v1987 = vpop.f32.mrf.mxu0
        %v1988 = vpop.f32.mrf.mxu0
        %v1989 = vpop.f32.mrf.mxu0
        %1990 = vdwg.mxu0
        %v1992 = vsel %vm1845, %v1892, 0
        %v1995 = vsel %vm1901, %v1896, 0
        %1997 = vmatprep.subr.bf16.mxu0 0
        %1998 = vmatpush1.bf16.msra.mxu0 0
        %1999 = vmatprep.subr.bf16.mxu0 0
        %2000 = vmatpush1.bf16.msra.mxu0 0
        %2001 = vmatprep.subr.bf16.mxu0 0
        %2002 = vmatpush1.bf16.msra.mxu0 0
        %2003 = vmatprep.subr.bf16.mxu0 0
        %2004 = vmatpush1.bf16.msra.mxu0 0
        %2005 = vmatprep.subr.bf16.mxu0 0
        %2006 = vmatpush1.bf16.msra.mxu0 0
        %2007 = vmatprep.subr.bf16.mxu0 0
        %2008 = vmatpush1.bf16.msra.mxu0 0
        %2009 = vmatprep.subr.bf16.mxu0 0
        %2010 = vmatpush1.bf16.msra.mxu0 0
        %2011 = vmatprep.subr.bf16.mxu0 0
        %2012 = vmatpush1.bf16.msra.mxu0 %v1995
        %2013 = vmatprep.subr.bf16.mxu0 0
        %2014 = vmatpush2.bf16.msra.mxu0 0
        %2015 = vmatprep.subr.bf16.mxu0 0
        %2016 = vmatpush2.bf16.msra.mxu0 0
        %2017 = vmatprep.subr.bf16.mxu0 0
        %2018 = vmatpush2.bf16.msra.mxu0 0
        %2019 = vmatprep.subr.bf16.mxu0 0
        %2020 = vmatpush2.bf16.msra.mxu0 0
        %2021 = vmatprep.subr.bf16.mxu0 0
        %2022 = vmatpush2.bf16.msra.mxu0 0
        %2023 = vmatprep.subr.bf16.mxu0 0
        %2024 = vmatpush2.bf16.msra.mxu0 0
        %2025 = vmatprep.subr.bf16.mxu0 0
        %2026 = vmatpush2.bf16.msra.mxu0 0
        %2027 = vmatprep.subr.bf16.mxu0 0
        %2028 = vmatpush2.bf16.msra.mxu0 0
        %2029 = vmatprep.mubr.bf16.mxu0 0
        %2030 = vmatmul.mubr.bf16.gmra.mxu0 %v1992
        %v2031 = vpop.f32.mrf.mxu0
        %v2032 = vadd.f32 0.0, %v2031
        %v2033 = vpop.f32.mrf.mxu0
        %v2034 = vpop.f32.mrf.mxu0
        %v2035 = vpop.f32.mrf.mxu0
        %2036 = vdwg.mxu0
        %v2038 = vsel %vm1845, %v1893, 0
        %v2041 = vsel %vm1901, %v1897, 0
        %2043 = vmatprep.subr.bf16.mxu0 0
        %2044 = vmatpush1.bf16.msra.mxu0 0
        %2045 = vmatprep.subr.bf16.mxu0 0
        %2046 = vmatpush1.bf16.msra.mxu0 0
        %2047 = vmatprep.subr.bf16.mxu0 0
        %2048 = vmatpush1.bf16.msra.mxu0 0
        %2049 = vmatprep.subr.bf16.mxu0 0
        %2050 = vmatpush1.bf16.msra.mxu0 0
        %2051 = vmatprep.subr.bf16.mxu0 0
        %2052 = vmatpush1.bf16.msra.mxu0 0
        %2053 = vmatprep.subr.bf16.mxu0 0
        %2054 = vmatpush1.bf16.msra.mxu0 0
        %2055 = vmatprep.subr.bf16.mxu0 0
        %2056 = vmatpush1.bf16.msra.mxu0 0
        %2057 = vmatprep.subr.bf16.mxu0 0
        %2058 = vmatpush1.bf16.msra.mxu0 %v2041
        %2059 = vmatprep.subr.bf16.mxu0 0
        %2060 = vmatpush2.bf16.msra.mxu0 0
        %2061 = vmatprep.subr.bf16.mxu0 0
        %2062 = vmatpush2.bf16.msra.mxu0 0
        %2063 = vmatprep.subr.bf16.mxu0 0
        %2064 = vmatpush2.bf16.msra.mxu0 0
        %2065 = vmatprep.subr.bf16.mxu0 0
        %2066 = vmatpush2.bf16.msra.mxu0 0
        %2067 = vmatprep.subr.bf16.mxu0 0
        %2068 = vmatpush2.bf16.msra.mxu0 0
        %2069 = vmatprep.subr.bf16.mxu0 0
        %2070 = vmatpush2.bf16.msra.mxu0 0
        %2071 = vmatprep.subr.bf16.mxu0 0
        %2072 = vmatpush2.bf16.msra.mxu0 0
        %2073 = vmatprep.subr.bf16.mxu0 0
        %2074 = vmatpush2.bf16.msra.mxu0 0
        %2075 = vmatprep.mubr.bf16.mxu0 0
        %2076 = vmatmul.mubr.bf16.gmra.mxu0 %v2038
        %v2077 = vpop.f32.mrf.mxu0
        %v2078 = vadd.f32 0.0, %v2077
        %v2079 = vpop.f32.mrf.mxu0
        %v2080 = vpop.f32.mrf.mxu0
        %v2081 = vpop.f32.mrf.mxu0
        %2082 = vdwg.mxu0
        %v2083 = vpack.c.bf16 %v1940, %v1940
        %v2084 = vpack.c.bf16 %v1986, %v1986
        %v2085 = vpack.c.bf16 %v2032, %v2032
        %v2086 = vpack.c.bf16 %v2078, %v2078
        %v2087 = vld [vmem:[#allocation7] sm:$0xf]
        %v2088 = vld [vmem:[#allocation7 + $0x4] sm:$0xf]
        %v2089 = vld [vmem:[#allocation7 + $0x8] sm:$0xf]
        %v2090 = vld [vmem:[#allocation7 + $0xc] sm:$0xf]
        %v2091 = vld [vmem:[#allocation7 + $0x10] sm:$0xf]
        %v2092 = vld [vmem:[#allocation7 + $0x14] sm:$0xf]
        %v2093 = vld [vmem:[#allocation7 + $0x18] sm:$0xf]
        %v2094 = vld [vmem:[#allocation7 + $0x1c] sm:$0xf]
        %v2095 = vld [vmem:[#allocation7 + $0x20] sm:$0xf]
        %v2096 = vld [vmem:[#allocation7 + $0x24] sm:$0xf]
        %v2097 = vld [vmem:[#allocation7 + $0x28] sm:$0xf]
        %v2098 = vld [vmem:[#allocation7 + $0x2c] sm:$0xf]
        %v2099 = vld [vmem:[#allocation7 + $0x30] sm:$0xf]
        %v2100 = vld [vmem:[#allocation7 + $0x34] sm:$0xf]
        %v2101 = vld [vmem:[#allocation7 + $0x38] sm:$0xf]
        %v2102 = vld [vmem:[#allocation7 + $0x3c] sm:$0xf]
        %v2107 = vunpack.c.l.b16 %v2087
        %v2108 = vunpack.c.l.b16 %v2088
        %v2109 = vunpack.c.l.b16 %v2089
        %v2110 = vunpack.c.l.b16 %v2090
        %v2111 = vpack.c.b16 %v2108, %v2107
        %v2112 = vpack.c.b16 %v2110, %v2109
        %v2116 = vsel %vm1645, %v2083, 0
        %2118 = vmatprep.subr.bf16.mxu0 0
        %2119 = vmatpush1.bf16.msra.mxu0 0
        %2120 = vmatprep.subr.bf16.mxu0 0
        %2121 = vmatpush1.bf16.msra.mxu0 0
        %2122 = vmatprep.subr.bf16.mxu0 0
        %2123 = vmatpush1.bf16.msra.mxu0 0
        %2124 = vmatprep.subr.bf16.mxu0 0
        %2125 = vmatpush1.bf16.msra.mxu0 0
        %2126 = vmatprep.subr.bf16.mxu0 0
        %2127 = vmatpush1.bf16.msra.mxu0 0
        %2128 = vmatprep.subr.bf16.mxu0 0
        %2129 = vmatpush1.bf16.msra.mxu0 0
        %2130 = vmatprep.subr.bf16.mxu0 0
        %2131 = vmatpush1.bf16.msra.mxu0 %v2112
        %2132 = vmatprep.subr.bf16.mxu0 0
        %2133 = vmatpush1.bf16.msra.mxu0 %v2111
        %2134 = vmatprep.subr.bf16.mxu0 0
        %2135 = vmatpush2.bf16.msra.mxu0 0
        %2136 = vmatprep.subr.bf16.mxu0 0
        %2137 = vmatpush2.bf16.msra.mxu0 0
        %2138 = vmatprep.subr.bf16.mxu0 0
        %2139 = vmatpush2.bf16.msra.mxu0 0
        %2140 = vmatprep.subr.bf16.mxu0 0
        %2141 = vmatpush2.bf16.msra.mxu0 0
        %2142 = vmatprep.subr.bf16.mxu0 0
        %2143 = vmatpush2.bf16.msra.mxu0 0
        %2144 = vmatprep.subr.bf16.mxu0 0
        %2145 = vmatpush2.bf16.msra.mxu0 0
        %2146 = vmatprep.subr.bf16.mxu0 0
        %2147 = vmatpush2.bf16.msra.mxu0 0
        %2148 = vmatprep.subr.bf16.mxu0 0
        %2149 = vmatpush2.bf16.msra.mxu0 0
        %2150 = vmatprep.mubr.bf16.mxu0 0
        %2151 = vmatmul.mubr.bf16.gmra.mxu0 %v2116
        %v2152 = vpop.f32.mrf.mxu0
        %v2153 = vadd.f32 0.0, %v2152
        %v2154 = vpop.f32.mrf.mxu0
        %v2155 = vpop.f32.mrf.mxu0
        %v2156 = vpop.f32.mrf.mxu0
        %2157 = vdwg.mxu0
        %v2162 = vunpack.c.l.b16 %v2091
        %v2163 = vunpack.c.l.b16 %v2092
        %v2164 = vunpack.c.l.b16 %v2093
        %v2165 = vunpack.c.l.b16 %v2094
        %v2166 = vpack.c.b16 %v2163, %v2162
        %v2167 = vpack.c.b16 %v2165, %v2164
        %v2171 = vsel %vm1645, %v2084, 0
        %2173 = vmatprep.subr.bf16.mxu0 0
        %2174 = vmatpush1.bf16.msra.mxu0 0
        %2175 = vmatprep.subr.bf16.mxu0 0
        %2176 = vmatpush1.bf16.msra.mxu0 0
        %2177 = vmatprep.subr.bf16.mxu0 0
        %2178 = vmatpush1.bf16.msra.mxu0 0
        %2179 = vmatprep.subr.bf16.mxu0 0
        %2180 = vmatpush1.bf16.msra.mxu0 0
        %2181 = vmatprep.subr.bf16.mxu0 0
        %2182 = vmatpush1.bf16.msra.mxu0 0
        %2183 = vmatprep.subr.bf16.mxu0 0
        %2184 = vmatpush1.bf16.msra.mxu0 0
        %2185 = vmatprep.subr.bf16.mxu0 0
        %2186 = vmatpush1.bf16.msra.mxu0 %v2167
        %2187 = vmatprep.subr.bf16.mxu0 0
        %2188 = vmatpush1.bf16.msra.mxu0 %v2166
        %2189 = vmatprep.subr.bf16.mxu0 0
        %2190 = vmatpush2.bf16.msra.mxu0 0
        %2191 = vmatprep.subr.bf16.mxu0 0
        %2192 = vmatpush2.bf16.msra.mxu0 0
        %2193 = vmatprep.subr.bf16.mxu0 0
        %2194 = vmatpush2.bf16.msra.mxu0 0
        %2195 = vmatprep.subr.bf16.mxu0 0
        %2196 = vmatpush2.bf16.msra.mxu0 0
        %2197 = vmatprep.subr.bf16.mxu0 0
        %2198 = vmatpush2.bf16.msra.mxu0 0
        %2199 = vmatprep.subr.bf16.mxu0 0
        %2200 = vmatpush2.bf16.msra.mxu0 0
        %2201 = vmatprep.subr.bf16.mxu0 0
        %2202 = vmatpush2.bf16.msra.mxu0 0
        %2203 = vmatprep.subr.bf16.mxu0 0
        %2204 = vmatpush2.bf16.msra.mxu0 0
        %2205 = vmatprep.mubr.bf16.mxu0 0
        %2206 = vmatmul.mubr.bf16.gmra.mxu0 %v2171
        %v2207 = vpop.f32.mrf.mxu0
        %v2208 = vadd.f32 0.0, %v2207
        %v2209 = vpop.f32.mrf.mxu0
        %v2210 = vpop.f32.mrf.mxu0
        %v2211 = vpop.f32.mrf.mxu0
        %2212 = vdwg.mxu0
        %v2217 = vunpack.c.l.b16 %v2095
        %v2218 = vunpack.c.l.b16 %v2096
        %v2219 = vunpack.c.l.b16 %v2097
        %v2220 = vunpack.c.l.b16 %v2098
        %v2221 = vpack.c.b16 %v2218, %v2217
        %v2222 = vpack.c.b16 %v2220, %v2219
        %v2226 = vsel %vm1645, %v2085, 0
        %2228 = vmatprep.subr.bf16.mxu0 0
        %2229 = vmatpush1.bf16.msra.mxu0 0
        %2230 = vmatprep.subr.bf16.mxu0 0
        %2231 = vmatpush1.bf16.msra.mxu0 0
        %2232 = vmatprep.subr.bf16.mxu0 0
        %2233 = vmatpush1.bf16.msra.mxu0 0
        %2234 = vmatprep.subr.bf16.mxu0 0
        %2235 = vmatpush1.bf16.msra.mxu0 0
        %2236 = vmatprep.subr.bf16.mxu0 0
        %2237 = vmatpush1.bf16.msra.mxu0 0
        %2238 = vmatprep.subr.bf16.mxu0 0
        %2239 = vmatpush1.bf16.msra.mxu0 0
        %2240 = vmatprep.subr.bf16.mxu0 0
        %2241 = vmatpush1.bf16.msra.mxu0 %v2222
        %2242 = vmatprep.subr.bf16.mxu0 0
        %2243 = vmatpush1.bf16.msra.mxu0 %v2221
        %2244 = vmatprep.subr.bf16.mxu0 0
        %2245 = vmatpush2.bf16.msra.mxu0 0
        %2246 = vmatprep.subr.bf16.mxu0 0
        %2247 = vmatpush2.bf16.msra.mxu0 0
        %2248 = vmatprep.subr.bf16.mxu0 0
        %2249 = vmatpush2.bf16.msra.mxu0 0
        %2250 = vmatprep.subr.bf16.mxu0 0
        %2251 = vmatpush2.bf16.msra.mxu0 0
        %2252 = vmatprep.subr.bf16.mxu0 0
        %2253 = vmatpush2.bf16.msra.mxu0 0
        %2254 = vmatprep.subr.bf16.mxu0 0
        %2255 = vmatpush2.bf16.msra.mxu0 0
        %2256 = vmatprep.subr.bf16.mxu0 0
        %2257 = vmatpush2.bf16.msra.mxu0 0
        %2258 = vmatprep.subr.bf16.mxu0 0
        %2259 = vmatpush2.bf16.msra.mxu0 0
        %2260 = vmatprep.mubr.bf16.mxu0 0
        %2261 = vmatmul.mubr.bf16.gmra.mxu0 %v2226
        %v2262 = vpop.f32.mrf.mxu0
        %v2263 = vadd.f32 0.0, %v2262
        %v2264 = vpop.f32.mrf.mxu0
        %v2265 = vpop.f32.mrf.mxu0
        %v2266 = vpop.f32.mrf.mxu0
        %2267 = vdwg.mxu0
        %v2272 = vunpack.c.l.b16 %v2099
        %v2273 = vunpack.c.l.b16 %v2100
        %v2274 = vunpack.c.l.b16 %v2101
        %v2275 = vunpack.c.l.b16 %v2102
        %v2276 = vpack.c.b16 %v2273, %v2272
        %v2277 = vpack.c.b16 %v2275, %v2274
        %v2281 = vsel %vm1645, %v2086, 0
        %2283 = vmatprep.subr.bf16.mxu0 0
        %2284 = vmatpush1.bf16.msra.mxu0 0
        %2285 = vmatprep.subr.bf16.mxu0 0
        %2286 = vmatpush1.bf16.msra.mxu0 0
        %2287 = vmatprep.subr.bf16.mxu0 0
        %2288 = vmatpush1.bf16.msra.mxu0 0
        %2289 = vmatprep.subr.bf16.mxu0 0
        %2290 = vmatpush1.bf16.msra.mxu0 0
        %2291 = vmatprep.subr.bf16.mxu0 0
        %2292 = vmatpush1.bf16.msra.mxu0 0
        %2293 = vmatprep.subr.bf16.mxu0 0
        %2294 = vmatpush1.bf16.msra.mxu0 0
        %2295 = vmatprep.subr.bf16.mxu0 0
        %2296 = vmatpush1.bf16.msra.mxu0 %v2277
        %2297 = vmatprep.subr.bf16.mxu0 0
        %2298 = vmatpush1.bf16.msra.mxu0 %v2276
        %2299 = vmatprep.subr.bf16.mxu0 0
        %2300 = vmatpush2.bf16.msra.mxu0 0
        %2301 = vmatprep.subr.bf16.mxu0 0
        %2302 = vmatpush2.bf16.msra.mxu0 0
        %2303 = vmatprep.subr.bf16.mxu0 0
        %2304 = vmatpush2.bf16.msra.mxu0 0
        %2305 = vmatprep.subr.bf16.mxu0 0
        %2306 = vmatpush2.bf16.msra.mxu0 0
        %2307 = vmatprep.subr.bf16.mxu0 0
        %2308 = vmatpush2.bf16.msra.mxu0 0
        %2309 = vmatprep.subr.bf16.mxu0 0
        %2310 = vmatpush2.bf16.msra.mxu0 0
        %2311 = vmatprep.subr.bf16.mxu0 0
        %2312 = vmatpush2.bf16.msra.mxu0 0
        %2313 = vmatprep.subr.bf16.mxu0 0
        %2314 = vmatpush2.bf16.msra.mxu0 0
        %2315 = vmatprep.mubr.bf16.mxu0 0
        %2316 = vmatmul.mubr.bf16.gmra.mxu0 %v2281
        %v2317 = vpop.f32.mrf.mxu0
        %v2318 = vadd.f32 0.0, %v2317
        %v2319 = vpop.f32.mrf.mxu0
        %v2320 = vpop.f32.mrf.mxu0
        %v2321 = vpop.f32.mrf.mxu0
        %2322 = vdwg.mxu0
        %v2323 = vadd.f32 %v2153, %v2208
        %v2324 = vadd.f32 %v2323, %v2263
        %v2325 = vadd.f32 %v2324, %v2318
        %v2326 = vld [vmem:[%s10] sm:$0x1]
        %v2328 = vlaneseq
        %v2329 = vshrl.u32 %v2328, 7
        %v2330 = vsub.s32 0, %v2329
        %v2331 = vrot.slane %v2326, %v2330
        %v2333 = vadd.f32 %v2325, %v2331
        %v2334 = vadd.f32 %v829, %v2333
        %v2335 = vld [vmem:[#allocation12] sm:$0x1]
        %v2336 = vld [vmem:[#allocation13] sm:$0x1]
        %2337 = vadd.xlane.f32.xlu0 %v2334
        %v2338 = vpop.xlane.xlu0 %2337
        %v2339 = vmul.f32 %v2338, %v834
        %v2340 = vsub.f32 %v2334, %v2339
        %v2341 = vmul.f32 %v2340, %v2340
        %2342 = vadd.xlane.f32.xlu0 %v2341
        %v2343 = vpop.xlane.xlu0 %2342
        %v2344 = vmul.f32 %v2343, 0.007874016
        %v2345 = vrsqrt.pop %v2344
        %v2346 = vmul.f32 %v2344, %v2345
        %vm2347 = vcmp.eq.f32.partialorder %v2344, inf
        %v2348 = vsel %vm2347, %v2344, %v2346
        %vm2349 = vcmp.eq.f32.partialorder %v2344, 0.0
        %v2350 = vand.u32 %v2344, 2147483648
        %v2351 = vsel %vm2349, %v2350, %v2348
        %v2352 = vadd.f32 %v2351, 1e-06
        %v2353 = vrcp.pop %v2352
        %v2355 = vlaneseq
        %v2356 = vshrl.u32 %v2355, 7
        %v2357 = vsub.s32 0, %v2356
        %v2358 = vrot.slane %v2335, %v2357
        %v2360 = vmul.f32 %v2358, %v2340
        %v2361 = vmul.f32 %v2360, %v2353
        %v2363 = vlaneseq
        %v2364 = vshrl.u32 %v2363, 7
        %v2365 = vsub.s32 0, %v2364
        %v2366 = vrot.slane %v2336, %v2365
        %v2368 = vadd.f32 %v2361, %v2366
        %v2369 = vpack.c.bf16 %v2368, %v2368
        %v2370 = vld [vmem:[%s15] sm:$0xff]
        %v2371 = vld [vmem:[%s15 + $0x8] sm:$0xff]
        %v2372 = vld [vmem:[%s15 + $0x10] sm:$0xff]
        %v2373 = vld [vmem:[%s15 + $0x18] sm:$0xff]
        %v2374 = vld [vmem:[%s15 + $0x20] sm:$0xff]
        %v2375 = vld [vmem:[%s15 + $0x28] sm:$0xff]
        %v2376 = vld [vmem:[%s15 + $0x30] sm:$0xff]
        %v2377 = vld [vmem:[%s15 + $0x38] sm:$0xff]
        %v2378 = vld [vmem:[%s15 + $0x40] sm:$0xff]
        %v2379 = vld [vmem:[%s15 + $0x48] sm:$0xff]
        %v2380 = vld [vmem:[%s15 + $0x50] sm:$0xff]
        %v2381 = vld [vmem:[%s15 + $0x58] sm:$0xff]
        %v2382 = vld [vmem:[%s15 + $0x60] sm:$0xff]
        %v2383 = vld [vmem:[%s15 + $0x68] sm:$0xff]
        %v2384 = vld [vmem:[%s15 + $0x70] sm:$0xff]
        %v2385 = vld [vmem:[%s15 + $0x78] sm:$0xff]
        %v2386 = vld [vmem:[#allocation15] sm:$0x3]
        %v2388 = vlaneseq
        %v2389 = vshrl.u32 %v2388, 7
        %v2390 = vsub.s32 0, %v2389
        %v2391 = vrot.slane %v2386, %v2390
        %v2392 = vlaneseq
        %v2393 = vshrl.u32 %v2392, 7
        %v2394 = vsub.s32 1, %v2393
        %v2395 = vrot.slane %v2386, %v2394
        %v2414 = vunpack.c.l.b16 %v2370
        %v2415 = vunpack.c.h.b16 %v2370
        %v2416 = vunpack.c.l.b16 %v2371
        %v2417 = vunpack.c.h.b16 %v2371
        %v2418 = vunpack.c.l.b16 %v2372
        %v2419 = vunpack.c.h.b16 %v2372
        %v2420 = vunpack.c.l.b16 %v2373
        %v2421 = vunpack.c.h.b16 %v2373
        %v2422 = vunpack.c.l.b16 %v2374
        %v2423 = vunpack.c.h.b16 %v2374
        %v2424 = vunpack.c.l.b16 %v2375
        %v2425 = vunpack.c.h.b16 %v2375
        %v2426 = vunpack.c.l.b16 %v2376
        %v2427 = vunpack.c.h.b16 %v2376
        %v2428 = vunpack.c.l.b16 %v2377
        %v2429 = vunpack.c.h.b16 %v2377
        %v2430 = vunpack.c.l.b16 %v2378
        %v2431 = vunpack.c.h.b16 %v2378
        %v2432 = vunpack.c.l.b16 %v2379
        %v2433 = vunpack.c.h.b16 %v2379
        %v2434 = vunpack.c.l.b16 %v2380
        %v2435 = vunpack.c.h.b16 %v2380
        %v2436 = vunpack.c.l.b16 %v2381
        %v2437 = vunpack.c.h.b16 %v2381
        %v2438 = vunpack.c.l.b16 %v2382
        %v2439 = vunpack.c.h.b16 %v2382
        %v2440 = vunpack.c.l.b16 %v2383
        %v2441 = vunpack.c.h.b16 %v2383
        %v2442 = vunpack.c.l.b16 %v2384
        %v2443 = vunpack.c.h.b16 %v2384
        %v2444 = vunpack.c.l.b16 %v2385
        %v2445 = vunpack.c.h.b16 %v2385
        %v2446 = vpack.c.b16 %v2416, %v2414
        %v2447 = vpack.c.b16 %v2417, %v2415
        %v2448 = vpack.c.b16 %v2420, %v2418
        %v2449 = vpack.c.b16 %v2421, %v2419
        %v2450 = vpack.c.b16 %v2424, %v2422
        %v2451 = vpack.c.b16 %v2425, %v2423
        %v2452 = vpack.c.b16 %v2428, %v2426
        %v2453 = vpack.c.b16 %v2429, %v2427
        %v2454 = vpack.c.b16 %v2432, %v2430
        %v2455 = vpack.c.b16 %v2433, %v2431
        %v2456 = vpack.c.b16 %v2436, %v2434
        %v2457 = vpack.c.b16 %v2437, %v2435
        %v2458 = vpack.c.b16 %v2440, %v2438
        %v2459 = vpack.c.b16 %v2441, %v2439
        %v2460 = vpack.c.b16 %v2444, %v2442
        %v2461 = vpack.c.b16 %v2445, %v2443
        %2478 = vmatprep.subr.bf16.mxu0 %v2461
        %2479 = vmatpush1.bf16.msra.mxu0 %v2460
        %2480 = vmatprep.subr.bf16.mxu0 %v2459
        %2481 = vmatpush1.bf16.msra.mxu0 %v2458
        %2482 = vmatprep.subr.bf16.mxu0 %v2457
        %2483 = vmatpush1.bf16.msra.mxu0 %v2456
        %2484 = vmatprep.subr.bf16.mxu0 %v2455
        %2485 = vmatpush1.bf16.msra.mxu0 %v2454
        %2486 = vmatprep.subr.bf16.mxu0 %v2453
        %2487 = vmatpush1.bf16.msra.mxu0 %v2452
        %2488 = vmatprep.subr.bf16.mxu0 %v2451
        %2489 = vmatpush1.bf16.msra.mxu0 %v2450
        %2490 = vmatprep.subr.bf16.mxu0 %v2449
        %2491 = vmatpush1.bf16.msra.mxu0 %v2448
        %2492 = vmatprep.subr.bf16.mxu0 %v2447
        %2493 = vmatpush1.bf16.msra.mxu0 %v2446
        %2494 = vmatprep.subr.bf16.mxu0 0
        %2495 = vmatpush2.bf16.msra.mxu0 0
        %2496 = vmatprep.subr.bf16.mxu0 0
        %2497 = vmatpush2.bf16.msra.mxu0 0
        %2498 = vmatprep.subr.bf16.mxu0 0
        %2499 = vmatpush2.bf16.msra.mxu0 0
        %2500 = vmatprep.subr.bf16.mxu0 0
        %2501 = vmatpush2.bf16.msra.mxu0 0
        %2502 = vmatprep.subr.bf16.mxu0 0
        %2503 = vmatpush2.bf16.msra.mxu0 0
        %2504 = vmatprep.subr.bf16.mxu0 0
        %2505 = vmatpush2.bf16.msra.mxu0 0
        %2506 = vmatprep.subr.bf16.mxu0 0
        %2507 = vmatpush2.bf16.msra.mxu0 0
        %2508 = vmatprep.subr.bf16.mxu0 0
        %2509 = vmatpush2.bf16.msra.mxu0 0
        %2510 = vmatprep.mubr.bf16.mxu0 0
        %2511 = vmatmul.mubr.bf16.gmra.mxu0 %v2369
        %v2512 = vpop.f32.mrf.mxu0
        %v2513 = vadd.f32 %v2391, %v2512
        %v2514 = vpop.f32.mrf.mxu0
        %v2515 = vadd.f32 %v2395, %v2514
        %v2516 = vpop.f32.mrf.mxu0
        %v2517 = vpop.f32.mrf.mxu0
        %2518 = vdwg.mxu0
        %v2519 = vmax.f32 %v2513, 0.0
        %v2520 = vmax.f32 %v2515, 0.0
        %v2521 = vpack.c.bf16 %v2519, %v2519
        %v2522 = vpack.c.bf16 %v2520, %v2520
        %v2523 = vld [vmem:[%s17] sm:$0xf]
        %v2524 = vld [vmem:[%s17 + $0x4] sm:$0xf]
        %v2525 = vld [vmem:[%s17 + $0x8] sm:$0xf]
        %v2526 = vld [vmem:[%s17 + $0xc] sm:$0xf]
        %v2527 = vld [vmem:[%s17 + $0x10] sm:$0xf]
        %v2528 = vld [vmem:[%s17 + $0x14] sm:$0xf]
        %v2529 = vld [vmem:[%s17 + $0x18] sm:$0xf]
        %v2530 = vld [vmem:[%s17 + $0x1c] sm:$0xf]
        %v2531 = vld [vmem:[%s17 + $0x20] sm:$0xf]
        %v2532 = vld [vmem:[%s17 + $0x24] sm:$0xf]
        %v2533 = vld [vmem:[%s17 + $0x28] sm:$0xf]
        %v2534 = vld [vmem:[%s17 + $0x2c] sm:$0xf]
        %v2535 = vld [vmem:[%s17 + $0x30] sm:$0xf]
        %v2536 = vld [vmem:[%s17 + $0x34] sm:$0xf]
        %v2537 = vld [vmem:[%s17 + $0x38] sm:$0xf]
        %v2538 = vld [vmem:[%s17 + $0x3c] sm:$0xf]
        %v2539 = vld [vmem:[%s17 + $0x40] sm:$0xf]
        %v2540 = vld [vmem:[%s17 + $0x44] sm:$0xf]
        %v2541 = vld [vmem:[%s17 + $0x48] sm:$0xf]
        %v2542 = vld [vmem:[%s17 + $0x4c] sm:$0xf]
        %v2543 = vld [vmem:[%s17 + $0x50] sm:$0xf]
        %v2544 = vld [vmem:[%s17 + $0x54] sm:$0xf]
        %v2545 = vld [vmem:[%s17 + $0x58] sm:$0xf]
        %v2546 = vld [vmem:[%s17 + $0x5c] sm:$0xf]
        %v2547 = vld [vmem:[%s17 + $0x60] sm:$0xf]
        %v2548 = vld [vmem:[%s17 + $0x64] sm:$0xf]
        %v2549 = vld [vmem:[%s17 + $0x68] sm:$0xf]
        %v2550 = vld [vmem:[%s17 + $0x6c] sm:$0xf]
        %v2551 = vld [vmem:[%s17 + $0x70] sm:$0xf]
        %v2552 = vld [vmem:[%s17 + $0x74] sm:$0xf]
        %v2553 = vld [vmem:[%s17 + $0x78] sm:$0xf]
        %v2554 = vld [vmem:[%s17 + $0x7c] sm:$0xf]
        %v2555 = vld [vmem:[#allocation16] sm:$0x1]
        %v2557 = vlaneseq
        %v2558 = vshrl.u32 %v2557, 7
        %v2559 = vsub.s32 0, %v2558
        %v2560 = vrot.slane %v2555, %v2559
        %v2594 = vunpack.c.l.b16 %v2523
        %v2595 = vunpack.c.l.b16 %v2524
        %v2596 = vunpack.c.l.b16 %v2525
        %v2597 = vunpack.c.l.b16 %v2526
        %v2598 = vunpack.c.l.b16 %v2527
        %v2599 = vunpack.c.l.b16 %v2528
        %v2600 = vunpack.c.l.b16 %v2529
        %v2601 = vunpack.c.l.b16 %v2530
        %v2602 = vunpack.c.l.b16 %v2531
        %v2603 = vunpack.c.l.b16 %v2532
        %v2604 = vunpack.c.l.b16 %v2533
        %v2605 = vunpack.c.l.b16 %v2534
        %v2606 = vunpack.c.l.b16 %v2535
        %v2607 = vunpack.c.l.b16 %v2536
        %v2608 = vunpack.c.l.b16 %v2537
        %v2609 = vunpack.c.l.b16 %v2538
        %v2610 = vunpack.c.l.b16 %v2539
        %v2611 = vunpack.c.l.b16 %v2540
        %v2612 = vunpack.c.l.b16 %v2541
        %v2613 = vunpack.c.l.b16 %v2542
        %v2614 = vunpack.c.l.b16 %v2543
        %v2615 = vunpack.c.l.b16 %v2544
        %v2616 = vunpack.c.l.b16 %v2545
        %v2617 = vunpack.c.l.b16 %v2546
        %v2618 = vunpack.c.l.b16 %v2547
        %v2619 = vunpack.c.l.b16 %v2548
        %v2620 = vunpack.c.l.b16 %v2549
        %v2621 = vunpack.c.l.b16 %v2550
        %v2622 = vunpack.c.l.b16 %v2551
        %v2623 = vunpack.c.l.b16 %v2552
        %v2624 = vunpack.c.l.b16 %v2553
        %v2625 = vunpack.c.l.b16 %v2554
        %v2626 = vpack.c.b16 %v2595, %v2594
        %v2627 = vpack.c.b16 %v2597, %v2596
        %v2628 = vpack.c.b16 %v2599, %v2598
        %v2629 = vpack.c.b16 %v2601, %v2600
        %v2630 = vpack.c.b16 %v2603, %v2602
        %v2631 = vpack.c.b16 %v2605, %v2604
        %v2632 = vpack.c.b16 %v2607, %v2606
        %v2633 = vpack.c.b16 %v2609, %v2608
        %v2634 = vpack.c.b16 %v2611, %v2610
        %v2635 = vpack.c.b16 %v2613, %v2612
        %v2636 = vpack.c.b16 %v2615, %v2614
        %v2637 = vpack.c.b16 %v2617, %v2616
        %v2638 = vpack.c.b16 %v2619, %v2618
        %v2639 = vpack.c.b16 %v2621, %v2620
        %v2640 = vpack.c.b16 %v2623, %v2622
        %v2641 = vpack.c.b16 %v2625, %v2624
        %2658 = vmatprep.subr.bf16.mxu0 0
        %2659 = vmatpush1.bf16.msra.mxu0 %v2633
        %2660 = vmatprep.subr.bf16.mxu0 0
        %2661 = vmatpush1.bf16.msra.mxu0 %v2632
        %2662 = vmatprep.subr.bf16.mxu0 0
        %2663 = vmatpush1.bf16.msra.mxu0 %v2631
        %2664 = vmatprep.subr.bf16.mxu0 0
        %2665 = vmatpush1.bf16.msra.mxu0 %v2630
        %2666 = vmatprep.subr.bf16.mxu0 0
        %2667 = vmatpush1.bf16.msra.mxu0 %v2629
        %2668 = vmatprep.subr.bf16.mxu0 0
        %2669 = vmatpush1.bf16.msra.mxu0 %v2628
        %2670 = vmatprep.subr.bf16.mxu0 0
        %2671 = vmatpush1.bf16.msra.mxu0 %v2627
        %2672 = vmatprep.subr.bf16.mxu0 0
        %2673 = vmatpush1.bf16.msra.mxu0 %v2626
        %2674 = vmatprep.subr.bf16.mxu0 0
        %2675 = vmatpush2.bf16.msra.mxu0 %v2641
        %2676 = vmatprep.subr.bf16.mxu0 0
        %2677 = vmatpush2.bf16.msra.mxu0 %v2640
        %2678 = vmatprep.subr.bf16.mxu0 0
        %2679 = vmatpush2.bf16.msra.mxu0 %v2639
        %2680 = vmatprep.subr.bf16.mxu0 0
        %2681 = vmatpush2.bf16.msra.mxu0 %v2638
        %2682 = vmatprep.subr.bf16.mxu0 0
        %2683 = vmatpush2.bf16.msra.mxu0 %v2637
        %2684 = vmatprep.subr.bf16.mxu0 0
        %2685 = vmatpush2.bf16.msra.mxu0 %v2636
        %2686 = vmatprep.subr.bf16.mxu0 0
        %2687 = vmatpush2.bf16.msra.mxu0 %v2635
        %2688 = vmatprep.subr.bf16.mxu0 0
        %2689 = vmatpush2.bf16.msra.mxu0 %v2634
        %2690 = vmatprep.mubr.bf16.mxu0 %v2522
        %2691 = vmatmul.mubr.bf16.gmra.mxu0 %v2521
        %v2692 = vpop.f32.mrf.mxu0
        %v2693 = vadd.f32 %v2560, %v2692
        %v2694 = vpop.f32.mrf.mxu0
        %v2695 = vpop.f32.mrf.mxu0
        %v2696 = vpop.f32.mrf.mxu0
        %2697 = vdwg.mxu0
        %v2698 = vadd.f32 %v2334, %v2693
        %2699 = vst [vmem:[%s824] sm:$0xff] %v2698
        %p2700 = scmp.lt.s32.totalorder %s39, 1
        %s2701 = scalar_select %p2700, %s39, 1
        %s2702 = smul.addr %s2701, 8
        %s2703 = scalar_lea.vmem %s21, %s2702
        // Predicated region
        $region153: #{encoder_forward.2} parent=103 // pred_check
          %p2704 = pneg %p508
        $region154: #{encoder_forward.2} parent=103 // pred_check_branch
          %2706 = sbr.rel (%p2704) target = $region156
        $region155: #{encoder_forward.2} parent=103 // pred_region
          _
        $region156: #{encoder_forward.2} parent=103 // pred_fallthru
          _
      $region104: #{encoder_forward.2} parent=5 // pred_fallthru
        _
      %p2707 = scmp.le.s32.totalorder 2, %s34
      // Predicated region
      $region157: #{encoder_forward.2} parent=5 // pred_check
        %p2708 = pneg %p2707
      $region158: #{encoder_forward.2} parent=5 // pred_check_branch
        %2710 = sbr.rel (%p2708) target = $region160
      $region159: #{encoder_forward.2} parent=5 // pred_region
        %s2711 = ssub.s32 %s34, 2
        // Predicated region
        $region161: #{encoder_forward.2} parent=159 // pred_check
          %p2712 = pneg %p514
        $region162: #{encoder_forward.2} parent=159 // pred_check_branch
          %2714 = sbr.rel (%p2712) target = $region164
        $region163: #{encoder_forward.2} parent=159 // pred_region
          %p2715 = scmp.lt.s32.totalorder %s40, 1
          %s2716 = scalar_select %p2715, %s40, 1
          %s2717 = smul.addr %s2716, 8
          %s2718 = scalar_lea.vmem %s21, %s2717
        $region164: #{encoder_forward.2} parent=159 // pred_fallthru
          _
      $region160: #{encoder_forward.2} parent=5 // pred_fallthru
        _
    $region6: #{encoder_forward.2} parent=1 // loop_footer
      %s38 = sadd.s32 1, %s34
    $region7: #{encoder_forward.2} parent=1 // loop_footer_branch
      %33 = sbr.rel target = $region3
    $region8: #{encoder_forward.2} parent=1 // loop_exit
      _
    %2719 = vsyncpa [#allocation3], 1
    %s2720 = scalar_lea.sflag [#allocation3], 1
    %2721 = vsyncpa %s2720, 1
    %2722 = vsyncpa [#allocation5], 1
    %2723 = vsyncpa [#allocation8], 1
    %2724 = vsyncpa [#allocation11], 1
    %2725 = vsyncpa [#allocation14], 1
    %2726 = vsyncpa [#allocation17], 1
    %2727 = vsyncpa [#allocation20], 1

</llo_original>
